<compile_context>
chip_gen: v7x
topology: tpu7x:2x2x1
jax: 0.10.0
libtpu: 0.0.40
codegen_flags: <defaults>
</compile_context>

<pallas_src>
import functools

import jax
import jax.numpy as jnp
from jax import lax
from jax.experimental import pallas as pl
from jax.experimental.pallas import tpu as pltpu

NEG_SLOPE = 0.2   # LeakyReLU negative_slope
_LANE = 128
_SUBLANE = 8


def _round_up(n, m):
    return ((n + m - 1) // m) * m


def _decoder_kernel(x_ref, wlin_ref, blin_ref, wih1_ref, whh1_ref, b1_ref,
                    wih2_ref, whh2_ref, b2_ref, out_ref,
                    gx0_sc, h1_sc, c1_sc, h2_sc, c2_sc,
                    *, n_loop, hp, op, ts, unroll):
    """One grid step = one chunk of `ts` timesteps; states persist in VMEM scratch."""
    f32, bf16 = jnp.float32, jnp.bfloat16
    bsz = x_ref.shape[0]          # padded batch (multiple of 8)
    step = pl.program_id(0)

    # ------------- time-invariant work: runs exactly once (first chunk) --------------
    @pl.when(step == 0)
    def _init():
        x = x_ref[...].astype(bf16)
        pre = jnp.dot(x, wlin_ref[...], preferred_element_type=f32) + blin_ref[...]
        cur0 = jnp.where(pre >= 0.0, pre, NEG_SLOPE * pre)      # (B, Hp); padded lanes 0
        if n_loop >= 1:
            # Layer 0 of the shared-weight loop sees the same input every timestep ->
            # its input-gate contribution (with the bias folded in) is time invariant.
            gx0_sc[...] = (jnp.dot(cur0.astype(bf16), wih1_ref[...],
                                   preferred_element_type=f32) + b1_ref[...])
            h1_sc[...] = jnp.zeros_like(h1_sc)
            c1_sc[...] = jnp.zeros_like(c1_sc)
        else:
            # No loop layers: the head's input-gate term is the time-invariant one.
            gx0_sc[...] = (jnp.dot(cur0.astype(bf16), wih2_ref[...],
                                   preferred_element_type=f32) + b2_ref[...])
        h2_sc[...] = jnp.zeros_like(h2_sc)
        c2_sc[...] = jnp.zeros_like(c2_sc)

    # ------------- per-chunk hoists (amortized over ts timesteps) --------------------
    gx0 = gx0_sc[...]
    w_hh1 = whh1_ref[...] if n_loop >= 1 else None
    w_ih1 = wih1_ref[...] if n_loop >= 2 else None
    w_ih2 = wih2_ref[...] if n_loop >= 1 else None
    w_hh2 = whh2_ref[...]
    # JAX does not CSE broadcast_in_dim -> hoist the bias broadcasts out of the loop.
    b1_b = jnp.broadcast_to(b1_ref[...], (bsz, 4 * hp)) if n_loop >= 2 else None
    b2_b = jnp.broadcast_to(b2_ref[...], (bsz, 4 * op)) if n_loop >= 1 else None

    def gate_update(gates, c_prev, width):
        # Gate blocks are lane-aligned (width % 128 == 0) -> plain vreg selection.
        i = jax.nn.sigmoid(gates[:, 0 * width:1 * width])
        f = jax.nn.sigmoid(gates[:, 1 * width:2 * width])
        g = jnp.tanh(gates[:, 2 * width:3 * width])
        o = jax.nn.sigmoid(gates[:, 3 * width:4 * width])
        c_new = f * c_prev + i * g
        h_new = o * jnp.tanh(c_new)
        return h_new, c_new

    def body(t, carry):
        h1s, c1s, h2, c2 = carry
        new_h1, new_c1 = [], []
        if n_loop >= 1:
            # Layer 0: only the recurrent matmul per step (input term hoisted in gx0).
            gates = gx0 + jnp.dot(h1s[0].astype(bf16), w_hh1,
                                  preferred_element_type=f32)
            h_new, c_new = gate_update(gates, c1s[0], hp)
            new_h1.append(h_new)
            new_c1.append(c_new)
            cur = h_new
            # Remaining shared-weight layers (only when n_layers > 2): two accumulating
            # dots, no per-step concat temp on the serial critical path.
            for l in range(1, n_loop):
                gates = (jnp.dot(cur.astype(bf16), w_ih1, preferred_element_type=f32)
                         + jnp.dot(h1s[l].astype(bf16), w_hh1,
                                   preferred_element_type=f32)
                         + b1_b)
                h_new, c_new = gate_update(gates, c1s[l], hp)
                new_h1.append(h_new)
                new_c1.append(c_new)
                cur = h_new
            # Output LSTM head: two accumulating dots.
            gates2 = (jnp.dot(cur.astype(bf16), w_ih2, preferred_element_type=f32)
                      + jnp.dot(h2.astype(bf16), w_hh2, preferred_element_type=f32)
                      + b2_b)
        else:
            gates2 = gx0 + jnp.dot(h2.astype(bf16), w_hh2, preferred_element_type=f32)
        h2_new, c2_new = gate_update(gates2, c2, op)
        out_ref[t] = h2_new        # full lane-dense (Bp, Op) tile store
        return tuple(new_h1), tuple(new_c1), h2_new, c2_new

    # Load states into vregs for the chunk, run the recurrence, write states back.
    carry = (tuple(h1_sc[l] for l in range(n_loop)),
             tuple(c1_sc[l] for l in range(n_loop)),
             h2_sc[...], c2_sc[...])
    if ts <= 32:
        # Static unroll: full LLO scheduler visibility, static output indices.
        for t in range(ts):
            carry = body(t, carry)
    else:
        carry = lax.fori_loop(0, ts, body, carry, unroll=unroll)

    h1s, c1s, h2, c2 = carry
    for l in range(n_loop):
        h1_sc[l] = h1s[l]
        c1_sc[l] = c1s[l]
    h2_sc[...] = h2
    c2_sc[...] = c2


def _prepare_kernel_params(params, latent_dim, h_feat, out_feat, hp, op):
    """Torch-layout params -> padded, gate-lane-aligned kernel layout.

    Padding invariant (load-bearing): padded weight rows/cols and bias lanes are
    exactly zero, so padded state lanes stay exactly 0 through the cell math
    (sigmoid(0)=0.5 multiplies a zero c_prev; tanh(0)=0).  Do not change the padding
    (e.g. non-zero forget-gate bias init for padded lanes) without masking in-kernel.
    Weights are stored bf16 (MXU-native); biases stay f32 (negligible traffic).
    """
    f32, bf16 = jnp.float32, jnp.bfloat16

    def gate_w(w, in_pad, hid, hid_pad):
        # w: (4*hid, in) torch layout -> (in_pad, 4*hid_pad) bf16, gate blocks
        # lane-aligned, padded rows/cols zero.
        in_dim = w.shape[1]
        out = jnp.zeros((in_pad, 4 * hid_pad), f32)
        for k in range(4):
            out = out.at[:in_dim, k * hid_pad:k * hid_pad + hid].set(
                w[k * hid:(k + 1) * hid, :].astype(f32).T)
        return out.astype(bf16)

    def gate_b(b_ih, b_hh, hid, hid_pad):
        b = (b_ih + b_hh).astype(f32)
        out = jnp.zeros((1, 4 * hid_pad), f32)
        for k in range(4):
            out = out.at[0, k * hid_pad:k * hid_pad + hid].set(b[k * hid:(k + 1) * hid])
        return out

    w_lin = jnp.zeros((latent_dim, hp), f32).at[:, :h_feat].set(
        params["w_lin"].astype(f32).T).astype(bf16)
    b_lin = jnp.zeros((1, hp), f32).at[0, :h_feat].set(params["b_lin"].astype(f32))
    return dict(
        w_lin=w_lin, b_lin=b_lin,
        w_ih1=gate_w(params["w_ih1"], hp, h_feat, hp),
        w_hh1=gate_w(params["w_hh1"], hp, h_feat, hp),
        b1=gate_b(params["b_ih1"], params["b_hh1"], h_feat, hp),
        w_ih2=gate_w(params["w_ih2"], hp, out_feat, op),
        w_hh2=gate_w(params["w_hh2"], op, out_feat, op),
        b2=gate_b(params["b_ih2"], params["b_hh2"], out_feat, op),
    )


def lstm_decoder_forward(x, params, *, seq_len, n_layers):
    """Pallas forward matching LstmDecoder.forward (batch_first output)."""
    B, latent_dim = x.shape
    h_feat = params["w_lin"].shape[0]
    out_feat = params["w_hh2"].shape[1]
    n_loop = n_layers - 1

    hp = _round_up(h_feat, _LANE)
    op = _round_up(out_feat, _LANE)
    bp = _round_up(B, _SUBLANE)

    # Time chunking: bounds resident VMEM (output block is (ts, bp, op)) and overlaps
    # chunk writeback with the next chunk's compute.  seq is padded up to a multiple of
    # ts; the extra steps just extend the recurrence and are sliced off in the wrapper.
    ts = min(seq_len, 64)
    s_pad = _round_up(seq_len, ts)
    n_chunks = s_pad // ts

    kp = _prepare_kernel_params(params, latent_dim, h_feat, out_feat, hp, op)
    x_p = jnp.zeros((bp, latent_dim), jnp.float32).at[:B, :].set(x.astype(jnp.float32))

    kern = functools.partial(_decoder_kernel, n_loop=n_loop, hp=hp, op=op,
                             ts=ts, unroll=4)
    full = lambda a: pl.BlockSpec(a.shape, lambda i: (0,) * a.ndim)
    gx_cols = 4 * hp if n_loop >= 1 else 4 * op

    out = pl.pallas_call(
        kern,
        out_shape=jax.ShapeDtypeStruct((s_pad, bp, op), jnp.float32),
        grid_spec=pltpu.PrefetchScalarGridSpec(
            num_scalar_prefetch=0,
            grid=(n_chunks,),   # sequential time-chunk axis; states live in scratch
            in_specs=[full(x_p), full(kp["w_lin"]), full(kp["b_lin"]),
                      full(kp["w_ih1"]), full(kp["w_hh1"]), full(kp["b1"]),
                      full(kp["w_ih2"]), full(kp["w_hh2"]), full(kp["b2"])],
            out_specs=pl.BlockSpec((ts, bp, op), lambda i: (i, 0, 0)),
            scratch_shapes=[
                pltpu.VMEM((bp, gx_cols), jnp.float32),              # hoisted gx term
                pltpu.VMEM((max(n_loop, 1), bp, hp), jnp.float32),   # h, loop layers
                pltpu.VMEM((max(n_loop, 1), bp, hp), jnp.float32),   # c, loop layers
                pltpu.VMEM((bp, op), jnp.float32),                   # h, head
                pltpu.VMEM((bp, op), jnp.float32),                   # c, head
            ]),
        compiler_params=pltpu.CompilerParams(
            dimension_semantics=("arbitrary",),
        ),
    )(x_p, kp["w_lin"], kp["b_lin"], kp["w_ih1"], kp["w_hh1"], kp["b1"],
      kp["w_ih2"], kp["w_hh2"], kp["b2"])

    # (S_pad, Bp, Op) -> (B, S, O): strip padding in the wrapper.
    # TODO(synk): let downstream consumers take seq-major (S, B, O) to avoid this
    # extra HBM round trip of the output.
    return jnp.transpose(out, (1, 0, 2))[:B, :seq_len, :out_feat]


def init_params(key, latent_dim, h_features, out_features):
    """Deterministic synthetic parameters in PyTorch layouts (nn.Linear / nn.LSTM)."""
    ks = jax.random.split(key, 10)
    u = lambda k, shape, s: jax.random.uniform(k, shape, jnp.float32, -s, s)
    kl = 1.0 / (latent_dim ** 0.5)
    kh = 1.0 / (h_features ** 0.5)
    ko = 1.0 / (out_features ** 0.5)
    return {
        "w_lin": u(ks[0], (h_features, latent_dim), kl),
        "b_lin": u(ks[1], (h_features,), kl),
        "w_ih1": u(ks[2], (4 * h_features, h_features), kh),
        "w_hh1": u(ks[3], (4 * h_features, h_features), kh),
        "b_ih1": u(ks[4], (4 * h_features,), kh),
        "b_hh1": u(ks[5], (4 * h_features,), kh),
        "w_ih2": u(ks[6], (4 * out_features, h_features), ko),
        "w_hh2": u(ks[7], (4 * out_features, out_features), ko),
        "b_ih2": u(ks[8], (4 * out_features,), ko),
        "b_hh2": u(ks[9], (4 * out_features,), ko),
    }


def reference_forward(x, params, *, seq_len, n_layers):
    """Pure-JAX reference mirroring the PyTorch forward (unpadded, torch layouts)."""
    h_feat = params["w_lin"].shape[0]
    out_feat = params["w_hh2"].shape[1]

    h = x @ params["w_lin"].T + params["b_lin"]
    h = jnp.where(h >= 0, h, NEG_SLOPE * h)
    seq = jnp.repeat(h[:, None, :], seq_len, axis=1)            # (B, S, H)

    def run_lstm(seq_in, w_ih, w_hh, b_ih, b_hh, hid):
        bsz = seq_in.shape[0]
        wi, wh = w_ih.T, w_hh.T
        b = (b_ih + b_hh)[None, :]

        def step(carry, x_t):
            h_prev, c_prev = carry
            gates = x_t @ wi + h_prev @ wh + b
            i = jax.nn.sigmoid(gates[:, :hid])
            f = jax.nn.sigmoid(gates[:, hid:2 * hid])
            g = jnp.tanh(gates[:, 2 * hid:3 * hid])
            o = jax.nn.sigmoid(gates[:, 3 * hid:])
            c = f * c_prev + i * g
            h_new = o * jnp.tanh(c)
            return (h_new, c), h_new

        init = (jnp.zeros((bsz, hid), jnp.float32), jnp.zeros((bsz, hid), jnp.float32))
        _, outs = lax.scan(step, init, jnp.transpose(seq_in, (1, 0, 2)))
        return jnp.transpose(outs, (1, 0, 2))

    for _ in range(n_layers - 1):
        seq = run_lstm(seq, params["w_ih1"], params["w_hh1"],
                       params["b_ih1"], params["b_hh1"], h_feat)
    return run_lstm(seq, params["w_ih2"], params["w_hh2"],
                    params["b_ih2"], params["b_hh2"], out_feat)


if __name__ == "__main__":
    # Small shapes consistent with the module.
    B = 2
    LATENT = 32
    H_FEATURES = 32
    OUT_FEATURES = 48     # stands in for 3 * 53 at a smaller size
    SEQ_LEN = 8
    N_LAYERS = 2

    key = jax.random.PRNGKey(0)
    k_x, k_p = jax.random.split(key)
    x = jax.random.normal(k_x, (B, LATENT), jnp.float32)
    params = init_params(k_p, LATENT, H_FEATURES, OUT_FEATURES)

    out = jax.block_until_ready(
        lstm_decoder_forward(x, params, seq_len=SEQ_LEN, n_layers=N_LAYERS))
    assert out.shape == (B, SEQ_LEN, OUT_FEATURES), out.shape

    ref = jax.block_until_ready(
        reference_forward(x, params, seq_len=SEQ_LEN, n_layers=N_LAYERS))
    err = float(jnp.max(jnp.abs(out - ref)))
    # Kernel uses bf16 weights / bf16 MXU passes with f32 accumulation inside a serial
    # recurrence; the reference uses default-precision f32 dots.  Per-step rounding
    # compounds, so the tolerance leaves margin at this seq_len.
    # TODO(synk): for production seq_len, validate drift or use a higher-precision pass
    # for the recurrent h@W_hh matmuls only.
    assert err < 5e-2, err

    print("KERNEL_OK")
</pallas_src>

<mosaic_0001>
module attributes {stable_mosaic.version = 11 : i64} {
  func.func @_decoder_kernel(%arg0: i32, %arg1: memref<8x32xf32, #tpu.memory_space<vmem>>, %arg2: memref<32x128xbf16, #tpu.memory_space<vmem>>, %arg3: memref<1x128xf32, #tpu.memory_space<vmem>>, %arg4: memref<128x512xbf16, #tpu.memory_space<vmem>>, %arg5: memref<128x512xbf16, #tpu.memory_space<vmem>>, %arg6: memref<1x512xf32, #tpu.memory_space<vmem>>, %arg7: memref<128x512xbf16, #tpu.memory_space<vmem>>, %arg8: memref<128x512xbf16, #tpu.memory_space<vmem>>, %arg9: memref<1x512xf32, #tpu.memory_space<vmem>>, %arg10: memref<8x8x128xf32, #tpu.memory_space<vmem>>, %arg11: memref<8x512xf32, #tpu.memory_space<vmem>>, %arg12: memref<1x8x128xf32, #tpu.memory_space<vmem>>, %arg13: memref<1x8x128xf32, #tpu.memory_space<vmem>>, %arg14: memref<8x128xf32, #tpu.memory_space<vmem>>, %arg15: memref<8x128xf32, #tpu.memory_space<vmem>>) attributes {dimension_semantics = [#tpu.dimension_semantics<arbitrary>], iteration_bounds = array<i64: 1>, scalar_prefetch = 0 : i64, scratch_operands = 5 : i64, tpu.core_type = #tpu.core_type<tc>, window_params = [{pipeline_mode = #tpu.pipeline_mode<synchronous>, transform_indices = @transform_0, window_bounds = array<i64: 8, 32>}, {pipeline_mode = #tpu.pipeline_mode<synchronous>, transform_indices = @transform_1, window_bounds = array<i64: 32, 128>}, {pipeline_mode = #tpu.pipeline_mode<synchronous>, transform_indices = @transform_2, window_bounds = array<i64: 1, 128>}, {pipeline_mode = #tpu.pipeline_mode<synchronous>, transform_indices = @transform_3, window_bounds = array<i64: 128, 512>}, {pipeline_mode = #tpu.pipeline_mode<synchronous>, transform_indices = @transform_4, window_bounds = array<i64: 128, 512>}, {pipeline_mode = #tpu.pipeline_mode<synchronous>, transform_indices = @transform_5, window_bounds = array<i64: 1, 512>}, {pipeline_mode = #tpu.pipeline_mode<synchronous>, transform_indices = @transform_6, window_bounds = array<i64: 128, 512>}, {pipeline_mode = #tpu.pipeline_mode<synchronous>, transform_indices = @transform_7, window_bounds = array<i64: 128, 512>}, {pipeline_mode = #tpu.pipeline_mode<synchronous>, transform_indices = @transform_8, window_bounds = array<i64: 1, 512>}, {transform_indices = @transform_9, window_bounds = array<i64: 8, 8, 128>}]} {
    %c0_i32 = arith.constant 0 : i32
    %0 = arith.cmpi eq, %arg0, %c0_i32 : i32
    %1 = arith.extui %0 : i1 to i32
    %c0_i32_0 = arith.constant 0 : i32
    %2 = arith.cmpi ne, %1, %c0_i32_0 : i32
    scf.if %2 {
      %c0_118 = arith.constant 0 : index
      %c0_119 = arith.constant 0 : index
      %520 = vector.load %arg1[%c0_118, %c0_119] : memref<8x32xf32, #tpu.memory_space<vmem>>, vector<8x32xf32>
      %521 = arith.truncf %520 : vector<8x32xf32> to vector<8x32xbf16>
      %c0_120 = arith.constant 0 : index
      %c0_121 = arith.constant 0 : index
      %522 = vector.load %arg2[%c0_120, %c0_121] : memref<32x128xbf16, #tpu.memory_space<vmem>>, vector<32x128xbf16>
      %cst_122 = arith.constant dense<0.000000e+00> : vector<8x128xf32>
      %523 = tpu.matmul %521, %522, %cst_122 {dimension_numbers = #tpu.dot_dimension_numbers<[1], [0], [0], [1], [0, 0, 1, 1], [], []>} : vector<8x32xbf16>, vector<32x128xbf16>, vector<8x128xf32> -> vector<8x128xf32>
      %c0_123 = arith.constant 0 : index
      %c0_124 = arith.constant 0 : index
      %524 = vector.load %arg3[%c0_123, %c0_124] : memref<1x128xf32, #tpu.memory_space<vmem>>, vector<1x128xf32>
      %525 = vector.broadcast %524 : vector<1x128xf32> to vector<8x128xf32>
      %526 = arith.addf %523, %525 : vector<8x128xf32>
      %cst_125 = arith.constant 0.000000e+00 : f32
      %527 = vector.broadcast %cst_125 : f32 to vector<8x128xf32>
      %528 = arith.cmpf oge, %526, %527 : vector<8x128xf32>
      %cst_126 = arith.constant 2.000000e-01 : f32
      %529 = vector.broadcast %cst_126 : f32 to vector<8x128xf32>
      %530 = arith.mulf %529, %526 : vector<8x128xf32>
      %531 = arith.select %528, %526, %530 : vector<8x128xi1>, vector<8x128xf32>
      %532 = arith.truncf %531 : vector<8x128xf32> to vector<8x128xbf16>
      %c0_127 = arith.constant 0 : index
      %c0_128 = arith.constant 0 : index
      %533 = vector.load %arg4[%c0_127, %c0_128] : memref<128x512xbf16, #tpu.memory_space<vmem>>, vector<128x512xbf16>
      %cst_129 = arith.constant dense<0.000000e+00> : vector<8x512xf32>
      %534 = tpu.matmul %532, %533, %cst_129 {dimension_numbers = #tpu.dot_dimension_numbers<[1], [0], [0], [1], [0, 0, 1, 1], [], []>} : vector<8x128xbf16>, vector<128x512xbf16>, vector<8x512xf32> -> vector<8x512xf32>
      %c0_130 = arith.constant 0 : index
      %c0_131 = arith.constant 0 : index
      %535 = vector.load %arg6[%c0_130, %c0_131] : memref<1x512xf32, #tpu.memory_space<vmem>>, vector<1x512xf32>
      %536 = vector.broadcast %535 : vector<1x512xf32> to vector<8x512xf32>
      %537 = arith.addf %534, %536 : vector<8x512xf32>
      %c0_132 = arith.constant 0 : index
      %c0_133 = arith.constant 0 : index
      %538 = vector.load %arg11[%c0_132, %c0_133] : memref<8x512xf32, #tpu.memory_space<vmem>>, vector<8x512xf32>
      tpu.vector_store %arg11[%c0_132, %c0_133], %537 {strides = array<i32>} : memref<8x512xf32, #tpu.memory_space<vmem>>, vector<8x512xf32>,
      %cst_134 = arith.constant 0.000000e+00 : f32
      %539 = vector.broadcast %cst_134 : f32 to vector<1x8x128xf32>
      %c0_135 = arith.constant 0 : index
      %c0_136 = arith.constant 0 : index
      %c0_137 = arith.constant 0 : index
      %540 = vector.load %arg12[%c0_135, %c0_136, %c0_137] : memref<1x8x128xf32, #tpu.memory_space<vmem>>, vector<1x8x128xf32>
      tpu.vector_store %arg12[%c0_135, %c0_136, %c0_137], %539 {strides = array<i32>} : memref<1x8x128xf32, #tpu.memory_space<vmem>>, vector<1x8x128xf32>,
      %cst_138 = arith.constant 0.000000e+00 : f32
      %541 = vector.broadcast %cst_138 : f32 to vector<1x8x128xf32>
      %c0_139 = arith.constant 0 : index
      %c0_140 = arith.constant 0 : index
      %c0_141 = arith.constant 0 : index
      %542 = vector.load %arg13[%c0_139, %c0_140, %c0_141] : memref<1x8x128xf32, #tpu.memory_space<vmem>>, vector<1x8x128xf32>
      tpu.vector_store %arg13[%c0_139, %c0_140, %c0_141], %541 {strides = array<i32>} : memref<1x8x128xf32, #tpu.memory_space<vmem>>, vector<1x8x128xf32>,
      %cst_142 = arith.constant 0.000000e+00 : f32
      %543 = vector.broadcast %cst_142 : f32 to vector<8x128xf32>
      %c0_143 = arith.constant 0 : index
      %c0_144 = arith.constant 0 : index
      %544 = vector.load %arg14[%c0_143, %c0_144] : memref<8x128xf32, #tpu.memory_space<vmem>>, vector<8x128xf32>
      tpu.vector_store %arg14[%c0_143, %c0_144], %543 {strides = array<i32>} : memref<8x128xf32, #tpu.memory_space<vmem>>, vector<8x128xf32>,
      %cst_145 = arith.constant 0.000000e+00 : f32
      %545 = vector.broadcast %cst_145 : f32 to vector<8x128xf32>
      %c0_146 = arith.constant 0 : index
      %c0_147 = arith.constant 0 : index
      %546 = vector.load %arg15[%c0_146, %c0_147] : memref<8x128xf32, #tpu.memory_space<vmem>>, vector<8x128xf32>
      tpu.vector_store %arg15[%c0_146, %c0_147], %545 {strides = array<i32>} : memref<8x128xf32, #tpu.memory_space<vmem>>, vector<8x128xf32>,
    } else {
    }
    %c0 = arith.constant 0 : index
    %c0_1 = arith.constant 0 : index
    %3 = vector.load %arg11[%c0, %c0_1] : memref<8x512xf32, #tpu.memory_space<vmem>>, vector<8x512xf32>
    %c0_2 = arith.constant 0 : index
    %c0_3 = arith.constant 0 : index
    %4 = vector.load %arg5[%c0_2, %c0_3] : memref<128x512xbf16, #tpu.memory_space<vmem>>, vector<128x512xbf16>
    %c0_4 = arith.constant 0 : index
    %c0_5 = arith.constant 0 : index
    %5 = vector.load %arg7[%c0_4, %c0_5] : memref<128x512xbf16, #tpu.memory_space<vmem>>, vector<128x512xbf16>
    %c0_6 = arith.constant 0 : index
    %c0_7 = arith.constant 0 : index
    %6 = vector.load %arg8[%c0_6, %c0_7] : memref<128x512xbf16, #tpu.memory_space<vmem>>, vector<128x512xbf16>
    %c0_8 = arith.constant 0 : index
    %c0_9 = arith.constant 0 : index
    %7 = vector.load %arg9[%c0_8, %c0_9] : memref<1x512xf32, #tpu.memory_space<vmem>>, vector<1x512xf32>
    %8 = vector.shape_cast %7 : vector<1x512xf32> to vector<1x512xf32>
    %9 = vector.broadcast %8 : vector<1x512xf32> to vector<8x512xf32>
    %c0_10 = arith.constant 0 : index
    %c0_11 = arith.constant 0 : index
    %c0_12 = arith.constant 0 : index
    %10 = vector.load %arg12[%c0_10, %c0_11, %c0_12] : memref<1x8x128xf32, #tpu.memory_space<vmem>>, vector<1x8x128xf32>
    %11 = vector.shape_cast %10 : vector<1x8x128xf32> to vector<8x128xf32>
    %c0_13 = arith.constant 0 : index
    %c0_14 = arith.constant 0 : index
    %c0_15 = arith.constant 0 : index
    %12 = vector.load %arg13[%c0_13, %c0_14, %c0_15] : memref<1x8x128xf32, #tpu.memory_space<vmem>>, vector<1x8x128xf32>
    %13 = vector.shape_cast %12 : vector<1x8x128xf32> to vector<8x128xf32>
    %c0_16 = arith.constant 0 : index
    %c0_17 = arith.constant 0 : index
    %14 = vector.load %arg14[%c0_16, %c0_17] : memref<8x128xf32, #tpu.memory_space<vmem>>, vector<8x128xf32>
    %c0_18 = arith.constant 0 : index
    %c0_19 = arith.constant 0 : index
    %15 = vector.load %arg15[%c0_18, %c0_19] : memref<8x128xf32, #tpu.memory_space<vmem>>, vector<8x128xf32>
    %16 = arith.truncf %11 : vector<8x128xf32> to vector<8x128xbf16>
    %cst = arith.constant dense<0.000000e+00> : vector<8x512xf32>
    %17 = tpu.matmul %16, %4, %cst {dimension_numbers = #tpu.dot_dimension_numbers<[1], [0], [0], [1], [0, 0, 1, 1], [], []>} : vector<8x128xbf16>, vector<128x512xbf16>, vector<8x512xf32> -> vector<8x512xf32>
    %18 = arith.addf %3, %17 : vector<8x512xf32>
    %19 = vector.extract_strided_slice %18 {offsets = [0, 0], sizes = [8, 128], strides = [1, 1]} : vector<8x512xf32> to vector<8x128xf32>
    %20 = arith.negf %19 : vector<8x128xf32>
    %21 = math.exp %20 : vector<8x128xf32>
    %cst_20 = arith.constant 1.000000e+00 : f32
    %22 = vector.broadcast %cst_20 : f32 to vector<8x128xf32>
    %23 = arith.addf %22, %21 : vector<8x128xf32>
    %24 = arith.divf %22, %23 : vector<8x128xf32>
    %25 = vector.extract_strided_slice %18 {offsets = [0, 128], sizes = [8, 128], strides = [1, 1]} : vector<8x512xf32> to vector<8x128xf32>
    %26 = arith.negf %25 : vector<8x128xf32>
    %27 = math.exp %26 : vector<8x128xf32>
    %cst_21 = arith.constant 1.000000e+00 : f32
    %28 = vector.broadcast %cst_21 : f32 to vector<8x128xf32>
    %29 = arith.addf %28, %27 : vector<8x128xf32>
    %30 = arith.divf %28, %29 : vector<8x128xf32>
    %31 = vector.extract_strided_slice %18 {offsets = [0, 256], sizes = [8, 128], strides = [1, 1]} : vector<8x512xf32> to vector<8x128xf32>
    %32 = math.tanh %31 : vector<8x128xf32>
    %33 = vector.extract_strided_slice %18 {offsets = [0, 384], sizes = [8, 128], strides = [1, 1]} : vector<8x512xf32> to vector<8x128xf32>
    %34 = arith.negf %33 : vector<8x128xf32>
    %35 = math.exp %34 : vector<8x128xf32>
    %cst_22 = arith.constant 1.000000e+00 : f32
    %36 = vector.broadcast %cst_22 : f32 to vector<8x128xf32>
    %37 = arith.addf %36, %35 : vector<8x128xf32>
    %38 = arith.divf %36, %37 : vector<8x128xf32>
    %39 = arith.mulf %30, %13 : vector<8x128xf32>
    %40 = arith.mulf %24, %32 : vector<8x128xf32>
    %41 = arith.addf %39, %40 : vector<8x128xf32>
    %42 = math.tanh %41 : vector<8x128xf32>
    %43 = arith.mulf %38, %42 : vector<8x128xf32>
    %44 = arith.truncf %43 : vector<8x128xf32> to vector<8x128xbf16>
    %cst_23 = arith.constant dense<0.000000e+00> : vector<8x512xf32>
    %45 = tpu.matmul %44, %5, %cst_23 {dimension_numbers = #tpu.dot_dimension_numbers<[1], [0], [0], [1], [0, 0, 1, 1], [], []>} : vector<8x128xbf16>, vector<128x512xbf16>, vector<8x512xf32> -> vector<8x512xf32>
    %46 = arith.truncf %14 : vector<8x128xf32> to vector<8x128xbf16>
    %cst_24 = arith.constant dense<0.000000e+00> : vector<8x512xf32>
    %47 = tpu.matmul %46, %6, %cst_24 {dimension_numbers = #tpu.dot_dimension_numbers<[1], [0], [0], [1], [0, 0, 1, 1], [], []>} : vector<8x128xbf16>, vector<128x512xbf16>, vector<8x512xf32> -> vector<8x512xf32>
    %48 = arith.addf %45, %47 : vector<8x512xf32>
    %49 = arith.addf %48, %9 : vector<8x512xf32>
    %50 = vector.extract_strided_slice %49 {offsets = [0, 0], sizes = [8, 128], strides = [1, 1]} : vector<8x512xf32> to vector<8x128xf32>
    %51 = arith.negf %50 : vector<8x128xf32>
    %52 = math.exp %51 : vector<8x128xf32>
    %cst_25 = arith.constant 1.000000e+00 : f32
    %53 = vector.broadcast %cst_25 : f32 to vector<8x128xf32>
    %54 = arith.addf %53, %52 : vector<8x128xf32>
    %55 = arith.divf %53, %54 : vector<8x128xf32>
    %56 = vector.extract_strided_slice %49 {offsets = [0, 128], sizes = [8, 128], strides = [1, 1]} : vector<8x512xf32> to vector<8x128xf32>
    %57 = arith.negf %56 : vector<8x128xf32>
    %58 = math.exp %57 : vector<8x128xf32>
    %cst_26 = arith.constant 1.000000e+00 : f32
    %59 = vector.broadcast %cst_26 : f32 to vector<8x128xf32>
    %60 = arith.addf %59, %58 : vector<8x128xf32>
    %61 = arith.divf %59, %60 : vector<8x128xf32>
    %62 = vector.extract_strided_slice %49 {offsets = [0, 256], sizes = [8, 128], strides = [1, 1]} : vector<8x512xf32> to vector<8x128xf32>
    %63 = math.tanh %62 : vector<8x128xf32>
    %64 = vector.extract_strided_slice %49 {offsets = [0, 384], sizes = [8, 128], strides = [1, 1]} : vector<8x512xf32> to vector<8x128xf32>
    %65 = arith.negf %64 : vector<8x128xf32>
    %66 = math.exp %65 : vector<8x128xf32>
    %cst_27 = arith.constant 1.000000e+00 : f32
    %67 = vector.broadcast %cst_27 : f32 to vector<8x128xf32>
    %68 = arith.addf %67, %66 : vector<8x128xf32>
    %69 = arith.divf %67, %68 : vector<8x128xf32>
    %70 = arith.mulf %61, %15 : vector<8x128xf32>
    %71 = arith.mulf %55, %63 : vector<8x128xf32>
    %72 = arith.addf %70, %71 : vector<8x128xf32>
    %73 = math.tanh %72 : vector<8x128xf32>
    %74 = arith.mulf %69, %73 : vector<8x128xf32>
    %c0_28 = arith.constant 0 : index
    %c0_29 = arith.constant 0 : index
    %c0_30 = arith.constant 0 : index
    %75 = vector.load %arg10[%c0_28, %c0_29, %c0_30] : memref<8x8x128xf32, #tpu.memory_space<vmem>>, vector<1x8x128xf32>
    %76 = vector.shape_cast %75 : vector<1x8x128xf32> to vector<8x128xf32>
    %77 = vector.shape_cast %74 : vector<8x128xf32> to vector<1x8x128xf32>
    tpu.vector_store %arg10[%c0_28, %c0_29, %c0_30], %77 {strides = array<i32>} : memref<8x8x128xf32, #tpu.memory_space<vmem>>, vector<1x8x128xf32>,
    %78 = arith.truncf %43 : vector<8x128xf32> to vector<8x128xbf16>
    %cst_31 = arith.constant dense<0.000000e+00> : vector<8x512xf32>
    %79 = tpu.matmul %78, %4, %cst_31 {dimension_numbers = #tpu.dot_dimension_numbers<[1], [0], [0], [1], [0, 0, 1, 1], [], []>} : vector<8x128xbf16>, vector<128x512xbf16>, vector<8x512xf32> -> vector<8x512xf32>
    %80 = arith.addf %3, %79 : vector<8x512xf32>
    %81 = vector.extract_strided_slice %80 {offsets = [0, 0], sizes = [8, 128], strides = [1, 1]} : vector<8x512xf32> to vector<8x128xf32>
    %82 = arith.negf %81 : vector<8x128xf32>
    %83 = math.exp %82 : vector<8x128xf32>
    %cst_32 = arith.constant 1.000000e+00 : f32
    %84 = vector.broadcast %cst_32 : f32 to vector<8x128xf32>
    %85 = arith.addf %84, %83 : vector<8x128xf32>
    %86 = arith.divf %84, %85 : vector<8x128xf32>
    %87 = vector.extract_strided_slice %80 {offsets = [0, 128], sizes = [8, 128], strides = [1, 1]} : vector<8x512xf32> to vector<8x128xf32>
    %88 = arith.negf %87 : vector<8x128xf32>
    %89 = math.exp %88 : vector<8x128xf32>
    %cst_33 = arith.constant 1.000000e+00 : f32
    %90 = vector.broadcast %cst_33 : f32 to vector<8x128xf32>
    %91 = arith.addf %90, %89 : vector<8x128xf32>
    %92 = arith.divf %90, %91 : vector<8x128xf32>
    %93 = vector.extract_strided_slice %80 {offsets = [0, 256], sizes = [8, 128], strides = [1, 1]} : vector<8x512xf32> to vector<8x128xf32>
    %94 = math.tanh %93 : vector<8x128xf32>
    %95 = vector.extract_strided_slice %80 {offsets = [0, 384], sizes = [8, 128], strides = [1, 1]} : vector<8x512xf32> to vector<8x128xf32>
    %96 = arith.negf %95 : vector<8x128xf32>
    %97 = math.exp %96 : vector<8x128xf32>
    %cst_34 = arith.constant 1.000000e+00 : f32
    %98 = vector.broadcast %cst_34 : f32 to vector<8x128xf32>
    %99 = arith.addf %98, %97 : vector<8x128xf32>
    %100 = arith.divf %98, %99 : vector<8x128xf32>
    %101 = arith.mulf %92, %41 : vector<8x128xf32>
    %102 = arith.mulf %86, %94 : vector<8x128xf32>
    %103 = arith.addf %101, %102 : vector<8x128xf32>
    %104 = math.tanh %103 : vector<8x128xf32>
    %105 = arith.mulf %100, %104 : vector<8x128xf32>
    %106 = arith.truncf %105 : vector<8x128xf32> to vector<8x128xbf16>
    %cst_35 = arith.constant dense<0.000000e+00> : vector<8x512xf32>
    %107 = tpu.matmul %106, %5, %cst_35 {dimension_numbers = #tpu.dot_dimension_numbers<[1], [0], [0], [1], [0, 0, 1, 1], [], []>} : vector<8x128xbf16>, vector<128x512xbf16>, vector<8x512xf32> -> vector<8x512xf32>
    %108 = arith.truncf %74 : vector<8x128xf32> to vector<8x128xbf16>
    %cst_36 = arith.constant dense<0.000000e+00> : vector<8x512xf32>
    %109 = tpu.matmul %108, %6, %cst_36 {dimension_numbers = #tpu.dot_dimension_numbers<[1], [0], [0], [1], [0, 0, 1, 1], [], []>} : vector<8x128xbf16>, vector<128x512xbf16>, vector<8x512xf32> -> vector<8x512xf32>
    %110 = arith.addf %107, %109 : vector<8x512xf32>
    %111 = arith.addf %110, %9 : vector<8x512xf32>
    %112 = vector.extract_strided_slice %111 {offsets = [0, 0], sizes = [8, 128], strides = [1, 1]} : vector<8x512xf32> to vector<8x128xf32>
    %113 = arith.negf %112 : vector<8x128xf32>
    %114 = math.exp %113 : vector<8x128xf32>
    %cst_37 = arith.constant 1.000000e+00 : f32
    %115 = vector.broadcast %cst_37 : f32 to vector<8x128xf32>
    %116 = arith.addf %115, %114 : vector<8x128xf32>
    %117 = arith.divf %115, %116 : vector<8x128xf32>
    %118 = vector.extract_strided_slice %111 {offsets = [0, 128], sizes = [8, 128], strides = [1, 1]} : vector<8x512xf32> to vector<8x128xf32>
    %119 = arith.negf %118 : vector<8x128xf32>
    %120 = math.exp %119 : vector<8x128xf32>
    %cst_38 = arith.constant 1.000000e+00 : f32
    %121 = vector.broadcast %cst_38 : f32 to vector<8x128xf32>
    %122 = arith.addf %121, %120 : vector<8x128xf32>
    %123 = arith.divf %121, %122 : vector<8x128xf32>
    %124 = vector.extract_strided_slice %111 {offsets = [0, 256], sizes = [8, 128], strides = [1, 1]} : vector<8x512xf32> to vector<8x128xf32>
    %125 = math.tanh %124 : vector<8x128xf32>
    %126 = vector.extract_strided_slice %111 {offsets = [0, 384], sizes = [8, 128], strides = [1, 1]} : vector<8x512xf32> to vector<8x128xf32>
    %127 = arith.negf %126 : vector<8x128xf32>
    %128 = math.exp %127 : vector<8x128xf32>
    %cst_39 = arith.constant 1.000000e+00 : f32
    %129 = vector.broadcast %cst_39 : f32 to vector<8x128xf32>
    %130 = arith.addf %129, %128 : vector<8x128xf32>
    %131 = arith.divf %129, %130 : vector<8x128xf32>
    %132 = arith.mulf %123, %72 : vector<8x128xf32>
    %133 = arith.mulf %117, %125 : vector<8x128xf32>
    %134 = arith.addf %132, %133 : vector<8x128xf32>
    %135 = math.tanh %134 : vector<8x128xf32>
    %136 = arith.mulf %131, %135 : vector<8x128xf32>
    %c1 = arith.constant 1 : index
    %c0_40 = arith.constant 0 : index
    %c0_41 = arith.constant 0 : index
    %137 = vector.load %arg10[%c1, %c0_40, %c0_41] : memref<8x8x128xf32, #tpu.memory_space<vmem>>, vector<1x8x128xf32>
    %138 = vector.shape_cast %137 : vector<1x8x128xf32> to vector<8x128xf32>
    %139 = vector.shape_cast %136 : vector<8x128xf32> to vector<1x8x128xf32>
    tpu.vector_store %arg10[%c1, %c0_40, %c0_41], %139 {strides = array<i32>} : memref<8x8x128xf32, #tpu.memory_space<vmem>>, vector<1x8x128xf32>,
    %140 = arith.truncf %105 : vector<8x128xf32> to vector<8x128xbf16>
    %cst_42 = arith.constant dense<0.000000e+00> : vector<8x512xf32>
    %141 = tpu.matmul %140, %4, %cst_42 {dimension_numbers = #tpu.dot_dimension_numbers<[1], [0], [0], [1], [0, 0, 1, 1], [], []>} : vector<8x128xbf16>, vector<128x512xbf16>, vector<8x512xf32> -> vector<8x512xf32>
    %142 = arith.addf %3, %141 : vector<8x512xf32>
    %143 = vector.extract_strided_slice %142 {offsets = [0, 0], sizes = [8, 128], strides = [1, 1]} : vector<8x512xf32> to vector<8x128xf32>
    %144 = arith.negf %143 : vector<8x128xf32>
    %145 = math.exp %144 : vector<8x128xf32>
    %cst_43 = arith.constant 1.000000e+00 : f32
    %146 = vector.broadcast %cst_43 : f32 to vector<8x128xf32>
    %147 = arith.addf %146, %145 : vector<8x128xf32>
    %148 = arith.divf %146, %147 : vector<8x128xf32>
    %149 = vector.extract_strided_slice %142 {offsets = [0, 128], sizes = [8, 128], strides = [1, 1]} : vector<8x512xf32> to vector<8x128xf32>
    %150 = arith.negf %149 : vector<8x128xf32>
    %151 = math.exp %150 : vector<8x128xf32>
    %cst_44 = arith.constant 1.000000e+00 : f32
    %152 = vector.broadcast %cst_44 : f32 to vector<8x128xf32>
    %153 = arith.addf %152, %151 : vector<8x128xf32>
    %154 = arith.divf %152, %153 : vector<8x128xf32>
    %155 = vector.extract_strided_slice %142 {offsets = [0, 256], sizes = [8, 128], strides = [1, 1]} : vector<8x512xf32> to vector<8x128xf32>
    %156 = math.tanh %155 : vector<8x128xf32>
    %157 = vector.extract_strided_slice %142 {offsets = [0, 384], sizes = [8, 128], strides = [1, 1]} : vector<8x512xf32> to vector<8x128xf32>
    %158 = arith.negf %157 : vector<8x128xf32>
    %159 = math.exp %158 : vector<8x128xf32>
    %cst_45 = arith.constant 1.000000e+00 : f32
    %160 = vector.broadcast %cst_45 : f32 to vector<8x128xf32>
    %161 = arith.addf %160, %159 : vector<8x128xf32>
    %162 = arith.divf %160, %161 : vector<8x128xf32>
    %163 = arith.mulf %154, %103 : vector<8x128xf32>
    %164 = arith.mulf %148, %156 : vector<8x128xf32>
    %165 = arith.addf %163, %164 : vector<8x128xf32>
    %166 = math.tanh %165 : vector<8x128xf32>
    %167 = arith.mulf %162, %166 : vector<8x128xf32>
    %168 = arith.truncf %167 : vector<8x128xf32> to vector<8x128xbf16>
    %cst_46 = arith.constant dense<0.000000e+00> : vector<8x512xf32>
    %169 = tpu.matmul %168, %5, %cst_46 {dimension_numbers = #tpu.dot_dimension_numbers<[1], [0], [0], [1], [0, 0, 1, 1], [], []>} : vector<8x128xbf16>, vector<128x512xbf16>, vector<8x512xf32> -> vector<8x512xf32>
    %170 = arith.truncf %136 : vector<8x128xf32> to vector<8x128xbf16>
    %cst_47 = arith.constant dense<0.000000e+00> : vector<8x512xf32>
    %171 = tpu.matmul %170, %6, %cst_47 {dimension_numbers = #tpu.dot_dimension_numbers<[1], [0], [0], [1], [0, 0, 1, 1], [], []>} : vector<8x128xbf16>, vector<128x512xbf16>, vector<8x512xf32> -> vector<8x512xf32>
    %172 = arith.addf %169, %171 : vector<8x512xf32>
    %173 = arith.addf %172, %9 : vector<8x512xf32>
    %174 = vector.extract_strided_slice %173 {offsets = [0, 0], sizes = [8, 128], strides = [1, 1]} : vector<8x512xf32> to vector<8x128xf32>
    %175 = arith.negf %174 : vector<8x128xf32>
    %176 = math.exp %175 : vector<8x128xf32>
    %cst_48 = arith.constant 1.000000e+00 : f32
    %177 = vector.broadcast %cst_48 : f32 to vector<8x128xf32>
    %178 = arith.addf %177, %176 : vector<8x128xf32>
    %179 = arith.divf %177, %178 : vector<8x128xf32>
    %180 = vector.extract_strided_slice %173 {offsets = [0, 128], sizes = [8, 128], strides = [1, 1]} : vector<8x512xf32> to vector<8x128xf32>
    %181 = arith.negf %180 : vector<8x128xf32>
    %182 = math.exp %181 : vector<8x128xf32>
    %cst_49 = arith.constant 1.000000e+00 : f32
    %183 = vector.broadcast %cst_49 : f32 to vector<8x128xf32>
    %184 = arith.addf %183, %182 : vector<8x128xf32>
    %185 = arith.divf %183, %184 : vector<8x128xf32>
    %186 = vector.extract_strided_slice %173 {offsets = [0, 256], sizes = [8, 128], strides = [1, 1]} : vector<8x512xf32> to vector<8x128xf32>
    %187 = math.tanh %186 : vector<8x128xf32>
    %188 = vector.extract_strided_slice %173 {offsets = [0, 384], sizes = [8, 128], strides = [1, 1]} : vector<8x512xf32> to vector<8x128xf32>
    %189 = arith.negf %188 : vector<8x128xf32>
    %190 = math.exp %189 : vector<8x128xf32>
    %cst_50 = arith.constant 1.000000e+00 : f32
    %191 = vector.broadcast %cst_50 : f32 to vector<8x128xf32>
    %192 = arith.addf %191, %190 : vector<8x128xf32>
    %193 = arith.divf %191, %192 : vector<8x128xf32>
    %194 = arith.mulf %185, %134 : vector<8x128xf32>
    %195 = arith.mulf %179, %187 : vector<8x128xf32>
    %196 = arith.addf %194, %195 : vector<8x128xf32>
    %197 = math.tanh %196 : vector<8x128xf32>
    %198 = arith.mulf %193, %197 : vector<8x128xf32>
    %c2 = arith.constant 2 : index
    %c0_51 = arith.constant 0 : index
    %c0_52 = arith.constant 0 : index
    %199 = vector.load %arg10[%c2, %c0_51, %c0_52] : memref<8x8x128xf32, #tpu.memory_space<vmem>>, vector<1x8x128xf32>
    %200 = vector.shape_cast %199 : vector<1x8x128xf32> to vector<8x128xf32>
    %201 = vector.shape_cast %198 : vector<8x128xf32> to vector<1x8x128xf32>
    tpu.vector_store %arg10[%c2, %c0_51, %c0_52], %201 {strides = array<i32>} : memref<8x8x128xf32, #tpu.memory_space<vmem>>, vector<1x8x128xf32>,
    %202 = arith.truncf %167 : vector<8x128xf32> to vector<8x128xbf16>
    %cst_53 = arith.constant dense<0.000000e+00> : vector<8x512xf32>
    %203 = tpu.matmul %202, %4, %cst_53 {dimension_numbers = #tpu.dot_dimension_numbers<[1], [0], [0], [1], [0, 0, 1, 1], [], []>} : vector<8x128xbf16>, vector<128x512xbf16>, vector<8x512xf32> -> vector<8x512xf32>
    %204 = arith.addf %3, %203 : vector<8x512xf32>
    %205 = vector.extract_strided_slice %204 {offsets = [0, 0], sizes = [8, 128], strides = [1, 1]} : vector<8x512xf32> to vector<8x128xf32>
    %206 = arith.negf %205 : vector<8x128xf32>
    %207 = math.exp %206 : vector<8x128xf32>
    %cst_54 = arith.constant 1.000000e+00 : f32
    %208 = vector.broadcast %cst_54 : f32 to vector<8x128xf32>
    %209 = arith.addf %208, %207 : vector<8x128xf32>
    %210 = arith.divf %208, %209 : vector<8x128xf32>
    %211 = vector.extract_strided_slice %204 {offsets = [0, 128], sizes = [8, 128], strides = [1, 1]} : vector<8x512xf32> to vector<8x128xf32>
    %212 = arith.negf %211 : vector<8x128xf32>
    %213 = math.exp %212 : vector<8x128xf32>
    %cst_55 = arith.constant 1.000000e+00 : f32
    %214 = vector.broadcast %cst_55 : f32 to vector<8x128xf32>
    %215 = arith.addf %214, %213 : vector<8x128xf32>
    %216 = arith.divf %214, %215 : vector<8x128xf32>
    %217 = vector.extract_strided_slice %204 {offsets = [0, 256], sizes = [8, 128], strides = [1, 1]} : vector<8x512xf32> to vector<8x128xf32>
    %218 = math.tanh %217 : vector<8x128xf32>
    %219 = vector.extract_strided_slice %204 {offsets = [0, 384], sizes = [8, 128], strides = [1, 1]} : vector<8x512xf32> to vector<8x128xf32>
    %220 = arith.negf %219 : vector<8x128xf32>
    %221 = math.exp %220 : vector<8x128xf32>
    %cst_56 = arith.constant 1.000000e+00 : f32
    %222 = vector.broadcast %cst_56 : f32 to vector<8x128xf32>
    %223 = arith.addf %222, %221 : vector<8x128xf32>
    %224 = arith.divf %222, %223 : vector<8x128xf32>
    %225 = arith.mulf %216, %165 : vector<8x128xf32>
    %226 = arith.mulf %210, %218 : vector<8x128xf32>
    %227 = arith.addf %225, %226 : vector<8x128xf32>
    %228 = math.tanh %227 : vector<8x128xf32>
    %229 = arith.mulf %224, %228 : vector<8x128xf32>
    %230 = arith.truncf %229 : vector<8x128xf32> to vector<8x128xbf16>
    %cst_57 = arith.constant dense<0.000000e+00> : vector<8x512xf32>
    %231 = tpu.matmul %230, %5, %cst_57 {dimension_numbers = #tpu.dot_dimension_numbers<[1], [0], [0], [1], [0, 0, 1, 1], [], []>} : vector<8x128xbf16>, vector<128x512xbf16>, vector<8x512xf32> -> vector<8x512xf32>
    %232 = arith.truncf %198 : vector<8x128xf32> to vector<8x128xbf16>
    %cst_58 = arith.constant dense<0.000000e+00> : vector<8x512xf32>
    %233 = tpu.matmul %232, %6, %cst_58 {dimension_numbers = #tpu.dot_dimension_numbers<[1], [0], [0], [1], [0, 0, 1, 1], [], []>} : vector<8x128xbf16>, vector<128x512xbf16>, vector<8x512xf32> -> vector<8x512xf32>
    %234 = arith.addf %231, %233 : vector<8x512xf32>
    %235 = arith.addf %234, %9 : vector<8x512xf32>
    %236 = vector.extract_strided_slice %235 {offsets = [0, 0], sizes = [8, 128], strides = [1, 1]} : vector<8x512xf32> to vector<8x128xf32>
    %237 = arith.negf %236 : vector<8x128xf32>
    %238 = math.exp %237 : vector<8x128xf32>
    %cst_59 = arith.constant 1.000000e+00 : f32
    %239 = vector.broadcast %cst_59 : f32 to vector<8x128xf32>
    %240 = arith.addf %239, %238 : vector<8x128xf32>
    %241 = arith.divf %239, %240 : vector<8x128xf32>
    %242 = vector.extract_strided_slice %235 {offsets = [0, 128], sizes = [8, 128], strides = [1, 1]} : vector<8x512xf32> to vector<8x128xf32>
    %243 = arith.negf %242 : vector<8x128xf32>
    %244 = math.exp %243 : vector<8x128xf32>
    %cst_60 = arith.constant 1.000000e+00 : f32
    %245 = vector.broadcast %cst_60 : f32 to vector<8x128xf32>
    %246 = arith.addf %245, %244 : vector<8x128xf32>
    %247 = arith.divf %245, %246 : vector<8x128xf32>
    %248 = vector.extract_strided_slice %235 {offsets = [0, 256], sizes = [8, 128], strides = [1, 1]} : vector<8x512xf32> to vector<8x128xf32>
    %249 = math.tanh %248 : vector<8x128xf32>
    %250 = vector.extract_strided_slice %235 {offsets = [0, 384], sizes = [8, 128], strides = [1, 1]} : vector<8x512xf32> to vector<8x128xf32>
    %251 = arith.negf %250 : vector<8x128xf32>
    %252 = math.exp %251 : vector<8x128xf32>
    %cst_61 = arith.constant 1.000000e+00 : f32
    %253 = vector.broadcast %cst_61 : f32 to vector<8x128xf32>
    %254 = arith.addf %253, %252 : vector<8x128xf32>
    %255 = arith.divf %253, %254 : vector<8x128xf32>
    %256 = arith.mulf %247, %196 : vector<8x128xf32>
    %257 = arith.mulf %241, %249 : vector<8x128xf32>
    %258 = arith.addf %256, %257 : vector<8x128xf32>
    %259 = math.tanh %258 : vector<8x128xf32>
    %260 = arith.mulf %255, %259 : vector<8x128xf32>
    %c3 = arith.constant 3 : index
    %c0_62 = arith.constant 0 : index
    %c0_63 = arith.constant 0 : index
    %261 = vector.load %arg10[%c3, %c0_62, %c0_63] : memref<8x8x128xf32, #tpu.memory_space<vmem>>, vector<1x8x128xf32>
    %262 = vector.shape_cast %261 : vector<1x8x128xf32> to vector<8x128xf32>
    %263 = vector.shape_cast %260 : vector<8x128xf32> to vector<1x8x128xf32>
    tpu.vector_store %arg10[%c3, %c0_62, %c0_63], %263 {strides = array<i32>} : memref<8x8x128xf32, #tpu.memory_space<vmem>>, vector<1x8x128xf32>,
    %264 = arith.truncf %229 : vector<8x128xf32> to vector<8x128xbf16>
    %cst_64 = arith.constant dense<0.000000e+00> : vector<8x512xf32>
    %265 = tpu.matmul %264, %4, %cst_64 {dimension_numbers = #tpu.dot_dimension_numbers<[1], [0], [0], [1], [0, 0, 1, 1], [], []>} : vector<8x128xbf16>, vector<128x512xbf16>, vector<8x512xf32> -> vector<8x512xf32>
    %266 = arith.addf %3, %265 : vector<8x512xf32>
    %267 = vector.extract_strided_slice %266 {offsets = [0, 0], sizes = [8, 128], strides = [1, 1]} : vector<8x512xf32> to vector<8x128xf32>
    %268 = arith.negf %267 : vector<8x128xf32>
    %269 = math.exp %268 : vector<8x128xf32>
    %cst_65 = arith.constant 1.000000e+00 : f32
    %270 = vector.broadcast %cst_65 : f32 to vector<8x128xf32>
    %271 = arith.addf %270, %269 : vector<8x128xf32>
    %272 = arith.divf %270, %271 : vector<8x128xf32>
    %273 = vector.extract_strided_slice %266 {offsets = [0, 128], sizes = [8, 128], strides = [1, 1]} : vector<8x512xf32> to vector<8x128xf32>
    %274 = arith.negf %273 : vector<8x128xf32>
    %275 = math.exp %274 : vector<8x128xf32>
    %cst_66 = arith.constant 1.000000e+00 : f32
    %276 = vector.broadcast %cst_66 : f32 to vector<8x128xf32>
    %277 = arith.addf %276, %275 : vector<8x128xf32>
    %278 = arith.divf %276, %277 : vector<8x128xf32>
    %279 = vector.extract_strided_slice %266 {offsets = [0, 256], sizes = [8, 128], strides = [1, 1]} : vector<8x512xf32> to vector<8x128xf32>
    %280 = math.tanh %279 : vector<8x128xf32>
    %281 = vector.extract_strided_slice %266 {offsets = [0, 384], sizes = [8, 128], strides = [1, 1]} : vector<8x512xf32> to vector<8x128xf32>
    %282 = arith.negf %281 : vector<8x128xf32>
    %283 = math.exp %282 : vector<8x128xf32>
    %cst_67 = arith.constant 1.000000e+00 : f32
    %284 = vector.broadcast %cst_67 : f32 to vector<8x128xf32>
    %285 = arith.addf %284, %283 : vector<8x128xf32>
    %286 = arith.divf %284, %285 : vector<8x128xf32>
    %287 = arith.mulf %278, %227 : vector<8x128xf32>
    %288 = arith.mulf %272, %280 : vector<8x128xf32>
    %289 = arith.addf %287, %288 : vector<8x128xf32>
    %290 = math.tanh %289 : vector<8x128xf32>
    %291 = arith.mulf %286, %290 : vector<8x128xf32>
    %292 = arith.truncf %291 : vector<8x128xf32> to vector<8x128xbf16>
    %cst_68 = arith.constant dense<0.000000e+00> : vector<8x512xf32>
    %293 = tpu.matmul %292, %5, %cst_68 {dimension_numbers = #tpu.dot_dimension_numbers<[1], [0], [0], [1], [0, 0, 1, 1], [], []>} : vector<8x128xbf16>, vector<128x512xbf16>, vector<8x512xf32> -> vector<8x512xf32>
    %294 = arith.truncf %260 : vector<8x128xf32> to vector<8x128xbf16>
    %cst_69 = arith.constant dense<0.000000e+00> : vector<8x512xf32>
    %295 = tpu.matmul %294, %6, %cst_69 {dimension_numbers = #tpu.dot_dimension_numbers<[1], [0], [0], [1], [0, 0, 1, 1], [], []>} : vector<8x128xbf16>, vector<128x512xbf16>, vector<8x512xf32> -> vector<8x512xf32>
    %296 = arith.addf %293, %295 : vector<8x512xf32>
    %297 = arith.addf %296, %9 : vector<8x512xf32>
    %298 = vector.extract_strided_slice %297 {offsets = [0, 0], sizes = [8, 128], strides = [1, 1]} : vector<8x512xf32> to vector<8x128xf32>
    %299 = arith.negf %298 : vector<8x128xf32>
    %300 = math.exp %299 : vector<8x128xf32>
    %cst_70 = arith.constant 1.000000e+00 : f32
    %301 = vector.broadcast %cst_70 : f32 to vector<8x128xf32>
    %302 = arith.addf %301, %300 : vector<8x128xf32>
    %303 = arith.divf %301, %302 : vector<8x128xf32>
    %304 = vector.extract_strided_slice %297 {offsets = [0, 128], sizes = [8, 128], strides = [1, 1]} : vector<8x512xf32> to vector<8x128xf32>
    %305 = arith.negf %304 : vector<8x128xf32>
    %306 = math.exp %305 : vector<8x128xf32>
    %cst_71 = arith.constant 1.000000e+00 : f32
    %307 = vector.broadcast %cst_71 : f32 to vector<8x128xf32>
    %308 = arith.addf %307, %306 : vector<8x128xf32>
    %309 = arith.divf %307, %308 : vector<8x128xf32>
    %310 = vector.extract_strided_slice %297 {offsets = [0, 256], sizes = [8, 128], strides = [1, 1]} : vector<8x512xf32> to vector<8x128xf32>
    %311 = math.tanh %310 : vector<8x128xf32>
    %312 = vector.extract_strided_slice %297 {offsets = [0, 384], sizes = [8, 128], strides = [1, 1]} : vector<8x512xf32> to vector<8x128xf32>
    %313 = arith.negf %312 : vector<8x128xf32>
    %314 = math.exp %313 : vector<8x128xf32>
    %cst_72 = arith.constant 1.000000e+00 : f32
    %315 = vector.broadcast %cst_72 : f32 to vector<8x128xf32>
    %316 = arith.addf %315, %314 : vector<8x128xf32>
    %317 = arith.divf %315, %316 : vector<8x128xf32>
    %318 = arith.mulf %309, %258 : vector<8x128xf32>
    %319 = arith.mulf %303, %311 : vector<8x128xf32>
    %320 = arith.addf %318, %319 : vector<8x128xf32>
    %321 = math.tanh %320 : vector<8x128xf32>
    %322 = arith.mulf %317, %321 : vector<8x128xf32>
    %c4 = arith.constant 4 : index
    %c0_73 = arith.constant 0 : index
    %c0_74 = arith.constant 0 : index
    %323 = vector.load %arg10[%c4, %c0_73, %c0_74] : memref<8x8x128xf32, #tpu.memory_space<vmem>>, vector<1x8x128xf32>
    %324 = vector.shape_cast %323 : vector<1x8x128xf32> to vector<8x128xf32>
    %325 = vector.shape_cast %322 : vector<8x128xf32> to vector<1x8x128xf32>
    tpu.vector_store %arg10[%c4, %c0_73, %c0_74], %325 {strides = array<i32>} : memref<8x8x128xf32, #tpu.memory_space<vmem>>, vector<1x8x128xf32>,
    %326 = arith.truncf %291 : vector<8x128xf32> to vector<8x128xbf16>
    %cst_75 = arith.constant dense<0.000000e+00> : vector<8x512xf32>
    %327 = tpu.matmul %326, %4, %cst_75 {dimension_numbers = #tpu.dot_dimension_numbers<[1], [0], [0], [1], [0, 0, 1, 1], [], []>} : vector<8x128xbf16>, vector<128x512xbf16>, vector<8x512xf32> -> vector<8x512xf32>
    %328 = arith.addf %3, %327 : vector<8x512xf32>
    %329 = vector.extract_strided_slice %328 {offsets = [0, 0], sizes = [8, 128], strides = [1, 1]} : vector<8x512xf32> to vector<8x128xf32>
    %330 = arith.negf %329 : vector<8x128xf32>
    %331 = math.exp %330 : vector<8x128xf32>
    %cst_76 = arith.constant 1.000000e+00 : f32
    %332 = vector.broadcast %cst_76 : f32 to vector<8x128xf32>
    %333 = arith.addf %332, %331 : vector<8x128xf32>
    %334 = arith.divf %332, %333 : vector<8x128xf32>
    %335 = vector.extract_strided_slice %328 {offsets = [0, 128], sizes = [8, 128], strides = [1, 1]} : vector<8x512xf32> to vector<8x128xf32>
    %336 = arith.negf %335 : vector<8x128xf32>
    %337 = math.exp %336 : vector<8x128xf32>
    %cst_77 = arith.constant 1.000000e+00 : f32
    %338 = vector.broadcast %cst_77 : f32 to vector<8x128xf32>
    %339 = arith.addf %338, %337 : vector<8x128xf32>
    %340 = arith.divf %338, %339 : vector<8x128xf32>
    %341 = vector.extract_strided_slice %328 {offsets = [0, 256], sizes = [8, 128], strides = [1, 1]} : vector<8x512xf32> to vector<8x128xf32>
    %342 = math.tanh %341 : vector<8x128xf32>
    %343 = vector.extract_strided_slice %328 {offsets = [0, 384], sizes = [8, 128], strides = [1, 1]} : vector<8x512xf32> to vector<8x128xf32>
    %344 = arith.negf %343 : vector<8x128xf32>
    %345 = math.exp %344 : vector<8x128xf32>
    %cst_78 = arith.constant 1.000000e+00 : f32
    %346 = vector.broadcast %cst_78 : f32 to vector<8x128xf32>
    %347 = arith.addf %346, %345 : vector<8x128xf32>
    %348 = arith.divf %346, %347 : vector<8x128xf32>
    %349 = arith.mulf %340, %289 : vector<8x128xf32>
    %350 = arith.mulf %334, %342 : vector<8x128xf32>
    %351 = arith.addf %349, %350 : vector<8x128xf32>
    %352 = math.tanh %351 : vector<8x128xf32>
    %353 = arith.mulf %348, %352 : vector<8x128xf32>
    %354 = arith.truncf %353 : vector<8x128xf32> to vector<8x128xbf16>
    %cst_79 = arith.constant dense<0.000000e+00> : vector<8x512xf32>
    %355 = tpu.matmul %354, %5, %cst_79 {dimension_numbers = #tpu.dot_dimension_numbers<[1], [0], [0], [1], [0, 0, 1, 1], [], []>} : vector<8x128xbf16>, vector<128x512xbf16>, vector<8x512xf32> -> vector<8x512xf32>
    %356 = arith.truncf %322 : vector<8x128xf32> to vector<8x128xbf16>
    %cst_80 = arith.constant dense<0.000000e+00> : vector<8x512xf32>
    %357 = tpu.matmul %356, %6, %cst_80 {dimension_numbers = #tpu.dot_dimension_numbers<[1], [0], [0], [1], [0, 0, 1, 1], [], []>} : vector<8x128xbf16>, vector<128x512xbf16>, vector<8x512xf32> -> vector<8x512xf32>
    %358 = arith.addf %355, %357 : vector<8x512xf32>
    %359 = arith.addf %358, %9 : vector<8x512xf32>
    %360 = vector.extract_strided_slice %359 {offsets = [0, 0], sizes = [8, 128], strides = [1, 1]} : vector<8x512xf32> to vector<8x128xf32>
    %361 = arith.negf %360 : vector<8x128xf32>
    %362 = math.exp %361 : vector<8x128xf32>
    %cst_81 = arith.constant 1.000000e+00 : f32
    %363 = vector.broadcast %cst_81 : f32 to vector<8x128xf32>
    %364 = arith.addf %363, %362 : vector<8x128xf32>
    %365 = arith.divf %363, %364 : vector<8x128xf32>
    %366 = vector.extract_strided_slice %359 {offsets = [0, 128], sizes = [8, 128], strides = [1, 1]} : vector<8x512xf32> to vector<8x128xf32>
    %367 = arith.negf %366 : vector<8x128xf32>
    %368 = math.exp %367 : vector<8x128xf32>
    %cst_82 = arith.constant 1.000000e+00 : f32
    %369 = vector.broadcast %cst_82 : f32 to vector<8x128xf32>
    %370 = arith.addf %369, %368 : vector<8x128xf32>
    %371 = arith.divf %369, %370 : vector<8x128xf32>
    %372 = vector.extract_strided_slice %359 {offsets = [0, 256], sizes = [8, 128], strides = [1, 1]} : vector<8x512xf32> to vector<8x128xf32>
    %373 = math.tanh %372 : vector<8x128xf32>
    %374 = vector.extract_strided_slice %359 {offsets = [0, 384], sizes = [8, 128], strides = [1, 1]} : vector<8x512xf32> to vector<8x128xf32>
    %375 = arith.negf %374 : vector<8x128xf32>
    %376 = math.exp %375 : vector<8x128xf32>
    %cst_83 = arith.constant 1.000000e+00 : f32
    %377 = vector.broadcast %cst_83 : f32 to vector<8x128xf32>
    %378 = arith.addf %377, %376 : vector<8x128xf32>
    %379 = arith.divf %377, %378 : vector<8x128xf32>
    %380 = arith.mulf %371, %320 : vector<8x128xf32>
    %381 = arith.mulf %365, %373 : vector<8x128xf32>
    %382 = arith.addf %380, %381 : vector<8x128xf32>
    %383 = math.tanh %382 : vector<8x128xf32>
    %384 = arith.mulf %379, %383 : vector<8x128xf32>
    %c5 = arith.constant 5 : index
    %c0_84 = arith.constant 0 : index
    %c0_85 = arith.constant 0 : index
    %385 = vector.load %arg10[%c5, %c0_84, %c0_85] : memref<8x8x128xf32, #tpu.memory_space<vmem>>, vector<1x8x128xf32>
    %386 = vector.shape_cast %385 : vector<1x8x128xf32> to vector<8x128xf32>
    %387 = vector.shape_cast %384 : vector<8x128xf32> to vector<1x8x128xf32>
    tpu.vector_store %arg10[%c5, %c0_84, %c0_85], %387 {strides = array<i32>} : memref<8x8x128xf32, #tpu.memory_space<vmem>>, vector<1x8x128xf32>,
    %388 = arith.truncf %353 : vector<8x128xf32> to vector<8x128xbf16>
    %cst_86 = arith.constant dense<0.000000e+00> : vector<8x512xf32>
    %389 = tpu.matmul %388, %4, %cst_86 {dimension_numbers = #tpu.dot_dimension_numbers<[1], [0], [0], [1], [0, 0, 1, 1], [], []>} : vector<8x128xbf16>, vector<128x512xbf16>, vector<8x512xf32> -> vector<8x512xf32>
    %390 = arith.addf %3, %389 : vector<8x512xf32>
    %391 = vector.extract_strided_slice %390 {offsets = [0, 0], sizes = [8, 128], strides = [1, 1]} : vector<8x512xf32> to vector<8x128xf32>
    %392 = arith.negf %391 : vector<8x128xf32>
    %393 = math.exp %392 : vector<8x128xf32>
    %cst_87 = arith.constant 1.000000e+00 : f32
    %394 = vector.broadcast %cst_87 : f32 to vector<8x128xf32>
    %395 = arith.addf %394, %393 : vector<8x128xf32>
    %396 = arith.divf %394, %395 : vector<8x128xf32>
    %397 = vector.extract_strided_slice %390 {offsets = [0, 128], sizes = [8, 128], strides = [1, 1]} : vector<8x512xf32> to vector<8x128xf32>
    %398 = arith.negf %397 : vector<8x128xf32>
    %399 = math.exp %398 : vector<8x128xf32>
    %cst_88 = arith.constant 1.000000e+00 : f32
    %400 = vector.broadcast %cst_88 : f32 to vector<8x128xf32>
    %401 = arith.addf %400, %399 : vector<8x128xf32>
    %402 = arith.divf %400, %401 : vector<8x128xf32>
    %403 = vector.extract_strided_slice %390 {offsets = [0, 256], sizes = [8, 128], strides = [1, 1]} : vector<8x512xf32> to vector<8x128xf32>
    %404 = math.tanh %403 : vector<8x128xf32>
    %405 = vector.extract_strided_slice %390 {offsets = [0, 384], sizes = [8, 128], strides = [1, 1]} : vector<8x512xf32> to vector<8x128xf32>
    %406 = arith.negf %405 : vector<8x128xf32>
    %407 = math.exp %406 : vector<8x128xf32>
    %cst_89 = arith.constant 1.000000e+00 : f32
    %408 = vector.broadcast %cst_89 : f32 to vector<8x128xf32>
    %409 = arith.addf %408, %407 : vector<8x128xf32>
    %410 = arith.divf %408, %409 : vector<8x128xf32>
    %411 = arith.mulf %402, %351 : vector<8x128xf32>
    %412 = arith.mulf %396, %404 : vector<8x128xf32>
    %413 = arith.addf %411, %412 : vector<8x128xf32>
    %414 = math.tanh %413 : vector<8x128xf32>
    %415 = arith.mulf %410, %414 : vector<8x128xf32>
    %416 = arith.truncf %415 : vector<8x128xf32> to vector<8x128xbf16>
    %cst_90 = arith.constant dense<0.000000e+00> : vector<8x512xf32>
    %417 = tpu.matmul %416, %5, %cst_90 {dimension_numbers = #tpu.dot_dimension_numbers<[1], [0], [0], [1], [0, 0, 1, 1], [], []>} : vector<8x128xbf16>, vector<128x512xbf16>, vector<8x512xf32> -> vector<8x512xf32>
    %418 = arith.truncf %384 : vector<8x128xf32> to vector<8x128xbf16>
    %cst_91 = arith.constant dense<0.000000e+00> : vector<8x512xf32>
    %419 = tpu.matmul %418, %6, %cst_91 {dimension_numbers = #tpu.dot_dimension_numbers<[1], [0], [0], [1], [0, 0, 1, 1], [], []>} : vector<8x128xbf16>, vector<128x512xbf16>, vector<8x512xf32> -> vector<8x512xf32>
    %420 = arith.addf %417, %419 : vector<8x512xf32>
    %421 = arith.addf %420, %9 : vector<8x512xf32>
    %422 = vector.extract_strided_slice %421 {offsets = [0, 0], sizes = [8, 128], strides = [1, 1]} : vector<8x512xf32> to vector<8x128xf32>
    %423 = arith.negf %422 : vector<8x128xf32>
    %424 = math.exp %423 : vector<8x128xf32>
    %cst_92 = arith.constant 1.000000e+00 : f32
    %425 = vector.broadcast %cst_92 : f32 to vector<8x128xf32>
    %426 = arith.addf %425, %424 : vector<8x128xf32>
    %427 = arith.divf %425, %426 : vector<8x128xf32>
    %428 = vector.extract_strided_slice %421 {offsets = [0, 128], sizes = [8, 128], strides = [1, 1]} : vector<8x512xf32> to vector<8x128xf32>
    %429 = arith.negf %428 : vector<8x128xf32>
    %430 = math.exp %429 : vector<8x128xf32>
    %cst_93 = arith.constant 1.000000e+00 : f32
    %431 = vector.broadcast %cst_93 : f32 to vector<8x128xf32>
    %432 = arith.addf %431, %430 : vector<8x128xf32>
    %433 = arith.divf %431, %432 : vector<8x128xf32>
    %434 = vector.extract_strided_slice %421 {offsets = [0, 256], sizes = [8, 128], strides = [1, 1]} : vector<8x512xf32> to vector<8x128xf32>
    %435 = math.tanh %434 : vector<8x128xf32>
    %436 = vector.extract_strided_slice %421 {offsets = [0, 384], sizes = [8, 128], strides = [1, 1]} : vector<8x512xf32> to vector<8x128xf32>
    %437 = arith.negf %436 : vector<8x128xf32>
    %438 = math.exp %437 : vector<8x128xf32>
    %cst_94 = arith.constant 1.000000e+00 : f32
    %439 = vector.broadcast %cst_94 : f32 to vector<8x128xf32>
    %440 = arith.addf %439, %438 : vector<8x128xf32>
    %441 = arith.divf %439, %440 : vector<8x128xf32>
    %442 = arith.mulf %433, %382 : vector<8x128xf32>
    %443 = arith.mulf %427, %435 : vector<8x128xf32>
    %444 = arith.addf %442, %443 : vector<8x128xf32>
    %445 = math.tanh %444 : vector<8x128xf32>
    %446 = arith.mulf %441, %445 : vector<8x128xf32>
    %c6 = arith.constant 6 : index
    %c0_95 = arith.constant 0 : index
    %c0_96 = arith.constant 0 : index
    %447 = vector.load %arg10[%c6, %c0_95, %c0_96] : memref<8x8x128xf32, #tpu.memory_space<vmem>>, vector<1x8x128xf32>
    %448 = vector.shape_cast %447 : vector<1x8x128xf32> to vector<8x128xf32>
    %449 = vector.shape_cast %446 : vector<8x128xf32> to vector<1x8x128xf32>
    tpu.vector_store %arg10[%c6, %c0_95, %c0_96], %449 {strides = array<i32>} : memref<8x8x128xf32, #tpu.memory_space<vmem>>, vector<1x8x128xf32>,
    %450 = arith.truncf %415 : vector<8x128xf32> to vector<8x128xbf16>
    %cst_97 = arith.constant dense<0.000000e+00> : vector<8x512xf32>
    %451 = tpu.matmul %450, %4, %cst_97 {dimension_numbers = #tpu.dot_dimension_numbers<[1], [0], [0], [1], [0, 0, 1, 1], [], []>} : vector<8x128xbf16>, vector<128x512xbf16>, vector<8x512xf32> -> vector<8x512xf32>
    %452 = arith.addf %3, %451 : vector<8x512xf32>
    %453 = vector.extract_strided_slice %452 {offsets = [0, 0], sizes = [8, 128], strides = [1, 1]} : vector<8x512xf32> to vector<8x128xf32>
    %454 = arith.negf %453 : vector<8x128xf32>
    %455 = math.exp %454 : vector<8x128xf32>
    %cst_98 = arith.constant 1.000000e+00 : f32
    %456 = vector.broadcast %cst_98 : f32 to vector<8x128xf32>
    %457 = arith.addf %456, %455 : vector<8x128xf32>
    %458 = arith.divf %456, %457 : vector<8x128xf32>
    %459 = vector.extract_strided_slice %452 {offsets = [0, 128], sizes = [8, 128], strides = [1, 1]} : vector<8x512xf32> to vector<8x128xf32>
    %460 = arith.negf %459 : vector<8x128xf32>
    %461 = math.exp %460 : vector<8x128xf32>
    %cst_99 = arith.constant 1.000000e+00 : f32
    %462 = vector.broadcast %cst_99 : f32 to vector<8x128xf32>
    %463 = arith.addf %462, %461 : vector<8x128xf32>
    %464 = arith.divf %462, %463 : vector<8x128xf32>
    %465 = vector.extract_strided_slice %452 {offsets = [0, 256], sizes = [8, 128], strides = [1, 1]} : vector<8x512xf32> to vector<8x128xf32>
    %466 = math.tanh %465 : vector<8x128xf32>
    %467 = vector.extract_strided_slice %452 {offsets = [0, 384], sizes = [8, 128], strides = [1, 1]} : vector<8x512xf32> to vector<8x128xf32>
    %468 = arith.negf %467 : vector<8x128xf32>
    %469 = math.exp %468 : vector<8x128xf32>
    %cst_100 = arith.constant 1.000000e+00 : f32
    %470 = vector.broadcast %cst_100 : f32 to vector<8x128xf32>
    %471 = arith.addf %470, %469 : vector<8x128xf32>
    %472 = arith.divf %470, %471 : vector<8x128xf32>
    %473 = arith.mulf %464, %413 : vector<8x128xf32>
    %474 = arith.mulf %458, %466 : vector<8x128xf32>
    %475 = arith.addf %473, %474 : vector<8x128xf32>
    %476 = math.tanh %475 : vector<8x128xf32>
    %477 = arith.mulf %472, %476 : vector<8x128xf32>
    %478 = arith.truncf %477 : vector<8x128xf32> to vector<8x128xbf16>
    %cst_101 = arith.constant dense<0.000000e+00> : vector<8x512xf32>
    %479 = tpu.matmul %478, %5, %cst_101 {dimension_numbers = #tpu.dot_dimension_numbers<[1], [0], [0], [1], [0, 0, 1, 1], [], []>} : vector<8x128xbf16>, vector<128x512xbf16>, vector<8x512xf32> -> vector<8x512xf32>
    %480 = arith.truncf %446 : vector<8x128xf32> to vector<8x128xbf16>
    %cst_102 = arith.constant dense<0.000000e+00> : vector<8x512xf32>
    %481 = tpu.matmul %480, %6, %cst_102 {dimension_numbers = #tpu.dot_dimension_numbers<[1], [0], [0], [1], [0, 0, 1, 1], [], []>} : vector<8x128xbf16>, vector<128x512xbf16>, vector<8x512xf32> -> vector<8x512xf32>
    %482 = arith.addf %479, %481 : vector<8x512xf32>
    %483 = arith.addf %482, %9 : vector<8x512xf32>
    %484 = vector.extract_strided_slice %483 {offsets = [0, 0], sizes = [8, 128], strides = [1, 1]} : vector<8x512xf32> to vector<8x128xf32>
    %485 = arith.negf %484 : vector<8x128xf32>
    %486 = math.exp %485 : vector<8x128xf32>
    %cst_103 = arith.constant 1.000000e+00 : f32
    %487 = vector.broadcast %cst_103 : f32 to vector<8x128xf32>
    %488 = arith.addf %487, %486 : vector<8x128xf32>
    %489 = arith.divf %487, %488 : vector<8x128xf32>
    %490 = vector.extract_strided_slice %483 {offsets = [0, 128], sizes = [8, 128], strides = [1, 1]} : vector<8x512xf32> to vector<8x128xf32>
    %491 = arith.negf %490 : vector<8x128xf32>
    %492 = math.exp %491 : vector<8x128xf32>
    %cst_104 = arith.constant 1.000000e+00 : f32
    %493 = vector.broadcast %cst_104 : f32 to vector<8x128xf32>
    %494 = arith.addf %493, %492 : vector<8x128xf32>
    %495 = arith.divf %493, %494 : vector<8x128xf32>
    %496 = vector.extract_strided_slice %483 {offsets = [0, 256], sizes = [8, 128], strides = [1, 1]} : vector<8x512xf32> to vector<8x128xf32>
    %497 = math.tanh %496 : vector<8x128xf32>
    %498 = vector.extract_strided_slice %483 {offsets = [0, 384], sizes = [8, 128], strides = [1, 1]} : vector<8x512xf32> to vector<8x128xf32>
    %499 = arith.negf %498 : vector<8x128xf32>
    %500 = math.exp %499 : vector<8x128xf32>
    %cst_105 = arith.constant 1.000000e+00 : f32
    %501 = vector.broadcast %cst_105 : f32 to vector<8x128xf32>
    %502 = arith.addf %501, %500 : vector<8x128xf32>
    %503 = arith.divf %501, %502 : vector<8x128xf32>
    %504 = arith.mulf %495, %444 : vector<8x128xf32>
    %505 = arith.mulf %489, %497 : vector<8x128xf32>
    %506 = arith.addf %504, %505 : vector<8x128xf32>
    %507 = math.tanh %506 : vector<8x128xf32>
    %508 = arith.mulf %503, %507 : vector<8x128xf32>
    %c7 = arith.constant 7 : index
    %c0_106 = arith.constant 0 : index
    %c0_107 = arith.constant 0 : index
    %509 = vector.load %arg10[%c7, %c0_106, %c0_107] : memref<8x8x128xf32, #tpu.memory_space<vmem>>, vector<1x8x128xf32>
    %510 = vector.shape_cast %509 : vector<1x8x128xf32> to vector<8x128xf32>
    %511 = vector.shape_cast %508 : vector<8x128xf32> to vector<1x8x128xf32>
    tpu.vector_store %arg10[%c7, %c0_106, %c0_107], %511 {strides = array<i32>} : memref<8x8x128xf32, #tpu.memory_space<vmem>>, vector<1x8x128xf32>,
    %c0_108 = arith.constant 0 : index
    %c0_109 = arith.constant 0 : index
    %c0_110 = arith.constant 0 : index
    %512 = vector.load %arg12[%c0_108, %c0_109, %c0_110] : memref<1x8x128xf32, #tpu.memory_space<vmem>>, vector<1x8x128xf32>
    %513 = vector.shape_cast %512 : vector<1x8x128xf32> to vector<8x128xf32>
    %514 = vector.shape_cast %477 : vector<8x128xf32> to vector<1x8x128xf32>
    tpu.vector_store %arg12[%c0_108, %c0_109, %c0_110], %514 {strides = array<i32>} : memref<1x8x128xf32, #tpu.memory_space<vmem>>, vector<1x8x128xf32>,
    %c0_111 = arith.constant 0 : index
    %c0_112 = arith.constant 0 : index
    %c0_113 = arith.constant 0 : index
    %515 = vector.load %arg13[%c0_111, %c0_112, %c0_113] : memref<1x8x128xf32, #tpu.memory_space<vmem>>, vector<1x8x128xf32>
    %516 = vector.shape_cast %515 : vector<1x8x128xf32> to vector<8x128xf32>
    %517 = vector.shape_cast %475 : vector<8x128xf32> to vector<1x8x128xf32>
    tpu.vector_store %arg13[%c0_111, %c0_112, %c0_113], %517 {strides = array<i32>} : memref<1x8x128xf32, #tpu.memory_space<vmem>>, vector<1x8x128xf32>,
    %c0_114 = arith.constant 0 : index
    %c0_115 = arith.constant 0 : index
    %518 = vector.load %arg14[%c0_114, %c0_115] : memref<8x128xf32, #tpu.memory_space<vmem>>, vector<8x128xf32>
    tpu.vector_store %arg14[%c0_114, %c0_115], %508 {strides = array<i32>} : memref<8x128xf32, #tpu.memory_space<vmem>>, vector<8x128xf32>,
    %c0_116 = arith.constant 0 : index
    %c0_117 = arith.constant 0 : index
    %519 = vector.load %arg15[%c0_116, %c0_117] : memref<8x128xf32, #tpu.memory_space<vmem>>, vector<8x128xf32>
    tpu.vector_store %arg15[%c0_116, %c0_117], %506 {strides = array<i32>} : memref<8x128xf32, #tpu.memory_space<vmem>>, vector<8x128xf32>,
    return
  }
  func.func @transform_0(%arg0: i32) -> (i32, i32) {
    %c0_i32 = arith.constant 0 : i32
    %c0_i32_0 = arith.constant 0 : i32
    %c0_i32_1 = arith.constant 0 : i32
    return %c0_i32, %c0_i32_0 : i32, i32
  }
  func.func @transform_1(%arg0: i32) -> (i32, i32) {
    %c0_i32 = arith.constant 0 : i32
    %c0_i32_0 = arith.constant 0 : i32
    %c0_i32_1 = arith.constant 0 : i32
    return %c0_i32, %c0_i32_0 : i32, i32
  }
  func.func @transform_2(%arg0: i32) -> (i32, i32) {
    %c0_i32 = arith.constant 0 : i32
    %c0_i32_0 = arith.constant 0 : i32
    %c0_i32_1 = arith.constant 0 : i32
    return %c0_i32, %c0_i32_0 : i32, i32
  }
  func.func @transform_3(%arg0: i32) -> (i32, i32) {
    %c0_i32 = arith.constant 0 : i32
    %c0_i32_0 = arith.constant 0 : i32
    %c0_i32_1 = arith.constant 0 : i32
    return %c0_i32, %c0_i32_0 : i32, i32
  }
  func.func @transform_4(%arg0: i32) -> (i32, i32) {
    %c0_i32 = arith.constant 0 : i32
    %c0_i32_0 = arith.constant 0 : i32
    %c0_i32_1 = arith.constant 0 : i32
    return %c0_i32, %c0_i32_0 : i32, i32
  }
  func.func @transform_5(%arg0: i32) -> (i32, i32) {
    %c0_i32 = arith.constant 0 : i32
    %c0_i32_0 = arith.constant 0 : i32
    %c0_i32_1 = arith.constant 0 : i32
    return %c0_i32, %c0_i32_0 : i32, i32
  }
  func.func @transform_6(%arg0: i32) -> (i32, i32) {
    %c0_i32 = arith.constant 0 : i32
    %c0_i32_0 = arith.constant 0 : i32
    %c0_i32_1 = arith.constant 0 : i32
    return %c0_i32, %c0_i32_0 : i32, i32
  }
  func.func @transform_7(%arg0: i32) -> (i32, i32) {
    %c0_i32 = arith.constant 0 : i32
    %c0_i32_0 = arith.constant 0 : i32
    %c0_i32_1 = arith.constant 0 : i32
    return %c0_i32, %c0_i32_0 : i32, i32
  }
  func.func @transform_8(%arg0: i32) -> (i32, i32) {
    %c0_i32 = arith.constant 0 : i32
    %c0_i32_0 = arith.constant 0 : i32
    %c0_i32_1 = arith.constant 0 : i32
    return %c0_i32, %c0_i32_0 : i32, i32
  }
  func.func @transform_9(%arg0: i32) -> (i32, i32, i32) {
    %c0_i32 = arith.constant 0 : i32
    %c0_i32_0 = arith.constant 0 : i32
    %c0_i32_1 = arith.constant 0 : i32
    return %arg0, %c0_i32, %c0_i32_0 : i32, i32, i32
  }
}

</mosaic_0001>

<llo_original>
// kernel: tpu_custom_call.1
$region0: #{tpu_custom_call.1}
  #allocation0 [shape = 'u32[]', space=smem, size = 0x4, offset = 0x4, fixed_abs, tag = 'smem constant byte address 0x4 - core index']
  #allocation1 [shape = 'u32[144,128]{1,0:T(1,128)}', space=vmem, size = 0x12000, scoped, tag = 'internal scratch']
  #allocation2 [shape = 'f32[8,512]{1,0:T(8,128)}', space=vmem, size = 0x4000, scoped, tag = 'scratch operand']
  #allocation3 [shape = 'f32[1,8,128]{2,1,0:T(8,128)}', space=vmem, size = 0x1000, scoped, tag = 'scratch operand']
  #allocation4 [shape = 'f32[1,8,128]{2,1,0:T(8,128)}', space=vmem, size = 0x1000, scoped, tag = 'scratch operand']
  #allocation5 [shape = 'f32[8,128]{1,0:T(8,128)}', space=vmem, size = 0x1000, scoped, tag = 'scratch operand']
  #allocation6 [shape = 'f32[8,128]{1,0:T(8,128)}', space=vmem, size = 0x1000, scoped, tag = 'scratch operand']
  %s0 = inlined_call_operand.hbm [shape: f32[8,32], index: 0, kind: input, shape index: {}]
  %s1 = inlined_call_operand.hbm [shape: bf16[32,128], index: 1, kind: input, shape index: {}]
  %s2 = inlined_call_operand.vmem [shape: f32[1,128], index: 2, kind: input, shape index: {}]
  %s3 = inlined_call_operand.hbm [shape: bf16[128,512], index: 3, kind: input, shape index: {}]
  %s4 = inlined_call_operand.hbm [shape: bf16[128,512], index: 4, kind: input, shape index: {}]
  %s5 = inlined_call_operand.vmem [shape: f32[1,512], index: 5, kind: input, shape index: {}]
  %s6 = inlined_call_operand.hbm [shape: bf16[128,512], index: 6, kind: input, shape index: {}]
  %s7 = inlined_call_operand.hbm [shape: bf16[128,512], index: 7, kind: input, shape index: {}]
  %s8 = inlined_call_operand.vmem [shape: f32[1,512], index: 8, kind: input, shape index: {}]
  %s9 = inlined_call_operand.hbm [shape: f32[8,8,128], index: 9, kind: output, shape index: {}]
  %s10 = sld [smem:[#allocation0]]
  $region74: #{tpu_custom_call.1} parent=0
    _
  %s12 = ssub.s32 1, %s10
  %s13 = scalar_select 0, %s12, %s10
  $region1: #{tpu_custom_call.1} parent=0
    #allocation7 [shape = 'u8[4096]{0}', space=vmem, size = 0x1000, scoped, tag = 'input window, operand 0, single buffered']
    #allocation8 [shape = 's32[1]{0}', space=sflag, size = 0x4, scoped, tag = 'scoped memory for tpu_custom_call.1']
    #allocation9 [shape = 's32[1]{0}', space=sflag, size = 0x4, scoped, tag = 'scoped memory for tpu_custom_call.1']
    #allocation10 [shape = 'u8[8192]{0}', space=vmem, size = 0x2000, scoped, tag = 'input window, operand 1, single buffered']
    #allocation11 [shape = 's32[1]{0}', space=sflag, size = 0x4, scoped, tag = 'scoped memory for tpu_custom_call.1']
    #allocation12 [shape = 'u8[131072]{0}', space=vmem, size = 0x20000, scoped, tag = 'input window, operand 3, single buffered']
    #allocation13 [shape = 'u8[131072]{0}', space=vmem, size = 0x20000, scoped, tag = 'input window, operand 4, single buffered']
    #allocation14 [shape = 's32[1]{0}', space=sflag, size = 0x4, scoped, tag = 'scoped memory for tpu_custom_call.1']
    #allocation15 [shape = 'u8[131072]{0}', space=vmem, size = 0x20000, scoped, tag = 'input window, operand 6, single buffered']
    #allocation16 [shape = 'u8[131072]{0}', space=vmem, size = 0x20000, scoped, tag = 'input window, operand 7, single buffered']
    #allocation17 [shape = 's32[1]{0}', space=sflag, size = 0x4, scoped, tag = 'scoped memory for tpu_custom_call.1']
    #allocation18 [shape = 'u8[32768]{0}', space=vmem, size = 0x8000, scoped, tag = 'output window, operand 0, single buffered']
    %14 = vsyncpa [#allocation8], 0
    %15 = vsyncpa [#allocation11], 0
    %16 = vsyncpa [#allocation14], 0
    %17 = vsyncpa [#allocation17], 0
    %18 = vsyncpa [#allocation9], 0
    // Predicated region
    $region2: #{tpu_custom_call.1} parent=1 // pred_check
      _
    $region3: #{tpu_custom_call.1} parent=1 // pred_check_branch
      %20 = sbr.rel (0) target = $region5
    $region4: #{tpu_custom_call.1} parent=1 // pred_region
      %s22 = ssub.s32 128, 128
      %23 = vsyncadd [#allocation8], %s22
      %s25 = sshll.u32 [#allocation7], 4
      %s26 = int_to_ptr.vmem [resolvable:$true] %s25
      %28 = dma.hbm_to_vmem [thread:$0]  %s0, 128, %s26, [#allocation8]
    $region5: #{tpu_custom_call.1} parent=1 // pred_fallthru
      _
    // Predicated region
    $region6: #{tpu_custom_call.1} parent=1 // pred_check
      _
    $region7: #{tpu_custom_call.1} parent=1 // pred_check_branch
      %30 = sbr.rel (0) target = $region9
    $region8: #{tpu_custom_call.1} parent=1 // pred_region
      %s32 = ssub.s32 256, 256
      %33 = vsyncadd [#allocation11], %s32
      %s34 = sshll.u32 [#allocation10], 4
      %s35 = int_to_ptr.vmem [resolvable:$true] %s34
      %40 = dma.hbm_to_vmem [thread:$0]  %s1, 256, %s35, [#allocation11], 64, 64, 4
    $region9: #{tpu_custom_call.1} parent=1 // pred_fallthru
      _
    // Predicated region
    $region10: #{tpu_custom_call.1} parent=1 // pred_check
      _
    $region11: #{tpu_custom_call.1} parent=1 // pred_check_branch
      %42 = sbr.rel (0) target = $region13
    $region12: #{tpu_custom_call.1} parent=1 // pred_region
      _
    $region13: #{tpu_custom_call.1} parent=1 // pred_fallthru
      _
    // Predicated region
    $region14: #{tpu_custom_call.1} parent=1 // pred_check
      _
    $region15: #{tpu_custom_call.1} parent=1 // pred_check_branch
      %44 = sbr.rel (0) target = $region17
    $region16: #{tpu_custom_call.1} parent=1 // pred_region
      %s46 = ssub.s32 4096, 4096
      %47 = vsyncadd [#allocation11], %s46
      %s48 = sshll.u32 [#allocation12], 4
      %s49 = int_to_ptr.vmem [resolvable:$true] %s48
      %54 = dma.hbm_to_vmem [thread:$0]  %s3, 4096, %s49, [#allocation11], 256, 256, 16
    $region17: #{tpu_custom_call.1} parent=1 // pred_fallthru
      _
    // Predicated region
    $region18: #{tpu_custom_call.1} parent=1 // pred_check
      _
    $region19: #{tpu_custom_call.1} parent=1 // pred_check_branch
      %56 = sbr.rel (0) target = $region21
    $region20: #{tpu_custom_call.1} parent=1 // pred_region
      %s58 = ssub.s32 4096, 4096
      %59 = vsyncadd [#allocation14], %s58
      %s60 = sshll.u32 [#allocation13], 4
      %s61 = int_to_ptr.vmem [resolvable:$true] %s60
      %66 = dma.hbm_to_vmem [thread:$0]  %s4, 4096, %s61, [#allocation14], 256, 256, 16
    $region21: #{tpu_custom_call.1} parent=1 // pred_fallthru
      _
    // Predicated region
    $region22: #{tpu_custom_call.1} parent=1 // pred_check
      _
    $region23: #{tpu_custom_call.1} parent=1 // pred_check_branch
      %68 = sbr.rel (0) target = $region25
    $region24: #{tpu_custom_call.1} parent=1 // pred_region
      _
    $region25: #{tpu_custom_call.1} parent=1 // pred_fallthru
      _
    // Predicated region
    $region26: #{tpu_custom_call.1} parent=1 // pred_check
      _
    $region27: #{tpu_custom_call.1} parent=1 // pred_check_branch
      %70 = sbr.rel (0) target = $region29
    $region28: #{tpu_custom_call.1} parent=1 // pred_region
      %s72 = ssub.s32 4096, 4096
      %73 = vsyncadd [#allocation14], %s72
      %s74 = sshll.u32 [#allocation15], 4
      %s75 = int_to_ptr.vmem [resolvable:$true] %s74
      %80 = dma.hbm_to_vmem [thread:$0]  %s6, 4096, %s75, [#allocation14], 256, 256, 16
    $region29: #{tpu_custom_call.1} parent=1 // pred_fallthru
      _
    // Predicated region
    $region30: #{tpu_custom_call.1} parent=1 // pred_check
      _
    $region31: #{tpu_custom_call.1} parent=1 // pred_check_branch
      %82 = sbr.rel (0) target = $region33
    $region32: #{tpu_custom_call.1} parent=1 // pred_region
      %s84 = ssub.s32 4096, 4096
      %85 = vsyncadd [#allocation17], %s84
      %s86 = sshll.u32 [#allocation16], 4
      %s87 = int_to_ptr.vmem [resolvable:$true] %s86
      %92 = dma.hbm_to_vmem [thread:$0]  %s7, 4096, %s87, [#allocation17], 256, 256, 16
    $region33: #{tpu_custom_call.1} parent=1 // pred_fallthru
      _
    // Predicated region
    $region34: #{tpu_custom_call.1} parent=1 // pred_check
      _
    $region35: #{tpu_custom_call.1} parent=1 // pred_check_branch
      %94 = sbr.rel (0) target = $region37
    $region36: #{tpu_custom_call.1} parent=1 // pred_region
      _
    $region37: #{tpu_custom_call.1} parent=1 // pred_fallthru
      _
    // Predicated region
    $region38: #{tpu_custom_call.1} parent=1 // pred_check
      _
    $region39: #{tpu_custom_call.1} parent=1 // pred_check_branch
      %96 = sbr.rel (0) target = $region41
    $region40: #{tpu_custom_call.1} parent=1 // pred_region
      %97 = dma.done [#allocation8], 128
    $region41: #{tpu_custom_call.1} parent=1 // pred_fallthru
      _
    // Predicated region
    $region42: #{tpu_custom_call.1} parent=1 // pred_check
      _
    $region43: #{tpu_custom_call.1} parent=1 // pred_check_branch
      %99 = sbr.rel (0) target = $region45
    $region44: #{tpu_custom_call.1} parent=1 // pred_region
      %100 = dma.done [#allocation11], 256
    $region45: #{tpu_custom_call.1} parent=1 // pred_fallthru
      _
    // Predicated region
    $region46: #{tpu_custom_call.1} parent=1 // pred_check
      _
    $region47: #{tpu_custom_call.1} parent=1 // pred_check_branch
      %102 = sbr.rel (0) target = $region49
    $region48: #{tpu_custom_call.1} parent=1 // pred_region
      %103 = dma.done [#allocation11], 4096
    $region49: #{tpu_custom_call.1} parent=1 // pred_fallthru
      _
    // Predicated region
    $region50: #{tpu_custom_call.1} parent=1 // pred_check
      _
    $region51: #{tpu_custom_call.1} parent=1 // pred_check_branch
      %105 = sbr.rel (0) target = $region53
    $region52: #{tpu_custom_call.1} parent=1 // pred_region
      %106 = dma.done [#allocation14], 4096
    $region53: #{tpu_custom_call.1} parent=1 // pred_fallthru
      _
    // Predicated region
    $region54: #{tpu_custom_call.1} parent=1 // pred_check
      _
    $region55: #{tpu_custom_call.1} parent=1 // pred_check_branch
      %108 = sbr.rel (0) target = $region57
    $region56: #{tpu_custom_call.1} parent=1 // pred_region
      %109 = dma.done [#allocation14], 4096
    $region57: #{tpu_custom_call.1} parent=1 // pred_fallthru
      _
    // Predicated region
    $region58: #{tpu_custom_call.1} parent=1 // pred_check
      _
    $region59: #{tpu_custom_call.1} parent=1 // pred_check_branch
      %111 = sbr.rel (0) target = $region61
    $region60: #{tpu_custom_call.1} parent=1 // pred_region
      %112 = dma.done [#allocation17], 4096
    $region61: #{tpu_custom_call.1} parent=1 // pred_fallthru
      _
    %p114 = scmp.eq.s32.totalorder 0, 0
    // Predicated region
    $region62: #{tpu_custom_call.1} parent=1 // pred_check
      %p115 = pneg %p114
    $region63: #{tpu_custom_call.1} parent=1 // pred_check_branch
      %117 = sbr.rel (%p115) target = $region65
    $region64: #{tpu_custom_call.1} parent=1 // pred_region
      %v118 = vld [vmem:[#allocation7] sm:$0xff]
      %v119 = vpack.c.bf16 %v118, %v118
      %v120 = vld [vmem:[#allocation10] sm:$0xf]
      %v121 = vld [vmem:[#allocation10 + $0x4] sm:$0xf]
      %v122 = vld [vmem:[#allocation10 + $0x8] sm:$0xf]
      %v123 = vld [vmem:[#allocation10 + $0xc] sm:$0xf]
      %v124 = vld [vmem:[%s2] sm:$0x1]
      %v126 = vlaneseq
      %v127 = vshrl.u32 %v126, 7
      %v128 = vsub.s32 0, %v127
      %v129 = vrot.slane %v124, %v128
      %v135 = vunpack.c.l.b16 %v120
      %v136 = vunpack.c.l.b16 %v121
      %v137 = vunpack.c.l.b16 %v122
      %v138 = vunpack.c.l.b16 %v123
      %v139 = vpack.c.b16 %v136, %v135
      %v140 = vpack.c.b16 %v138, %v137
      %vm143 = vcmask 261120
      %v145 = vsel %vm143, %v119, 0
      %147 = vmatprep.subr.bf16.mxu0 0
      %148 = vmatpush1.bf16.msra.mxu0 %v139
      %149 = vmatprep.subr.bf16.mxu0 0
      %150 = vmatpush1.bf16.msra.mxu0 %v140
      %151 = vmatprep.subr.bf16.mxu0 0
      %152 = vmatpush1.bf16.msra.mxu0 0
      %153 = vmatprep.subr.bf16.mxu0 0
      %154 = vmatpush1.bf16.msra.mxu0 0
      %155 = vmatprep.subr.bf16.mxu0 0
      %156 = vmatpush1.bf16.msra.mxu0 0
      %157 = vmatprep.subr.bf16.mxu0 0
      %158 = vmatpush1.bf16.msra.mxu0 0
      %159 = vmatprep.subr.bf16.mxu0 0
      %160 = vmatpush1.bf16.msra.mxu0 0
      %161 = vmatprep.subr.bf16.mxu0 0
      %162 = vmatpush1.bf16.msra.mxu0 0
      %163 = vmatprep.subr.bf16.mxu0 0
      %164 = vmatpush1.bf16.msra.mxu0 0
      %165 = vmatprep.subr.bf16.mxu0 0
      %166 = vmatpush1.bf16.msra.mxu0 0
      %167 = vmatprep.subr.bf16.mxu0 0
      %168 = vmatpush1.bf16.msra.mxu0 0
      %169 = vmatprep.subr.bf16.mxu0 0
      %170 = vmatpush1.bf16.msra.mxu0 0
      %171 = vmatprep.subr.bf16.mxu0 0
      %172 = vmatpush1.bf16.msra.mxu0 0
      %173 = vmatprep.subr.bf16.mxu0 0
      %174 = vmatpush1.bf16.msra.mxu0 0
      %175 = vmatprep.subr.bf16.mxu0 0
      %176 = vmatpush1.bf16.msra.mxu0 0
      %177 = vmatprep.subr.bf16.mxu0 0
      %178 = vmatpush1.bf16.msra.mxu0 0
      %179 = vmatprep.mubr.bf16.mxu0 0
      %180 = vmatmul.mubr.bf16.gmra.mrb[0].mxu0 %v145
      %v181 = vpop.f32.mrb[0].mxu0
      %v182 = vadd.f32 %v129, %v181
      %v183 = vpop.f32.mrb[0].mxu0
      %v184 = vpop.f32.mrb[0].mxu0
      %v185 = vpop.f32.mrb[0].mxu0
      %186 = vdwg.mxu0
      %vm187 = vcmp.ge.f32.partialorder %v182, 0.0
      %v188 = vmul.f32 %v182, 0.2
      %v189 = vsel %vm187, %v182, %v188
      %v190 = vpack.c.bf16 %v189, %v189
      %v191 = vld [vmem:[#allocation12] sm:$0xff]
      %v192 = vld [vmem:[#allocation12 + $0x8] sm:$0xff]
      %v193 = vld [vmem:[#allocation12 + $0x10] sm:$0xff]
      %v194 = vld [vmem:[#allocation12 + $0x18] sm:$0xff]
      %v195 = vld [vmem:[#allocation12 + $0x20] sm:$0xff]
      %v196 = vld [vmem:[#allocation12 + $0x28] sm:$0xff]
      %v197 = vld [vmem:[#allocation12 + $0x30] sm:$0xff]
      %v198 = vld [vmem:[#allocation12 + $0x38] sm:$0xff]
      %v199 = vld [vmem:[#allocation12 + $0x40] sm:$0xff]
      %v200 = vld [vmem:[#allocation12 + $0x48] sm:$0xff]
      %v201 = vld [vmem:[#allocation12 + $0x50] sm:$0xff]
      %v202 = vld [vmem:[#allocation12 + $0x58] sm:$0xff]
      %v203 = vld [vmem:[#allocation12 + $0x60] sm:$0xff]
      %v204 = vld [vmem:[#allocation12 + $0x68] sm:$0xff]
      %v205 = vld [vmem:[#allocation12 + $0x70] sm:$0xff]
      %v206 = vld [vmem:[#allocation12 + $0x78] sm:$0xff]
      %v207 = vld [vmem:[#allocation12 + $0x80] sm:$0xff]
      %v208 = vld [vmem:[#allocation12 + $0x88] sm:$0xff]
      %v209 = vld [vmem:[#allocation12 + $0x90] sm:$0xff]
      %v210 = vld [vmem:[#allocation12 + $0x98] sm:$0xff]
      %v211 = vld [vmem:[#allocation12 + $0xa0] sm:$0xff]
      %v212 = vld [vmem:[#allocation12 + $0xa8] sm:$0xff]
      %v213 = vld [vmem:[#allocation12 + $0xb0] sm:$0xff]
      %v214 = vld [vmem:[#allocation12 + $0xb8] sm:$0xff]
      %v215 = vld [vmem:[#allocation12 + $0xc0] sm:$0xff]
      %v216 = vld [vmem:[#allocation12 + $0xc8] sm:$0xff]
      %v217 = vld [vmem:[#allocation12 + $0xd0] sm:$0xff]
      %v218 = vld [vmem:[#allocation12 + $0xd8] sm:$0xff]
      %v219 = vld [vmem:[#allocation12 + $0xe0] sm:$0xff]
      %v220 = vld [vmem:[#allocation12 + $0xe8] sm:$0xff]
      %v221 = vld [vmem:[#allocation12 + $0xf0] sm:$0xff]
      %v222 = vld [vmem:[#allocation12 + $0xf8] sm:$0xff]
      %v223 = vld [vmem:[%s5] sm:$0xf]
      %v225 = vlaneseq
      %v226 = vshrl.u32 %v225, 7
      %v227 = vsub.s32 0, %v226
      %v228 = vrot.slane %v223, %v227
      %v229 = vlaneseq
      %v230 = vshrl.u32 %v229, 7
      %v231 = vsub.s32 1, %v230
      %v232 = vrot.slane %v223, %v231
      %v233 = vlaneseq
      %v234 = vshrl.u32 %v233, 7
      %v235 = vsub.s32 2, %v234
      %v236 = vrot.slane %v223, %v235
      %v237 = vlaneseq
      %v238 = vshrl.u32 %v237, 7
      %v239 = vsub.s32 3, %v238
      %v240 = vrot.slane %v223, %v239
      %v277 = vunpack.c.l.b16 %v191
      %v278 = vunpack.c.h.b16 %v191
      %v279 = vunpack.c.l.b16 %v192
      %v280 = vunpack.c.h.b16 %v192
      %v281 = vunpack.c.l.b16 %v193
      %v282 = vunpack.c.h.b16 %v193
      %v283 = vunpack.c.l.b16 %v194
      %v284 = vunpack.c.h.b16 %v194
      %v285 = vunpack.c.l.b16 %v195
      %v286 = vunpack.c.h.b16 %v195
      %v287 = vunpack.c.l.b16 %v196
      %v288 = vunpack.c.h.b16 %v196
      %v289 = vunpack.c.l.b16 %v197
      %v290 = vunpack.c.h.b16 %v197
      %v291 = vunpack.c.l.b16 %v198
      %v292 = vunpack.c.h.b16 %v198
      %v293 = vunpack.c.l.b16 %v199
      %v294 = vunpack.c.h.b16 %v199
      %v295 = vunpack.c.l.b16 %v200
      %v296 = vunpack.c.h.b16 %v200
      %v297 = vunpack.c.l.b16 %v201
      %v298 = vunpack.c.h.b16 %v201
      %v299 = vunpack.c.l.b16 %v202
      %v300 = vunpack.c.h.b16 %v202
      %v301 = vunpack.c.l.b16 %v203
      %v302 = vunpack.c.h.b16 %v203
      %v303 = vunpack.c.l.b16 %v204
      %v304 = vunpack.c.h.b16 %v204
      %v305 = vunpack.c.l.b16 %v205
      %v306 = vunpack.c.h.b16 %v205
      %v307 = vunpack.c.l.b16 %v206
      %v308 = vunpack.c.h.b16 %v206
      %v309 = vunpack.c.l.b16 %v207
      %v310 = vunpack.c.h.b16 %v207
      %v311 = vunpack.c.l.b16 %v208
      %v312 = vunpack.c.h.b16 %v208
      %v313 = vunpack.c.l.b16 %v209
      %v314 = vunpack.c.h.b16 %v209
      %v315 = vunpack.c.l.b16 %v210
      %v316 = vunpack.c.h.b16 %v210
      %v317 = vunpack.c.l.b16 %v211
      %v318 = vunpack.c.h.b16 %v211
      %v319 = vunpack.c.l.b16 %v212
      %v320 = vunpack.c.h.b16 %v212
      %v321 = vunpack.c.l.b16 %v213
      %v322 = vunpack.c.h.b16 %v213
      %v323 = vunpack.c.l.b16 %v214
      %v324 = vunpack.c.h.b16 %v214
      %v325 = vunpack.c.l.b16 %v215
      %v326 = vunpack.c.h.b16 %v215
      %v327 = vunpack.c.l.b16 %v216
      %v328 = vunpack.c.h.b16 %v216
      %v329 = vunpack.c.l.b16 %v217
      %v330 = vunpack.c.h.b16 %v217
      %v331 = vunpack.c.l.b16 %v218
      %v332 = vunpack.c.h.b16 %v218
      %v333 = vunpack.c.l.b16 %v219
      %v334 = vunpack.c.h.b16 %v219
      %v335 = vunpack.c.l.b16 %v220
      %v336 = vunpack.c.h.b16 %v220
      %v337 = vunpack.c.l.b16 %v221
      %v338 = vunpack.c.h.b16 %v221
      %v339 = vunpack.c.l.b16 %v222
      %v340 = vunpack.c.h.b16 %v222
      %v341 = vpack.c.b16 %v281, %v277
      %v342 = vpack.c.b16 %v282, %v278
      %v343 = vpack.c.b16 %v283, %v279
      %v344 = vpack.c.b16 %v284, %v280
      %v345 = vpack.c.b16 %v289, %v285
      %v346 = vpack.c.b16 %v290, %v286
      %v347 = vpack.c.b16 %v291, %v287
      %v348 = vpack.c.b16 %v292, %v288
      %v349 = vpack.c.b16 %v297, %v293
      %v350 = vpack.c.b16 %v298, %v294
      %v351 = vpack.c.b16 %v299, %v295
      %v352 = vpack.c.b16 %v300, %v296
      %v353 = vpack.c.b16 %v305, %v301
      %v354 = vpack.c.b16 %v306, %v302
      %v355 = vpack.c.b16 %v307, %v303
      %v356 = vpack.c.b16 %v308, %v304
      %v357 = vpack.c.b16 %v313, %v309
      %v358 = vpack.c.b16 %v314, %v310
      %v359 = vpack.c.b16 %v315, %v311
      %v360 = vpack.c.b16 %v316, %v312
      %v361 = vpack.c.b16 %v321, %v317
      %v362 = vpack.c.b16 %v322, %v318
      %v363 = vpack.c.b16 %v323, %v319
      %v364 = vpack.c.b16 %v324, %v320
      %v365 = vpack.c.b16 %v329, %v325
      %v366 = vpack.c.b16 %v330, %v326
      %v367 = vpack.c.b16 %v331, %v327
      %v368 = vpack.c.b16 %v332, %v328
      %v369 = vpack.c.b16 %v337, %v333
      %v370 = vpack.c.b16 %v338, %v334
      %v371 = vpack.c.b16 %v339, %v335
      %v372 = vpack.c.b16 %v340, %v336
      %405 = vmatprep.subr.bf16.mxu0 %v342
      %406 = vmatpush1.bf16.msra.mxu0 %v341
      %407 = vmatprep.subr.bf16.mxu0 %v346
      %408 = vmatpush1.bf16.msra.mxu0 %v345
      %409 = vmatprep.subr.bf16.mxu0 %v350
      %410 = vmatpush1.bf16.msra.mxu0 %v349
      %411 = vmatprep.subr.bf16.mxu0 %v354
      %412 = vmatpush1.bf16.msra.mxu0 %v353
      %413 = vmatprep.subr.bf16.mxu0 %v358
      %414 = vmatpush1.bf16.msra.mxu0 %v357
      %415 = vmatprep.subr.bf16.mxu0 %v362
      %416 = vmatpush1.bf16.msra.mxu0 %v361
      %417 = vmatprep.subr.bf16.mxu0 %v366
      %418 = vmatpush1.bf16.msra.mxu0 %v365
      %419 = vmatprep.subr.bf16.mxu0 %v370
      %420 = vmatpush1.bf16.msra.mxu0 %v369
      %421 = vmatprep.subr.bf16.mxu0 0
      %422 = vmatpush1.bf16.msra.mxu0 0
      %423 = vmatprep.subr.bf16.mxu0 0
      %424 = vmatpush1.bf16.msra.mxu0 0
      %425 = vmatprep.subr.bf16.mxu0 0
      %426 = vmatpush1.bf16.msra.mxu0 0
      %427 = vmatprep.subr.bf16.mxu0 0
      %428 = vmatpush1.bf16.msra.mxu0 0
      %429 = vmatprep.subr.bf16.mxu0 0
      %430 = vmatpush1.bf16.msra.mxu0 0
      %431 = vmatprep.subr.bf16.mxu0 0
      %432 = vmatpush1.bf16.msra.mxu0 0
      %433 = vmatprep.subr.bf16.mxu0 0
      %434 = vmatpush1.bf16.msra.mxu0 0
      %435 = vmatprep.subr.bf16.mxu0 0
      %436 = vmatpush1.bf16.msra.mxu0 0
      %437 = vmatprep.mubr.bf16.mxu0 0
      %438 = vmatmul.mubr.bf16.gmra.mrb[0].mxu0 %v190
      %v439 = vpop.f32.mrb[0].mxu0
      %v440 = vadd.f32 %v228, %v439
      %v441 = vpop.f32.mrb[0].mxu0
      %v442 = vadd.f32 %v232, %v441
      %v443 = vpop.f32.mrb[0].mxu0
      %v444 = vpop.f32.mrb[0].mxu0
      %445 = vdwg.mxu0
      %446 = vmatprep.subr.bf16.mxu0 %v344
      %447 = vmatpush1.bf16.msra.mxu0 %v343
      %448 = vmatprep.subr.bf16.mxu0 %v348
      %449 = vmatpush1.bf16.msra.mxu0 %v347
      %450 = vmatprep.subr.bf16.mxu0 %v352
      %451 = vmatpush1.bf16.msra.mxu0 %v351
      %452 = vmatprep.subr.bf16.mxu0 %v356
      %453 = vmatpush1.bf16.msra.mxu0 %v355
      %454 = vmatprep.subr.bf16.mxu0 %v360
      %455 = vmatpush1.bf16.msra.mxu0 %v359
      %456 = vmatprep.subr.bf16.mxu0 %v364
      %457 = vmatpush1.bf16.msra.mxu0 %v363
      %458 = vmatprep.subr.bf16.mxu0 %v368
      %459 = vmatpush1.bf16.msra.mxu0 %v367
      %460 = vmatprep.subr.bf16.mxu0 %v372
      %461 = vmatpush1.bf16.msra.mxu0 %v371
      %462 = vmatprep.subr.bf16.mxu0 0
      %463 = vmatpush1.bf16.msra.mxu0 0
      %464 = vmatprep.subr.bf16.mxu0 0
      %465 = vmatpush1.bf16.msra.mxu0 0
      %466 = vmatprep.subr.bf16.mxu0 0
      %467 = vmatpush1.bf16.msra.mxu0 0
      %468 = vmatprep.subr.bf16.mxu0 0
      %469 = vmatpush1.bf16.msra.mxu0 0
      %470 = vmatprep.subr.bf16.mxu0 0
      %471 = vmatpush1.bf16.msra.mxu0 0
      %472 = vmatprep.subr.bf16.mxu0 0
      %473 = vmatpush1.bf16.msra.mxu0 0
      %474 = vmatprep.subr.bf16.mxu0 0
      %475 = vmatpush1.bf16.msra.mxu0 0
      %476 = vmatprep.subr.bf16.mxu0 0
      %477 = vmatpush1.bf16.msra.mxu0 0
      %478 = vmatprep.mubr.bf16.mxu0 0
      %479 = vmatmul.mubr.bf16.gmra.mrb[0].mxu0 %v190
      %v480 = vpop.f32.mrb[0].mxu0
      %v481 = vadd.f32 %v236, %v480
      %v482 = vpop.f32.mrb[0].mxu0
      %v483 = vadd.f32 %v240, %v482
      %v484 = vpop.f32.mrb[0].mxu0
      %v485 = vpop.f32.mrb[0].mxu0
      %486 = vdwg.mxu0
      %487 = vst [vmem:[#allocation2] sm:$0xff] %v440
      %488 = vst [vmem:[#allocation2 + $0x8] sm:$0xff] %v442
      %489 = vst [vmem:[#allocation2 + $0x10] sm:$0xff] %v481
      %490 = vst [vmem:[#allocation2 + $0x18] sm:$0xff] %v483
      %491 = vst [vmem:[#allocation3] sm:$0xff] 0.0
      %492 = vst [vmem:[#allocation4] sm:$0xff] 0.0
      %493 = vst [vmem:[#allocation5] sm:$0xff] 0.0
      %494 = vst [vmem:[#allocation6] sm:$0xff] 0.0
    $region65: #{tpu_custom_call.1} parent=1 // pred_fallthru
      _
    %v495 = vld [vmem:[#allocation2] sm:$0xff]
    %v496 = vld [vmem:[#allocation2 + $0x8] sm:$0xff]
    %v497 = vld [vmem:[#allocation2 + $0x10] sm:$0xff]
    %v498 = vld [vmem:[#allocation2 + $0x18] sm:$0xff]
    %v499 = vld [vmem:[#allocation13] sm:$0xff]
    %v500 = vld [vmem:[#allocation13 + $0x8] sm:$0xff]
    %v501 = vld [vmem:[#allocation13 + $0x10] sm:$0xff]
    %v502 = vld [vmem:[#allocation13 + $0x18] sm:$0xff]
    %v503 = vld [vmem:[#allocation13 + $0x20] sm:$0xff]
    %v504 = vld [vmem:[#allocation13 + $0x28] sm:$0xff]
    %v505 = vld [vmem:[#allocation13 + $0x30] sm:$0xff]
    %v506 = vld [vmem:[#allocation13 + $0x38] sm:$0xff]
    %v507 = vld [vmem:[#allocation13 + $0x40] sm:$0xff]
    %v508 = vld [vmem:[#allocation13 + $0x48] sm:$0xff]
    %v509 = vld [vmem:[#allocation13 + $0x50] sm:$0xff]
    %v510 = vld [vmem:[#allocation13 + $0x58] sm:$0xff]
    %v511 = vld [vmem:[#allocation13 + $0x60] sm:$0xff]
    %v512 = vld [vmem:[#allocation13 + $0x68] sm:$0xff]
    %v513 = vld [vmem:[#allocation13 + $0x70] sm:$0xff]
    %v514 = vld [vmem:[#allocation13 + $0x78] sm:$0xff]
    %v515 = vld [vmem:[#allocation13 + $0x80] sm:$0xff]
    %v516 = vld [vmem:[#allocation13 + $0x88] sm:$0xff]
    %v517 = vld [vmem:[#allocation13 + $0x90] sm:$0xff]
    %v518 = vld [vmem:[#allocation13 + $0x98] sm:$0xff]
    %v519 = vld [vmem:[#allocation13 + $0xa0] sm:$0xff]
    %v520 = vld [vmem:[#allocation13 + $0xa8] sm:$0xff]
    %v521 = vld [vmem:[#allocation13 + $0xb0] sm:$0xff]
    %v522 = vld [vmem:[#allocation13 + $0xb8] sm:$0xff]
    %v523 = vld [vmem:[#allocation13 + $0xc0] sm:$0xff]
    %v524 = vld [vmem:[#allocation13 + $0xc8] sm:$0xff]
    %v525 = vld [vmem:[#allocation13 + $0xd0] sm:$0xff]
    %v526 = vld [vmem:[#allocation13 + $0xd8] sm:$0xff]
    %v527 = vld [vmem:[#allocation13 + $0xe0] sm:$0xff]
    %v528 = vld [vmem:[#allocation13 + $0xe8] sm:$0xff]
    %v529 = vld [vmem:[#allocation13 + $0xf0] sm:$0xff]
    %v530 = vld [vmem:[#allocation13 + $0xf8] sm:$0xff]
    %v531 = vld [vmem:[#allocation15] sm:$0xff]
    %v532 = vld [vmem:[#allocation15 + $0x8] sm:$0xff]
    %v533 = vld [vmem:[#allocation15 + $0x10] sm:$0xff]
    %v534 = vld [vmem:[#allocation15 + $0x18] sm:$0xff]
    %v535 = vld [vmem:[#allocation15 + $0x20] sm:$0xff]
    %v536 = vld [vmem:[#allocation15 + $0x28] sm:$0xff]
    %v537 = vld [vmem:[#allocation15 + $0x30] sm:$0xff]
    %v538 = vld [vmem:[#allocation15 + $0x38] sm:$0xff]
    %v539 = vld [vmem:[#allocation15 + $0x40] sm:$0xff]
    %v540 = vld [vmem:[#allocation15 + $0x48] sm:$0xff]
    %v541 = vld [vmem:[#allocation15 + $0x50] sm:$0xff]
    %v542 = vld [vmem:[#allocation15 + $0x58] sm:$0xff]
    %v543 = vld [vmem:[#allocation15 + $0x60] sm:$0xff]
    %v544 = vld [vmem:[#allocation15 + $0x68] sm:$0xff]
    %v545 = vld [vmem:[#allocation15 + $0x70] sm:$0xff]
    %v546 = vld [vmem:[#allocation15 + $0x78] sm:$0xff]
    %v547 = vld [vmem:[#allocation15 + $0x80] sm:$0xff]
    %v548 = vld [vmem:[#allocation15 + $0x88] sm:$0xff]
    %v549 = vld [vmem:[#allocation15 + $0x90] sm:$0xff]
    %v550 = vld [vmem:[#allocation15 + $0x98] sm:$0xff]
    %v551 = vld [vmem:[#allocation15 + $0xa0] sm:$0xff]
    %v552 = vld [vmem:[#allocation15 + $0xa8] sm:$0xff]
    %v553 = vld [vmem:[#allocation15 + $0xb0] sm:$0xff]
    %v554 = vld [vmem:[#allocation15 + $0xb8] sm:$0xff]
    %v555 = vld [vmem:[#allocation15 + $0xc0] sm:$0xff]
    %v556 = vld [vmem:[#allocation15 + $0xc8] sm:$0xff]
    %v557 = vld [vmem:[#allocation15 + $0xd0] sm:$0xff]
    %v558 = vld [vmem:[#allocation15 + $0xd8] sm:$0xff]
    %v559 = vld [vmem:[#allocation15 + $0xe0] sm:$0xff]
    %v560 = vld [vmem:[#allocation15 + $0xe8] sm:$0xff]
    %v561 = vld [vmem:[#allocation15 + $0xf0] sm:$0xff]
    %v562 = vld [vmem:[#allocation15 + $0xf8] sm:$0xff]
    %v563 = vld [vmem:[#allocation16] sm:$0xff]
    %v564 = vld [vmem:[#allocation16 + $0x8] sm:$0xff]
    %v565 = vld [vmem:[#allocation16 + $0x10] sm:$0xff]
    %v566 = vld [vmem:[#allocation16 + $0x18] sm:$0xff]
    %v567 = vld [vmem:[#allocation16 + $0x20] sm:$0xff]
    %v568 = vld [vmem:[#allocation16 + $0x28] sm:$0xff]
    %v569 = vld [vmem:[#allocation16 + $0x30] sm:$0xff]
    %v570 = vld [vmem:[#allocation16 + $0x38] sm:$0xff]
    %v571 = vld [vmem:[#allocation16 + $0x40] sm:$0xff]
    %v572 = vld [vmem:[#allocation16 + $0x48] sm:$0xff]
    %v573 = vld [vmem:[#allocation16 + $0x50] sm:$0xff]
    %v574 = vld [vmem:[#allocation16 + $0x58] sm:$0xff]
    %v575 = vld [vmem:[#allocation16 + $0x60] sm:$0xff]
    %v576 = vld [vmem:[#allocation16 + $0x68] sm:$0xff]
    %v577 = vld [vmem:[#allocation16 + $0x70] sm:$0xff]
    %v578 = vld [vmem:[#allocation16 + $0x78] sm:$0xff]
    %v579 = vld [vmem:[#allocation16 + $0x80] sm:$0xff]
    %v580 = vld [vmem:[#allocation16 + $0x88] sm:$0xff]
    %v581 = vld [vmem:[#allocation16 + $0x90] sm:$0xff]
    %v582 = vld [vmem:[#allocation16 + $0x98] sm:$0xff]
    %v583 = vld [vmem:[#allocation16 + $0xa0] sm:$0xff]
    %v584 = vld [vmem:[#allocation16 + $0xa8] sm:$0xff]
    %v585 = vld [vmem:[#allocation16 + $0xb0] sm:$0xff]
    %v586 = vld [vmem:[#allocation16 + $0xb8] sm:$0xff]
    %v587 = vld [vmem:[#allocation16 + $0xc0] sm:$0xff]
    %v588 = vld [vmem:[#allocation16 + $0xc8] sm:$0xff]
    %v589 = vld [vmem:[#allocation16 + $0xd0] sm:$0xff]
    %v590 = vld [vmem:[#allocation16 + $0xd8] sm:$0xff]
    %v591 = vld [vmem:[#allocation16 + $0xe0] sm:$0xff]
    %v592 = vld [vmem:[#allocation16 + $0xe8] sm:$0xff]
    %v593 = vld [vmem:[#allocation16 + $0xf0] sm:$0xff]
    %v594 = vld [vmem:[#allocation16 + $0xf8] sm:$0xff]
    %v595 = vld [vmem:[%s8] sm:$0xf]
    %v597 = vlaneseq
    %v598 = vshrl.u32 %v597, 7
    %v599 = vsub.s32 0, %v598
    %v600 = vrot.slane %v595, %v599
    %v601 = vlaneseq
    %v602 = vshrl.u32 %v601, 7
    %v603 = vsub.s32 1, %v602
    %v604 = vrot.slane %v595, %v603
    %v605 = vlaneseq
    %v606 = vshrl.u32 %v605, 7
    %v607 = vsub.s32 2, %v606
    %v608 = vrot.slane %v595, %v607
    %v609 = vlaneseq
    %v610 = vshrl.u32 %v609, 7
    %v611 = vsub.s32 3, %v610
    %v612 = vrot.slane %v595, %v611
    %v617 = vld [vmem:[#allocation3] sm:$0xff]
    %v618 = vld [vmem:[#allocation4] sm:$0xff]
    %v619 = vld [vmem:[#allocation5] sm:$0xff]
    %v620 = vld [vmem:[#allocation6] sm:$0xff]
    %v621 = vpack.c.bf16 %v617, %v617
    %v654 = vunpack.c.l.b16 %v499
    %v655 = vunpack.c.h.b16 %v499
    %v656 = vunpack.c.l.b16 %v500
    %v657 = vunpack.c.h.b16 %v500
    %v658 = vunpack.c.l.b16 %v501
    %v659 = vunpack.c.h.b16 %v501
    %v660 = vunpack.c.l.b16 %v502
    %v661 = vunpack.c.h.b16 %v502
    %v662 = vunpack.c.l.b16 %v503
    %v663 = vunpack.c.h.b16 %v503
    %v664 = vunpack.c.l.b16 %v504
    %v665 = vunpack.c.h.b16 %v504
    %v666 = vunpack.c.l.b16 %v505
    %v667 = vunpack.c.h.b16 %v505
    %v668 = vunpack.c.l.b16 %v506
    %v669 = vunpack.c.h.b16 %v506
    %v670 = vunpack.c.l.b16 %v507
    %v671 = vunpack.c.h.b16 %v507
    %v672 = vunpack.c.l.b16 %v508
    %v673 = vunpack.c.h.b16 %v508
    %v674 = vunpack.c.l.b16 %v509
    %v675 = vunpack.c.h.b16 %v509
    %v676 = vunpack.c.l.b16 %v510
    %v677 = vunpack.c.h.b16 %v510
    %v678 = vunpack.c.l.b16 %v511
    %v679 = vunpack.c.h.b16 %v511
    %v680 = vunpack.c.l.b16 %v512
    %v681 = vunpack.c.h.b16 %v512
    %v682 = vunpack.c.l.b16 %v513
    %v683 = vunpack.c.h.b16 %v513
    %v684 = vunpack.c.l.b16 %v514
    %v685 = vunpack.c.h.b16 %v514
    %v686 = vunpack.c.l.b16 %v515
    %v687 = vunpack.c.h.b16 %v515
    %v688 = vunpack.c.l.b16 %v516
    %v689 = vunpack.c.h.b16 %v516
    %v690 = vunpack.c.l.b16 %v517
    %v691 = vunpack.c.h.b16 %v517
    %v692 = vunpack.c.l.b16 %v518
    %v693 = vunpack.c.h.b16 %v518
    %v694 = vunpack.c.l.b16 %v519
    %v695 = vunpack.c.h.b16 %v519
    %v696 = vunpack.c.l.b16 %v520
    %v697 = vunpack.c.h.b16 %v520
    %v698 = vunpack.c.l.b16 %v521
    %v699 = vunpack.c.h.b16 %v521
    %v700 = vunpack.c.l.b16 %v522
    %v701 = vunpack.c.h.b16 %v522
    %v702 = vunpack.c.l.b16 %v523
    %v703 = vunpack.c.h.b16 %v523
    %v704 = vunpack.c.l.b16 %v524
    %v705 = vunpack.c.h.b16 %v524
    %v706 = vunpack.c.l.b16 %v525
    %v707 = vunpack.c.h.b16 %v525
    %v708 = vunpack.c.l.b16 %v526
    %v709 = vunpack.c.h.b16 %v526
    %v710 = vunpack.c.l.b16 %v527
    %v711 = vunpack.c.h.b16 %v527
    %v712 = vunpack.c.l.b16 %v528
    %v713 = vunpack.c.h.b16 %v528
    %v714 = vunpack.c.l.b16 %v529
    %v715 = vunpack.c.h.b16 %v529
    %v716 = vunpack.c.l.b16 %v530
    %v717 = vunpack.c.h.b16 %v530
    %v718 = vpack.c.b16 %v658, %v654
    %v719 = vpack.c.b16 %v659, %v655
    %v720 = vpack.c.b16 %v660, %v656
    %v721 = vpack.c.b16 %v661, %v657
    %v722 = vpack.c.b16 %v666, %v662
    %v723 = vpack.c.b16 %v667, %v663
    %v724 = vpack.c.b16 %v668, %v664
    %v725 = vpack.c.b16 %v669, %v665
    %v726 = vpack.c.b16 %v674, %v670
    %v727 = vpack.c.b16 %v675, %v671
    %v728 = vpack.c.b16 %v676, %v672
    %v729 = vpack.c.b16 %v677, %v673
    %v730 = vpack.c.b16 %v682, %v678
    %v731 = vpack.c.b16 %v683, %v679
    %v732 = vpack.c.b16 %v684, %v680
    %v733 = vpack.c.b16 %v685, %v681
    %v734 = vpack.c.b16 %v690, %v686
    %v735 = vpack.c.b16 %v691, %v687
    %v736 = vpack.c.b16 %v692, %v688
    %v737 = vpack.c.b16 %v693, %v689
    %v738 = vpack.c.b16 %v698, %v694
    %v739 = vpack.c.b16 %v699, %v695
    %v740 = vpack.c.b16 %v700, %v696
    %v741 = vpack.c.b16 %v701, %v697
    %v742 = vpack.c.b16 %v706, %v702
    %v743 = vpack.c.b16 %v707, %v703
    %v744 = vpack.c.b16 %v708, %v704
    %v745 = vpack.c.b16 %v709, %v705
    %v746 = vpack.c.b16 %v714, %v710
    %v747 = vpack.c.b16 %v715, %v711
    %v748 = vpack.c.b16 %v716, %v712
    %v749 = vpack.c.b16 %v717, %v713
    %782 = vmatprep.subr.bf16.mxu0 %v719
    %783 = vmatpush1.bf16.msra.mxu0 %v718
    %784 = vmatprep.subr.bf16.mxu0 %v723
    %785 = vmatpush1.bf16.msra.mxu0 %v722
    %786 = vmatprep.subr.bf16.mxu0 %v727
    %787 = vmatpush1.bf16.msra.mxu0 %v726
    %788 = vmatprep.subr.bf16.mxu0 %v731
    %789 = vmatpush1.bf16.msra.mxu0 %v730
    %790 = vmatprep.subr.bf16.mxu0 %v735
    %791 = vmatpush1.bf16.msra.mxu0 %v734
    %792 = vmatprep.subr.bf16.mxu0 %v739
    %793 = vmatpush1.bf16.msra.mxu0 %v738
    %794 = vmatprep.subr.bf16.mxu0 %v743
    %795 = vmatpush1.bf16.msra.mxu0 %v742
    %796 = vmatprep.subr.bf16.mxu0 %v747
    %797 = vmatpush1.bf16.msra.mxu0 %v746
    %798 = vmatprep.subr.bf16.mxu0 0
    %799 = vmatpush1.bf16.msra.mxu0 0
    %800 = vmatprep.subr.bf16.mxu0 0
    %801 = vmatpush1.bf16.msra.mxu0 0
    %802 = vmatprep.subr.bf16.mxu0 0
    %803 = vmatpush1.bf16.msra.mxu0 0
    %804 = vmatprep.subr.bf16.mxu0 0
    %805 = vmatpush1.bf16.msra.mxu0 0
    %806 = vmatprep.subr.bf16.mxu0 0
    %807 = vmatpush1.bf16.msra.mxu0 0
    %808 = vmatprep.subr.bf16.mxu0 0
    %809 = vmatpush1.bf16.msra.mxu0 0
    %810 = vmatprep.subr.bf16.mxu0 0
    %811 = vmatpush1.bf16.msra.mxu0 0
    %812 = vmatprep.subr.bf16.mxu0 0
    %813 = vmatpush1.bf16.msra.mxu0 0
    %814 = vmatprep.mubr.bf16.mxu0 0
    %815 = vmatmul.mubr.bf16.gmra.mrb[0].mxu0 %v621
    %v816 = vpop.f32.mrb[0].mxu0
    %v817 = vadd.f32 0.0, %v816
    %v818 = vpop.f32.mrb[0].mxu0
    %v819 = vadd.f32 0.0, %v818
    %v820 = vpop.f32.mrb[0].mxu0
    %v821 = vpop.f32.mrb[0].mxu0
    %822 = vdwg.mxu0
    %823 = vmatprep.subr.bf16.mxu0 %v721
    %824 = vmatpush1.bf16.msra.mxu0 %v720
    %825 = vmatprep.subr.bf16.mxu0 %v725
    %826 = vmatpush1.bf16.msra.mxu0 %v724
    %827 = vmatprep.subr.bf16.mxu0 %v729
    %828 = vmatpush1.bf16.msra.mxu0 %v728
    %829 = vmatprep.subr.bf16.mxu0 %v733
    %830 = vmatpush1.bf16.msra.mxu0 %v732
    %831 = vmatprep.subr.bf16.mxu0 %v737
    %832 = vmatpush1.bf16.msra.mxu0 %v736
    %833 = vmatprep.subr.bf16.mxu0 %v741
    %834 = vmatpush1.bf16.msra.mxu0 %v740
    %835 = vmatprep.subr.bf16.mxu0 %v745
    %836 = vmatpush1.bf16.msra.mxu0 %v744
    %837 = vmatprep.subr.bf16.mxu0 %v749
    %838 = vmatpush1.bf16.msra.mxu0 %v748
    %839 = vmatprep.subr.bf16.mxu0 0
    %840 = vmatpush1.bf16.msra.mxu0 0
    %841 = vmatprep.subr.bf16.mxu0 0
    %842 = vmatpush1.bf16.msra.mxu0 0
    %843 = vmatprep.subr.bf16.mxu0 0
    %844 = vmatpush1.bf16.msra.mxu0 0
    %845 = vmatprep.subr.bf16.mxu0 0
    %846 = vmatpush1.bf16.msra.mxu0 0
    %847 = vmatprep.subr.bf16.mxu0 0
    %848 = vmatpush1.bf16.msra.mxu0 0
    %849 = vmatprep.subr.bf16.mxu0 0
    %850 = vmatpush1.bf16.msra.mxu0 0
    %851 = vmatprep.subr.bf16.mxu0 0
    %852 = vmatpush1.bf16.msra.mxu0 0
    %853 = vmatprep.subr.bf16.mxu0 0
    %854 = vmatpush1.bf16.msra.mxu0 0
    %855 = vmatprep.mubr.bf16.mxu0 0
    %856 = vmatmul.mubr.bf16.gmra.mrb[0].mxu0 %v621
    %v857 = vpop.f32.mrb[0].mxu0
    %v858 = vadd.f32 0.0, %v857
    %v859 = vpop.f32.mrb[0].mxu0
    %v860 = vadd.f32 0.0, %v859
    %v861 = vpop.f32.mrb[0].mxu0
    %v862 = vpop.f32.mrb[0].mxu0
    %863 = vdwg.mxu0
    %v864 = vadd.f32 %v495, %v817
    %v865 = vadd.f32 %v496, %v819
    %v866 = vadd.f32 %v497, %v858
    %v867 = vadd.f32 %v498, %v860
    %v868 = vxor.u32 %v864, 2147483648
    %v869 = vmul.f32 %v868, 1.442695
    %v870 = vpow.pop %v869
    %v871 = vadd.f32 %v870, 1.0
    %v872 = vrcp.pop %v871
    %v873 = vmul.f32 1.0, %v872
    %v874 = vxor.u32 %v865, 2147483648
    %v875 = vmul.f32 %v874, 1.442695
    %v876 = vpow.pop %v875
    %v877 = vadd.f32 %v876, 1.0
    %v878 = vrcp.pop %v877
    %v879 = vmul.f32 1.0, %v878
    %v880 = vtanh.pop %v866
    %v881 = vxor.u32 %v867, 2147483648
    %v882 = vmul.f32 %v881, 1.442695
    %v883 = vpow.pop %v882
    %v884 = vadd.f32 %v883, 1.0
    %v885 = vrcp.pop %v884
    %v886 = vmul.f32 1.0, %v885
    %v887 = vmul.f32 %v879, %v618
    %v888 = vmul.f32 %v873, %v880
    %v889 = vadd.f32 %v887, %v888
    %v890 = vtanh.pop %v889
    %v891 = vmul.f32 %v886, %v890
    %v892 = vpack.c.bf16 %v891, %v891
    %v893 = vpack.c.bf16 %v619, %v619
    %v926 = vunpack.c.l.b16 %v563
    %v927 = vunpack.c.h.b16 %v563
    %v928 = vunpack.c.l.b16 %v564
    %v929 = vunpack.c.h.b16 %v564
    %v930 = vunpack.c.l.b16 %v565
    %v931 = vunpack.c.h.b16 %v565
    %v932 = vunpack.c.l.b16 %v566
    %v933 = vunpack.c.h.b16 %v566
    %v934 = vunpack.c.l.b16 %v567
    %v935 = vunpack.c.h.b16 %v567
    %v936 = vunpack.c.l.b16 %v568
    %v937 = vunpack.c.h.b16 %v568
    %v938 = vunpack.c.l.b16 %v569
    %v939 = vunpack.c.h.b16 %v569
    %v940 = vunpack.c.l.b16 %v570
    %v941 = vunpack.c.h.b16 %v570
    %v942 = vunpack.c.l.b16 %v571
    %v943 = vunpack.c.h.b16 %v571
    %v944 = vunpack.c.l.b16 %v572
    %v945 = vunpack.c.h.b16 %v572
    %v946 = vunpack.c.l.b16 %v573
    %v947 = vunpack.c.h.b16 %v573
    %v948 = vunpack.c.l.b16 %v574
    %v949 = vunpack.c.h.b16 %v574
    %v950 = vunpack.c.l.b16 %v575
    %v951 = vunpack.c.h.b16 %v575
    %v952 = vunpack.c.l.b16 %v576
    %v953 = vunpack.c.h.b16 %v576
    %v954 = vunpack.c.l.b16 %v577
    %v955 = vunpack.c.h.b16 %v577
    %v956 = vunpack.c.l.b16 %v578
    %v957 = vunpack.c.h.b16 %v578
    %v958 = vunpack.c.l.b16 %v579
    %v959 = vunpack.c.h.b16 %v579
    %v960 = vunpack.c.l.b16 %v580
    %v961 = vunpack.c.h.b16 %v580
    %v962 = vunpack.c.l.b16 %v581
    %v963 = vunpack.c.h.b16 %v581
    %v964 = vunpack.c.l.b16 %v582
    %v965 = vunpack.c.h.b16 %v582
    %v966 = vunpack.c.l.b16 %v583
    %v967 = vunpack.c.h.b16 %v583
    %v968 = vunpack.c.l.b16 %v584
    %v969 = vunpack.c.h.b16 %v584
    %v970 = vunpack.c.l.b16 %v585
    %v971 = vunpack.c.h.b16 %v585
    %v972 = vunpack.c.l.b16 %v586
    %v973 = vunpack.c.h.b16 %v586
    %v974 = vunpack.c.l.b16 %v587
    %v975 = vunpack.c.h.b16 %v587
    %v976 = vunpack.c.l.b16 %v588
    %v977 = vunpack.c.h.b16 %v588
    %v978 = vunpack.c.l.b16 %v589
    %v979 = vunpack.c.h.b16 %v589
    %v980 = vunpack.c.l.b16 %v590
    %v981 = vunpack.c.h.b16 %v590
    %v982 = vunpack.c.l.b16 %v591
    %v983 = vunpack.c.h.b16 %v591
    %v984 = vunpack.c.l.b16 %v592
    %v985 = vunpack.c.h.b16 %v592
    %v986 = vunpack.c.l.b16 %v593
    %v987 = vunpack.c.h.b16 %v593
    %v988 = vunpack.c.l.b16 %v594
    %v989 = vunpack.c.h.b16 %v594
    %v990 = vpack.c.b16 %v930, %v926
    %v991 = vpack.c.b16 %v931, %v927
    %v992 = vpack.c.b16 %v932, %v928
    %v993 = vpack.c.b16 %v933, %v929
    %v994 = vpack.c.b16 %v938, %v934
    %v995 = vpack.c.b16 %v939, %v935
    %v996 = vpack.c.b16 %v940, %v936
    %v997 = vpack.c.b16 %v941, %v937
    %v998 = vpack.c.b16 %v946, %v942
    %v999 = vpack.c.b16 %v947, %v943
    %v1000 = vpack.c.b16 %v948, %v944
    %v1001 = vpack.c.b16 %v949, %v945
    %v1002 = vpack.c.b16 %v954, %v950
    %v1003 = vpack.c.b16 %v955, %v951
    %v1004 = vpack.c.b16 %v956, %v952
    %v1005 = vpack.c.b16 %v957, %v953
    %v1006 = vpack.c.b16 %v962, %v958
    %v1007 = vpack.c.b16 %v963, %v959
    %v1008 = vpack.c.b16 %v964, %v960
    %v1009 = vpack.c.b16 %v965, %v961
    %v1010 = vpack.c.b16 %v970, %v966
    %v1011 = vpack.c.b16 %v971, %v967
    %v1012 = vpack.c.b16 %v972, %v968
    %v1013 = vpack.c.b16 %v973, %v969
    %v1014 = vpack.c.b16 %v978, %v974
    %v1015 = vpack.c.b16 %v979, %v975
    %v1016 = vpack.c.b16 %v980, %v976
    %v1017 = vpack.c.b16 %v981, %v977
    %v1018 = vpack.c.b16 %v986, %v982
    %v1019 = vpack.c.b16 %v987, %v983
    %v1020 = vpack.c.b16 %v988, %v984
    %v1021 = vpack.c.b16 %v989, %v985
    %1054 = vmatprep.subr.bf16.mxu0 %v991
    %1055 = vmatpush1.bf16.msra.mxu0 %v990
    %1056 = vmatprep.subr.bf16.mxu0 %v995
    %1057 = vmatpush1.bf16.msra.mxu0 %v994
    %1058 = vmatprep.subr.bf16.mxu0 %v999
    %1059 = vmatpush1.bf16.msra.mxu0 %v998
    %1060 = vmatprep.subr.bf16.mxu0 %v1003
    %1061 = vmatpush1.bf16.msra.mxu0 %v1002
    %1062 = vmatprep.subr.bf16.mxu0 %v1007
    %1063 = vmatpush1.bf16.msra.mxu0 %v1006
    %1064 = vmatprep.subr.bf16.mxu0 %v1011
    %1065 = vmatpush1.bf16.msra.mxu0 %v1010
    %1066 = vmatprep.subr.bf16.mxu0 %v1015
    %1067 = vmatpush1.bf16.msra.mxu0 %v1014
    %1068 = vmatprep.subr.bf16.mxu0 %v1019
    %1069 = vmatpush1.bf16.msra.mxu0 %v1018
    %1070 = vmatprep.subr.bf16.mxu0 0
    %1071 = vmatpush1.bf16.msra.mxu0 0
    %1072 = vmatprep.subr.bf16.mxu0 0
    %1073 = vmatpush1.bf16.msra.mxu0 0
    %1074 = vmatprep.subr.bf16.mxu0 0
    %1075 = vmatpush1.bf16.msra.mxu0 0
    %1076 = vmatprep.subr.bf16.mxu0 0
    %1077 = vmatpush1.bf16.msra.mxu0 0
    %1078 = vmatprep.subr.bf16.mxu0 0
    %1079 = vmatpush1.bf16.msra.mxu0 0
    %1080 = vmatprep.subr.bf16.mxu0 0
    %1081 = vmatpush1.bf16.msra.mxu0 0
    %1082 = vmatprep.subr.bf16.mxu0 0
    %1083 = vmatpush1.bf16.msra.mxu0 0
    %1084 = vmatprep.subr.bf16.mxu0 0
    %1085 = vmatpush1.bf16.msra.mxu0 0
    %1086 = vmatprep.mubr.bf16.mxu0 0
    %1087 = vmatmul.mubr.bf16.gmra.mrb[0].mxu0 %v893
    %v1088 = vpop.f32.mrb[0].mxu0
    %v1089 = vadd.f32 0.0, %v1088
    %v1090 = vpop.f32.mrb[0].mxu0
    %v1091 = vadd.f32 0.0, %v1090
    %v1092 = vpop.f32.mrb[0].mxu0
    %v1093 = vpop.f32.mrb[0].mxu0
    %1094 = vdwg.mxu0
    %1095 = vmatprep.subr.bf16.mxu0 %v993
    %1096 = vmatpush1.bf16.msra.mxu0 %v992
    %1097 = vmatprep.subr.bf16.mxu0 %v997
    %1098 = vmatpush1.bf16.msra.mxu0 %v996
    %1099 = vmatprep.subr.bf16.mxu0 %v1001
    %1100 = vmatpush1.bf16.msra.mxu0 %v1000
    %1101 = vmatprep.subr.bf16.mxu0 %v1005
    %1102 = vmatpush1.bf16.msra.mxu0 %v1004
    %1103 = vmatprep.subr.bf16.mxu0 %v1009
    %1104 = vmatpush1.bf16.msra.mxu0 %v1008
    %1105 = vmatprep.subr.bf16.mxu0 %v1013
    %1106 = vmatpush1.bf16.msra.mxu0 %v1012
    %1107 = vmatprep.subr.bf16.mxu0 %v1017
    %1108 = vmatpush1.bf16.msra.mxu0 %v1016
    %1109 = vmatprep.subr.bf16.mxu0 %v1021
    %1110 = vmatpush1.bf16.msra.mxu0 %v1020
    %1111 = vmatprep.subr.bf16.mxu0 0
    %1112 = vmatpush1.bf16.msra.mxu0 0
    %1113 = vmatprep.subr.bf16.mxu0 0
    %1114 = vmatpush1.bf16.msra.mxu0 0
    %1115 = vmatprep.subr.bf16.mxu0 0
    %1116 = vmatpush1.bf16.msra.mxu0 0
    %1117 = vmatprep.subr.bf16.mxu0 0
    %1118 = vmatpush1.bf16.msra.mxu0 0
    %1119 = vmatprep.subr.bf16.mxu0 0
    %1120 = vmatpush1.bf16.msra.mxu0 0
    %1121 = vmatprep.subr.bf16.mxu0 0
    %1122 = vmatpush1.bf16.msra.mxu0 0
    %1123 = vmatprep.subr.bf16.mxu0 0
    %1124 = vmatpush1.bf16.msra.mxu0 0
    %1125 = vmatprep.subr.bf16.mxu0 0
    %1126 = vmatpush1.bf16.msra.mxu0 0
    %1127 = vmatprep.mubr.bf16.mxu0 0
    %1128 = vmatmul.mubr.bf16.gmra.mrb[0].mxu0 %v893
    %v1129 = vpop.f32.mrb[0].mxu0
    %v1130 = vadd.f32 0.0, %v1129
    %v1131 = vpop.f32.mrb[0].mxu0
    %v1132 = vadd.f32 0.0, %v1131
    %v1133 = vpop.f32.mrb[0].mxu0
    %v1134 = vpop.f32.mrb[0].mxu0
    %1135 = vdwg.mxu0
    %v1168 = vunpack.c.l.b16 %v531
    %v1169 = vunpack.c.h.b16 %v531
    %v1170 = vunpack.c.l.b16 %v532
    %v1171 = vunpack.c.h.b16 %v532
    %v1172 = vunpack.c.l.b16 %v533
    %v1173 = vunpack.c.h.b16 %v533
    %v1174 = vunpack.c.l.b16 %v534
    %v1175 = vunpack.c.h.b16 %v534
    %v1176 = vunpack.c.l.b16 %v535
    %v1177 = vunpack.c.h.b16 %v535
    %v1178 = vunpack.c.l.b16 %v536
    %v1179 = vunpack.c.h.b16 %v536
    %v1180 = vunpack.c.l.b16 %v537
    %v1181 = vunpack.c.h.b16 %v537
    %v1182 = vunpack.c.l.b16 %v538
    %v1183 = vunpack.c.h.b16 %v538
    %v1184 = vunpack.c.l.b16 %v539
    %v1185 = vunpack.c.h.b16 %v539
    %v1186 = vunpack.c.l.b16 %v540
    %v1187 = vunpack.c.h.b16 %v540
    %v1188 = vunpack.c.l.b16 %v541
    %v1189 = vunpack.c.h.b16 %v541
    %v1190 = vunpack.c.l.b16 %v542
    %v1191 = vunpack.c.h.b16 %v542
    %v1192 = vunpack.c.l.b16 %v543
    %v1193 = vunpack.c.h.b16 %v543
    %v1194 = vunpack.c.l.b16 %v544
    %v1195 = vunpack.c.h.b16 %v544
    %v1196 = vunpack.c.l.b16 %v545
    %v1197 = vunpack.c.h.b16 %v545
    %v1198 = vunpack.c.l.b16 %v546
    %v1199 = vunpack.c.h.b16 %v546
    %v1200 = vunpack.c.l.b16 %v547
    %v1201 = vunpack.c.h.b16 %v547
    %v1202 = vunpack.c.l.b16 %v548
    %v1203 = vunpack.c.h.b16 %v548
    %v1204 = vunpack.c.l.b16 %v549
    %v1205 = vunpack.c.h.b16 %v549
    %v1206 = vunpack.c.l.b16 %v550
    %v1207 = vunpack.c.h.b16 %v550
    %v1208 = vunpack.c.l.b16 %v551
    %v1209 = vunpack.c.h.b16 %v551
    %v1210 = vunpack.c.l.b16 %v552
    %v1211 = vunpack.c.h.b16 %v552
    %v1212 = vunpack.c.l.b16 %v553
    %v1213 = vunpack.c.h.b16 %v553
    %v1214 = vunpack.c.l.b16 %v554
    %v1215 = vunpack.c.h.b16 %v554
    %v1216 = vunpack.c.l.b16 %v555
    %v1217 = vunpack.c.h.b16 %v555
    %v1218 = vunpack.c.l.b16 %v556
    %v1219 = vunpack.c.h.b16 %v556
    %v1220 = vunpack.c.l.b16 %v557
    %v1221 = vunpack.c.h.b16 %v557
    %v1222 = vunpack.c.l.b16 %v558
    %v1223 = vunpack.c.h.b16 %v558
    %v1224 = vunpack.c.l.b16 %v559
    %v1225 = vunpack.c.h.b16 %v559
    %v1226 = vunpack.c.l.b16 %v560
    %v1227 = vunpack.c.h.b16 %v560
    %v1228 = vunpack.c.l.b16 %v561
    %v1229 = vunpack.c.h.b16 %v561
    %v1230 = vunpack.c.l.b16 %v562
    %v1231 = vunpack.c.h.b16 %v562
    %v1232 = vpack.c.b16 %v1172, %v1168
    %v1233 = vpack.c.b16 %v1173, %v1169
    %v1234 = vpack.c.b16 %v1174, %v1170
    %v1235 = vpack.c.b16 %v1175, %v1171
    %v1236 = vpack.c.b16 %v1180, %v1176
    %v1237 = vpack.c.b16 %v1181, %v1177
    %v1238 = vpack.c.b16 %v1182, %v1178
    %v1239 = vpack.c.b16 %v1183, %v1179
    %v1240 = vpack.c.b16 %v1188, %v1184
    %v1241 = vpack.c.b16 %v1189, %v1185
    %v1242 = vpack.c.b16 %v1190, %v1186
    %v1243 = vpack.c.b16 %v1191, %v1187
    %v1244 = vpack.c.b16 %v1196, %v1192
    %v1245 = vpack.c.b16 %v1197, %v1193
    %v1246 = vpack.c.b16 %v1198, %v1194
    %v1247 = vpack.c.b16 %v1199, %v1195
    %v1248 = vpack.c.b16 %v1204, %v1200
    %v1249 = vpack.c.b16 %v1205, %v1201
    %v1250 = vpack.c.b16 %v1206, %v1202
    %v1251 = vpack.c.b16 %v1207, %v1203
    %v1252 = vpack.c.b16 %v1212, %v1208
    %v1253 = vpack.c.b16 %v1213, %v1209
    %v1254 = vpack.c.b16 %v1214, %v1210
    %v1255 = vpack.c.b16 %v1215, %v1211
    %v1256 = vpack.c.b16 %v1220, %v1216
    %v1257 = vpack.c.b16 %v1221, %v1217
    %v1258 = vpack.c.b16 %v1222, %v1218
    %v1259 = vpack.c.b16 %v1223, %v1219
    %v1260 = vpack.c.b16 %v1228, %v1224
    %v1261 = vpack.c.b16 %v1229, %v1225
    %v1262 = vpack.c.b16 %v1230, %v1226
    %v1263 = vpack.c.b16 %v1231, %v1227
    %1296 = vmatprep.subr.bf16.mxu0 %v1233
    %1297 = vmatpush1.bf16.msra.mxu0 %v1232
    %1298 = vmatprep.subr.bf16.mxu0 %v1237
    %1299 = vmatpush1.bf16.msra.mxu0 %v1236
    %1300 = vmatprep.subr.bf16.mxu0 %v1241
    %1301 = vmatpush1.bf16.msra.mxu0 %v1240
    %1302 = vmatprep.subr.bf16.mxu0 %v1245
    %1303 = vmatpush1.bf16.msra.mxu0 %v1244
    %1304 = vmatprep.subr.bf16.mxu0 %v1249
    %1305 = vmatpush1.bf16.msra.mxu0 %v1248
    %1306 = vmatprep.subr.bf16.mxu0 %v1253
    %1307 = vmatpush1.bf16.msra.mxu0 %v1252
    %1308 = vmatprep.subr.bf16.mxu0 %v1257
    %1309 = vmatpush1.bf16.msra.mxu0 %v1256
    %1310 = vmatprep.subr.bf16.mxu0 %v1261
    %1311 = vmatpush1.bf16.msra.mxu0 %v1260
    %1312 = vmatprep.subr.bf16.mxu0 0
    %1313 = vmatpush1.bf16.msra.mxu0 0
    %1314 = vmatprep.subr.bf16.mxu0 0
    %1315 = vmatpush1.bf16.msra.mxu0 0
    %1316 = vmatprep.subr.bf16.mxu0 0
    %1317 = vmatpush1.bf16.msra.mxu0 0
    %1318 = vmatprep.subr.bf16.mxu0 0
    %1319 = vmatpush1.bf16.msra.mxu0 0
    %1320 = vmatprep.subr.bf16.mxu0 0
    %1321 = vmatpush1.bf16.msra.mxu0 0
    %1322 = vmatprep.subr.bf16.mxu0 0
    %1323 = vmatpush1.bf16.msra.mxu0 0
    %1324 = vmatprep.subr.bf16.mxu0 0
    %1325 = vmatpush1.bf16.msra.mxu0 0
    %1326 = vmatprep.subr.bf16.mxu0 0
    %1327 = vmatpush1.bf16.msra.mxu0 0
    %1328 = vmatprep.mubr.bf16.mxu0 0
    %1329 = vmatmul.mubr.bf16.gmra.mrb[0].mxu0 %v892
    %v1330 = vpop.f32.mrb[0].mxu0
    %v1331 = vadd.f32 %v1089, %v1330
    %v1332 = vpop.f32.mrb[0].mxu0
    %v1333 = vadd.f32 %v1091, %v1332
    %v1334 = vpop.f32.mrb[0].mxu0
    %v1335 = vpop.f32.mrb[0].mxu0
    %1336 = vdwg.mxu0
    %1337 = vmatprep.subr.bf16.mxu0 %v1235
    %1338 = vmatpush1.bf16.msra.mxu0 %v1234
    %1339 = vmatprep.subr.bf16.mxu0 %v1239
    %1340 = vmatpush1.bf16.msra.mxu0 %v1238
    %1341 = vmatprep.subr.bf16.mxu0 %v1243
    %1342 = vmatpush1.bf16.msra.mxu0 %v1242
    %1343 = vmatprep.subr.bf16.mxu0 %v1247
    %1344 = vmatpush1.bf16.msra.mxu0 %v1246
    %1345 = vmatprep.subr.bf16.mxu0 %v1251
    %1346 = vmatpush1.bf16.msra.mxu0 %v1250
    %1347 = vmatprep.subr.bf16.mxu0 %v1255
    %1348 = vmatpush1.bf16.msra.mxu0 %v1254
    %1349 = vmatprep.subr.bf16.mxu0 %v1259
    %1350 = vmatpush1.bf16.msra.mxu0 %v1258
    %1351 = vmatprep.subr.bf16.mxu0 %v1263
    %1352 = vmatpush1.bf16.msra.mxu0 %v1262
    %1353 = vmatprep.subr.bf16.mxu0 0
    %1354 = vmatpush1.bf16.msra.mxu0 0
    %1355 = vmatprep.subr.bf16.mxu0 0
    %1356 = vmatpush1.bf16.msra.mxu0 0
    %1357 = vmatprep.subr.bf16.mxu0 0
    %1358 = vmatpush1.bf16.msra.mxu0 0
    %1359 = vmatprep.subr.bf16.mxu0 0
    %1360 = vmatpush1.bf16.msra.mxu0 0
    %1361 = vmatprep.subr.bf16.mxu0 0
    %1362 = vmatpush1.bf16.msra.mxu0 0
    %1363 = vmatprep.subr.bf16.mxu0 0
    %1364 = vmatpush1.bf16.msra.mxu0 0
    %1365 = vmatprep.subr.bf16.mxu0 0
    %1366 = vmatpush1.bf16.msra.mxu0 0
    %1367 = vmatprep.subr.bf16.mxu0 0
    %1368 = vmatpush1.bf16.msra.mxu0 0
    %1369 = vmatprep.mubr.bf16.mxu0 0
    %1370 = vmatmul.mubr.bf16.gmra.mrb[0].mxu0 %v892
    %v1371 = vpop.f32.mrb[0].mxu0
    %v1372 = vadd.f32 %v1130, %v1371
    %v1373 = vpop.f32.mrb[0].mxu0
    %v1374 = vadd.f32 %v1132, %v1373
    %v1375 = vpop.f32.mrb[0].mxu0
    %v1376 = vpop.f32.mrb[0].mxu0
    %1377 = vdwg.mxu0
    %v1378 = vadd.f32 %v1331, %v600
    %v1379 = vadd.f32 %v1333, %v604
    %v1380 = vadd.f32 %v1372, %v608
    %v1381 = vadd.f32 %v1374, %v612
    %v1382 = vxor.u32 %v1378, 2147483648
    %v1383 = vmul.f32 %v1382, 1.442695
    %v1384 = vpow.pop %v1383
    %v1385 = vadd.f32 %v1384, 1.0
    %v1386 = vrcp.pop %v1385
    %v1387 = vmul.f32 1.0, %v1386
    %v1388 = vxor.u32 %v1379, 2147483648
    %v1389 = vmul.f32 %v1388, 1.442695
    %v1390 = vpow.pop %v1389
    %v1391 = vadd.f32 %v1390, 1.0
    %v1392 = vrcp.pop %v1391
    %v1393 = vmul.f32 1.0, %v1392
    %v1394 = vtanh.pop %v1380
    %v1395 = vxor.u32 %v1381, 2147483648
    %v1396 = vmul.f32 %v1395, 1.442695
    %v1397 = vpow.pop %v1396
    %v1398 = vadd.f32 %v1397, 1.0
    %v1399 = vrcp.pop %v1398
    %v1400 = vmul.f32 1.0, %v1399
    %v1401 = vmul.f32 %v1393, %v620
    %v1402 = vmul.f32 %v1387, %v1394
    %v1403 = vadd.f32 %v1401, %v1402
    %v1404 = vtanh.pop %v1403
    %v1405 = vmul.f32 %v1400, %v1404
    %1406 = vst [vmem:[#allocation18] sm:$0xff] %v1405
    %1407 = vmatprep.subr.bf16.mxu0 %v719
    %1408 = vmatpush1.bf16.msra.mxu0 %v718
    %1409 = vmatprep.subr.bf16.mxu0 %v723
    %1410 = vmatpush1.bf16.msra.mxu0 %v722
    %1411 = vmatprep.subr.bf16.mxu0 %v727
    %1412 = vmatpush1.bf16.msra.mxu0 %v726
    %1413 = vmatprep.subr.bf16.mxu0 %v731
    %1414 = vmatpush1.bf16.msra.mxu0 %v730
    %1415 = vmatprep.subr.bf16.mxu0 %v735
    %1416 = vmatpush1.bf16.msra.mxu0 %v734
    %1417 = vmatprep.subr.bf16.mxu0 %v739
    %1418 = vmatpush1.bf16.msra.mxu0 %v738
    %1419 = vmatprep.subr.bf16.mxu0 %v743
    %1420 = vmatpush1.bf16.msra.mxu0 %v742
    %1421 = vmatprep.subr.bf16.mxu0 %v747
    %1422 = vmatpush1.bf16.msra.mxu0 %v746
    %1423 = vmatprep.subr.bf16.mxu0 0
    %1424 = vmatpush1.bf16.msra.mxu0 0
    %1425 = vmatprep.subr.bf16.mxu0 0
    %1426 = vmatpush1.bf16.msra.mxu0 0
    %1427 = vmatprep.subr.bf16.mxu0 0
    %1428 = vmatpush1.bf16.msra.mxu0 0
    %1429 = vmatprep.subr.bf16.mxu0 0
    %1430 = vmatpush1.bf16.msra.mxu0 0
    %1431 = vmatprep.subr.bf16.mxu0 0
    %1432 = vmatpush1.bf16.msra.mxu0 0
    %1433 = vmatprep.subr.bf16.mxu0 0
    %1434 = vmatpush1.bf16.msra.mxu0 0
    %1435 = vmatprep.subr.bf16.mxu0 0
    %1436 = vmatpush1.bf16.msra.mxu0 0
    %1437 = vmatprep.subr.bf16.mxu0 0
    %1438 = vmatpush1.bf16.msra.mxu0 0
    %1439 = vmatprep.mubr.bf16.mxu0 0
    %1440 = vmatmul.mubr.bf16.gmra.mrb[0].mxu0 %v892
    %v1441 = vpop.f32.mrb[0].mxu0
    %v1442 = vadd.f32 0.0, %v1441
    %v1443 = vpop.f32.mrb[0].mxu0
    %v1444 = vadd.f32 0.0, %v1443
    %v1445 = vpop.f32.mrb[0].mxu0
    %v1446 = vpop.f32.mrb[0].mxu0
    %1447 = vdwg.mxu0
    %1448 = vmatprep.subr.bf16.mxu0 %v721
    %1449 = vmatpush1.bf16.msra.mxu0 %v720
    %1450 = vmatprep.subr.bf16.mxu0 %v725
    %1451 = vmatpush1.bf16.msra.mxu0 %v724
    %1452 = vmatprep.subr.bf16.mxu0 %v729
    %1453 = vmatpush1.bf16.msra.mxu0 %v728
    %1454 = vmatprep.subr.bf16.mxu0 %v733
    %1455 = vmatpush1.bf16.msra.mxu0 %v732
    %1456 = vmatprep.subr.bf16.mxu0 %v737
    %1457 = vmatpush1.bf16.msra.mxu0 %v736
    %1458 = vmatprep.subr.bf16.mxu0 %v741
    %1459 = vmatpush1.bf16.msra.mxu0 %v740
    %1460 = vmatprep.subr.bf16.mxu0 %v745
    %1461 = vmatpush1.bf16.msra.mxu0 %v744
    %1462 = vmatprep.subr.bf16.mxu0 %v749
    %1463 = vmatpush1.bf16.msra.mxu0 %v748
    %1464 = vmatprep.subr.bf16.mxu0 0
    %1465 = vmatpush1.bf16.msra.mxu0 0
    %1466 = vmatprep.subr.bf16.mxu0 0
    %1467 = vmatpush1.bf16.msra.mxu0 0
    %1468 = vmatprep.subr.bf16.mxu0 0
    %1469 = vmatpush1.bf16.msra.mxu0 0
    %1470 = vmatprep.subr.bf16.mxu0 0
    %1471 = vmatpush1.bf16.msra.mxu0 0
    %1472 = vmatprep.subr.bf16.mxu0 0
    %1473 = vmatpush1.bf16.msra.mxu0 0
    %1474 = vmatprep.subr.bf16.mxu0 0
    %1475 = vmatpush1.bf16.msra.mxu0 0
    %1476 = vmatprep.subr.bf16.mxu0 0
    %1477 = vmatpush1.bf16.msra.mxu0 0
    %1478 = vmatprep.subr.bf16.mxu0 0
    %1479 = vmatpush1.bf16.msra.mxu0 0
    %1480 = vmatprep.mubr.bf16.mxu0 0
    %1481 = vmatmul.mubr.bf16.gmra.mrb[0].mxu0 %v892
    %v1482 = vpop.f32.mrb[0].mxu0
    %v1483 = vadd.f32 0.0, %v1482
    %v1484 = vpop.f32.mrb[0].mxu0
    %v1485 = vadd.f32 0.0, %v1484
    %v1486 = vpop.f32.mrb[0].mxu0
    %v1487 = vpop.f32.mrb[0].mxu0
    %1488 = vdwg.mxu0
    %v1489 = vadd.f32 %v495, %v1442
    %v1490 = vadd.f32 %v496, %v1444
    %v1491 = vadd.f32 %v497, %v1483
    %v1492 = vadd.f32 %v498, %v1485
    %v1493 = vxor.u32 %v1489, 2147483648
    %v1494 = vmul.f32 %v1493, 1.442695
    %v1495 = vpow.pop %v1494
    %v1496 = vadd.f32 %v1495, 1.0
    %v1497 = vrcp.pop %v1496
    %v1498 = vmul.f32 1.0, %v1497
    %v1499 = vxor.u32 %v1490, 2147483648
    %v1500 = vmul.f32 %v1499, 1.442695
    %v1501 = vpow.pop %v1500
    %v1502 = vadd.f32 %v1501, 1.0
    %v1503 = vrcp.pop %v1502
    %v1504 = vmul.f32 1.0, %v1503
    %v1505 = vtanh.pop %v1491
    %v1506 = vxor.u32 %v1492, 2147483648
    %v1507 = vmul.f32 %v1506, 1.442695
    %v1508 = vpow.pop %v1507
    %v1509 = vadd.f32 %v1508, 1.0
    %v1510 = vrcp.pop %v1509
    %v1511 = vmul.f32 1.0, %v1510
    %v1512 = vmul.f32 %v1504, %v889
    %v1513 = vmul.f32 %v1498, %v1505
    %v1514 = vadd.f32 %v1512, %v1513
    %v1515 = vtanh.pop %v1514
    %v1516 = vmul.f32 %v1511, %v1515
    %v1517 = vpack.c.bf16 %v1516, %v1516
    %v1518 = vpack.c.bf16 %v1405, %v1405
    %1519 = vmatprep.subr.bf16.mxu0 %v991
    %1520 = vmatpush1.bf16.msra.mxu0 %v990
    %1521 = vmatprep.subr.bf16.mxu0 %v995
    %1522 = vmatpush1.bf16.msra.mxu0 %v994
    %1523 = vmatprep.subr.bf16.mxu0 %v999
    %1524 = vmatpush1.bf16.msra.mxu0 %v998
    %1525 = vmatprep.subr.bf16.mxu0 %v1003
    %1526 = vmatpush1.bf16.msra.mxu0 %v1002
    %1527 = vmatprep.subr.bf16.mxu0 %v1007
    %1528 = vmatpush1.bf16.msra.mxu0 %v1006
    %1529 = vmatprep.subr.bf16.mxu0 %v1011
    %1530 = vmatpush1.bf16.msra.mxu0 %v1010
    %1531 = vmatprep.subr.bf16.mxu0 %v1015
    %1532 = vmatpush1.bf16.msra.mxu0 %v1014
    %1533 = vmatprep.subr.bf16.mxu0 %v1019
    %1534 = vmatpush1.bf16.msra.mxu0 %v1018
    %1535 = vmatprep.subr.bf16.mxu0 0
    %1536 = vmatpush1.bf16.msra.mxu0 0
    %1537 = vmatprep.subr.bf16.mxu0 0
    %1538 = vmatpush1.bf16.msra.mxu0 0
    %1539 = vmatprep.subr.bf16.mxu0 0
    %1540 = vmatpush1.bf16.msra.mxu0 0
    %1541 = vmatprep.subr.bf16.mxu0 0
    %1542 = vmatpush1.bf16.msra.mxu0 0
    %1543 = vmatprep.subr.bf16.mxu0 0
    %1544 = vmatpush1.bf16.msra.mxu0 0
    %1545 = vmatprep.subr.bf16.mxu0 0
    %1546 = vmatpush1.bf16.msra.mxu0 0
    %1547 = vmatprep.subr.bf16.mxu0 0
    %1548 = vmatpush1.bf16.msra.mxu0 0
    %1549 = vmatprep.subr.bf16.mxu0 0
    %1550 = vmatpush1.bf16.msra.mxu0 0
    %1551 = vmatprep.mubr.bf16.mxu0 0
    %1552 = vmatmul.mubr.bf16.gmra.mrb[0].mxu0 %v1518
    %v1553 = vpop.f32.mrb[0].mxu0
    %v1554 = vadd.f32 0.0, %v1553
    %v1555 = vpop.f32.mrb[0].mxu0
    %v1556 = vadd.f32 0.0, %v1555
    %v1557 = vpop.f32.mrb[0].mxu0
    %v1558 = vpop.f32.mrb[0].mxu0
    %1559 = vdwg.mxu0
    %1560 = vmatprep.subr.bf16.mxu0 %v993
    %1561 = vmatpush1.bf16.msra.mxu0 %v992
    %1562 = vmatprep.subr.bf16.mxu0 %v997
    %1563 = vmatpush1.bf16.msra.mxu0 %v996
    %1564 = vmatprep.subr.bf16.mxu0 %v1001
    %1565 = vmatpush1.bf16.msra.mxu0 %v1000
    %1566 = vmatprep.subr.bf16.mxu0 %v1005
    %1567 = vmatpush1.bf16.msra.mxu0 %v1004
    %1568 = vmatprep.subr.bf16.mxu0 %v1009
    %1569 = vmatpush1.bf16.msra.mxu0 %v1008
    %1570 = vmatprep.subr.bf16.mxu0 %v1013
    %1571 = vmatpush1.bf16.msra.mxu0 %v1012
    %1572 = vmatprep.subr.bf16.mxu0 %v1017
    %1573 = vmatpush1.bf16.msra.mxu0 %v1016
    %1574 = vmatprep.subr.bf16.mxu0 %v1021
    %1575 = vmatpush1.bf16.msra.mxu0 %v1020
    %1576 = vmatprep.subr.bf16.mxu0 0
    %1577 = vmatpush1.bf16.msra.mxu0 0
    %1578 = vmatprep.subr.bf16.mxu0 0
    %1579 = vmatpush1.bf16.msra.mxu0 0
    %1580 = vmatprep.subr.bf16.mxu0 0
    %1581 = vmatpush1.bf16.msra.mxu0 0
    %1582 = vmatprep.subr.bf16.mxu0 0
    %1583 = vmatpush1.bf16.msra.mxu0 0
    %1584 = vmatprep.subr.bf16.mxu0 0
    %1585 = vmatpush1.bf16.msra.mxu0 0
    %1586 = vmatprep.subr.bf16.mxu0 0
    %1587 = vmatpush1.bf16.msra.mxu0 0
    %1588 = vmatprep.subr.bf16.mxu0 0
    %1589 = vmatpush1.bf16.msra.mxu0 0
    %1590 = vmatprep.subr.bf16.mxu0 0
    %1591 = vmatpush1.bf16.msra.mxu0 0
    %1592 = vmatprep.mubr.bf16.mxu0 0
    %1593 = vmatmul.mubr.bf16.gmra.mrb[0].mxu0 %v1518
    %v1594 = vpop.f32.mrb[0].mxu0
    %v1595 = vadd.f32 0.0, %v1594
    %v1596 = vpop.f32.mrb[0].mxu0
    %v1597 = vadd.f32 0.0, %v1596
    %v1598 = vpop.f32.mrb[0].mxu0
    %v1599 = vpop.f32.mrb[0].mxu0
    %1600 = vdwg.mxu0
    %1601 = vmatprep.subr.bf16.mxu0 %v1233
    %1602 = vmatpush1.bf16.msra.mxu0 %v1232
    %1603 = vmatprep.subr.bf16.mxu0 %v1237
    %1604 = vmatpush1.bf16.msra.mxu0 %v1236
    %1605 = vmatprep.subr.bf16.mxu0 %v1241
    %1606 = vmatpush1.bf16.msra.mxu0 %v1240
    %1607 = vmatprep.subr.bf16.mxu0 %v1245
    %1608 = vmatpush1.bf16.msra.mxu0 %v1244
    %1609 = vmatprep.subr.bf16.mxu0 %v1249
    %1610 = vmatpush1.bf16.msra.mxu0 %v1248
    %1611 = vmatprep.subr.bf16.mxu0 %v1253
    %1612 = vmatpush1.bf16.msra.mxu0 %v1252
    %1613 = vmatprep.subr.bf16.mxu0 %v1257
    %1614 = vmatpush1.bf16.msra.mxu0 %v1256
    %1615 = vmatprep.subr.bf16.mxu0 %v1261
    %1616 = vmatpush1.bf16.msra.mxu0 %v1260
    %1617 = vmatprep.subr.bf16.mxu0 0
    %1618 = vmatpush1.bf16.msra.mxu0 0
    %1619 = vmatprep.subr.bf16.mxu0 0
    %1620 = vmatpush1.bf16.msra.mxu0 0
    %1621 = vmatprep.subr.bf16.mxu0 0
    %1622 = vmatpush1.bf16.msra.mxu0 0
    %1623 = vmatprep.subr.bf16.mxu0 0
    %1624 = vmatpush1.bf16.msra.mxu0 0
    %1625 = vmatprep.subr.bf16.mxu0 0
    %1626 = vmatpush1.bf16.msra.mxu0 0
    %1627 = vmatprep.subr.bf16.mxu0 0
    %1628 = vmatpush1.bf16.msra.mxu0 0
    %1629 = vmatprep.subr.bf16.mxu0 0
    %1630 = vmatpush1.bf16.msra.mxu0 0
    %1631 = vmatprep.subr.bf16.mxu0 0
    %1632 = vmatpush1.bf16.msra.mxu0 0
    %1633 = vmatprep.mubr.bf16.mxu0 0
    %1634 = vmatmul.mubr.bf16.gmra.mrb[0].mxu0 %v1517
    %v1635 = vpop.f32.mrb[0].mxu0
    %v1636 = vadd.f32 %v1554, %v1635
    %v1637 = vpop.f32.mrb[0].mxu0
    %v1638 = vadd.f32 %v1556, %v1637
    %v1639 = vpop.f32.mrb[0].mxu0
    %v1640 = vpop.f32.mrb[0].mxu0
    %1641 = vdwg.mxu0
    %1642 = vmatprep.subr.bf16.mxu0 %v1235
    %1643 = vmatpush1.bf16.msra.mxu0 %v1234
    %1644 = vmatprep.subr.bf16.mxu0 %v1239
    %1645 = vmatpush1.bf16.msra.mxu0 %v1238
    %1646 = vmatprep.subr.bf16.mxu0 %v1243
    %1647 = vmatpush1.bf16.msra.mxu0 %v1242
    %1648 = vmatprep.subr.bf16.mxu0 %v1247
    %1649 = vmatpush1.bf16.msra.mxu0 %v1246
    %1650 = vmatprep.subr.bf16.mxu0 %v1251
    %1651 = vmatpush1.bf16.msra.mxu0 %v1250
    %1652 = vmatprep.subr.bf16.mxu0 %v1255
    %1653 = vmatpush1.bf16.msra.mxu0 %v1254
    %1654 = vmatprep.subr.bf16.mxu0 %v1259
    %1655 = vmatpush1.bf16.msra.mxu0 %v1258
    %1656 = vmatprep.subr.bf16.mxu0 %v1263
    %1657 = vmatpush1.bf16.msra.mxu0 %v1262
    %1658 = vmatprep.subr.bf16.mxu0 0
    %1659 = vmatpush1.bf16.msra.mxu0 0
    %1660 = vmatprep.subr.bf16.mxu0 0
    %1661 = vmatpush1.bf16.msra.mxu0 0
    %1662 = vmatprep.subr.bf16.mxu0 0
    %1663 = vmatpush1.bf16.msra.mxu0 0
    %1664 = vmatprep.subr.bf16.mxu0 0
    %1665 = vmatpush1.bf16.msra.mxu0 0
    %1666 = vmatprep.subr.bf16.mxu0 0
    %1667 = vmatpush1.bf16.msra.mxu0 0
    %1668 = vmatprep.subr.bf16.mxu0 0
    %1669 = vmatpush1.bf16.msra.mxu0 0
    %1670 = vmatprep.subr.bf16.mxu0 0
    %1671 = vmatpush1.bf16.msra.mxu0 0
    %1672 = vmatprep.subr.bf16.mxu0 0
    %1673 = vmatpush1.bf16.msra.mxu0 0
    %1674 = vmatprep.mubr.bf16.mxu0 0
    %1675 = vmatmul.mubr.bf16.gmra.mrb[0].mxu0 %v1517
    %v1676 = vpop.f32.mrb[0].mxu0
    %v1677 = vadd.f32 %v1595, %v1676
    %v1678 = vpop.f32.mrb[0].mxu0
    %v1679 = vadd.f32 %v1597, %v1678
    %v1680 = vpop.f32.mrb[0].mxu0
    %v1681 = vpop.f32.mrb[0].mxu0
    %1682 = vdwg.mxu0
    %v1683 = vadd.f32 %v1636, %v600
    %v1684 = vadd.f32 %v1638, %v604
    %v1685 = vadd.f32 %v1677, %v608
    %v1686 = vadd.f32 %v1679, %v612
    %v1687 = vxor.u32 %v1683, 2147483648
    %v1688 = vmul.f32 %v1687, 1.442695
    %v1689 = vpow.pop %v1688
    %v1690 = vadd.f32 %v1689, 1.0
    %v1691 = vrcp.pop %v1690
    %v1692 = vmul.f32 1.0, %v1691
    %v1693 = vxor.u32 %v1684, 2147483648
    %v1694 = vmul.f32 %v1693, 1.442695
    %v1695 = vpow.pop %v1694
    %v1696 = vadd.f32 %v1695, 1.0
    %v1697 = vrcp.pop %v1696
    %v1698 = vmul.f32 1.0, %v1697
    %v1699 = vtanh.pop %v1685
    %v1700 = vxor.u32 %v1686, 2147483648
    %v1701 = vmul.f32 %v1700, 1.442695
    %v1702 = vpow.pop %v1701
    %v1703 = vadd.f32 %v1702, 1.0
    %v1704 = vrcp.pop %v1703
    %v1705 = vmul.f32 1.0, %v1704
    %v1706 = vmul.f32 %v1698, %v1403
    %v1707 = vmul.f32 %v1692, %v1699
    %v1708 = vadd.f32 %v1706, %v1707
    %v1709 = vtanh.pop %v1708
    %v1710 = vmul.f32 %v1705, %v1709
    %s1711 = scalar_lea.vmem [#allocation18], 8
    %1712 = vst [vmem:[%s1711] sm:$0xff] %v1710
    %1713 = vmatprep.subr.bf16.mxu0 %v719
    %1714 = vmatpush1.bf16.msra.mxu0 %v718
    %1715 = vmatprep.subr.bf16.mxu0 %v723
    %1716 = vmatpush1.bf16.msra.mxu0 %v722
    %1717 = vmatprep.subr.bf16.mxu0 %v727
    %1718 = vmatpush1.bf16.msra.mxu0 %v726
    %1719 = vmatprep.subr.bf16.mxu0 %v731
    %1720 = vmatpush1.bf16.msra.mxu0 %v730
    %1721 = vmatprep.subr.bf16.mxu0 %v735
    %1722 = vmatpush1.bf16.msra.mxu0 %v734
    %1723 = vmatprep.subr.bf16.mxu0 %v739
    %1724 = vmatpush1.bf16.msra.mxu0 %v738
    %1725 = vmatprep.subr.bf16.mxu0 %v743
    %1726 = vmatpush1.bf16.msra.mxu0 %v742
    %1727 = vmatprep.subr.bf16.mxu0 %v747
    %1728 = vmatpush1.bf16.msra.mxu0 %v746
    %1729 = vmatprep.subr.bf16.mxu0 0
    %1730 = vmatpush1.bf16.msra.mxu0 0
    %1731 = vmatprep.subr.bf16.mxu0 0
    %1732 = vmatpush1.bf16.msra.mxu0 0
    %1733 = vmatprep.subr.bf16.mxu0 0
    %1734 = vmatpush1.bf16.msra.mxu0 0
    %1735 = vmatprep.subr.bf16.mxu0 0
    %1736 = vmatpush1.bf16.msra.mxu0 0
    %1737 = vmatprep.subr.bf16.mxu0 0
    %1738 = vmatpush1.bf16.msra.mxu0 0
    %1739 = vmatprep.subr.bf16.mxu0 0
    %1740 = vmatpush1.bf16.msra.mxu0 0
    %1741 = vmatprep.subr.bf16.mxu0 0
    %1742 = vmatpush1.bf16.msra.mxu0 0
    %1743 = vmatprep.subr.bf16.mxu0 0
    %1744 = vmatpush1.bf16.msra.mxu0 0
    %1745 = vmatprep.mubr.bf16.mxu0 0
    %1746 = vmatmul.mubr.bf16.gmra.mrb[0].mxu0 %v1517
    %v1747 = vpop.f32.mrb[0].mxu0
    %v1748 = vadd.f32 0.0, %v1747
    %v1749 = vpop.f32.mrb[0].mxu0
    %v1750 = vadd.f32 0.0, %v1749
    %v1751 = vpop.f32.mrb[0].mxu0
    %v1752 = vpop.f32.mrb[0].mxu0
    %1753 = vdwg.mxu0
    %1754 = vmatprep.subr.bf16.mxu0 %v721
    %1755 = vmatpush1.bf16.msra.mxu0 %v720
    %1756 = vmatprep.subr.bf16.mxu0 %v725
    %1757 = vmatpush1.bf16.msra.mxu0 %v724
    %1758 = vmatprep.subr.bf16.mxu0 %v729
    %1759 = vmatpush1.bf16.msra.mxu0 %v728
    %1760 = vmatprep.subr.bf16.mxu0 %v733
    %1761 = vmatpush1.bf16.msra.mxu0 %v732
    %1762 = vmatprep.subr.bf16.mxu0 %v737
    %1763 = vmatpush1.bf16.msra.mxu0 %v736
    %1764 = vmatprep.subr.bf16.mxu0 %v741
    %1765 = vmatpush1.bf16.msra.mxu0 %v740
    %1766 = vmatprep.subr.bf16.mxu0 %v745
    %1767 = vmatpush1.bf16.msra.mxu0 %v744
    %1768 = vmatprep.subr.bf16.mxu0 %v749
    %1769 = vmatpush1.bf16.msra.mxu0 %v748
    %1770 = vmatprep.subr.bf16.mxu0 0
    %1771 = vmatpush1.bf16.msra.mxu0 0
    %1772 = vmatprep.subr.bf16.mxu0 0
    %1773 = vmatpush1.bf16.msra.mxu0 0
    %1774 = vmatprep.subr.bf16.mxu0 0
    %1775 = vmatpush1.bf16.msra.mxu0 0
    %1776 = vmatprep.subr.bf16.mxu0 0
    %1777 = vmatpush1.bf16.msra.mxu0 0
    %1778 = vmatprep.subr.bf16.mxu0 0
    %1779 = vmatpush1.bf16.msra.mxu0 0
    %1780 = vmatprep.subr.bf16.mxu0 0
    %1781 = vmatpush1.bf16.msra.mxu0 0
    %1782 = vmatprep.subr.bf16.mxu0 0
    %1783 = vmatpush1.bf16.msra.mxu0 0
    %1784 = vmatprep.subr.bf16.mxu0 0
    %1785 = vmatpush1.bf16.msra.mxu0 0
    %1786 = vmatprep.mubr.bf16.mxu0 0
    %1787 = vmatmul.mubr.bf16.gmra.mrb[0].mxu0 %v1517
    %v1788 = vpop.f32.mrb[0].mxu0
    %v1789 = vadd.f32 0.0, %v1788
    %v1790 = vpop.f32.mrb[0].mxu0
    %v1791 = vadd.f32 0.0, %v1790
    %v1792 = vpop.f32.mrb[0].mxu0
    %v1793 = vpop.f32.mrb[0].mxu0
    %1794 = vdwg.mxu0
    %v1795 = vadd.f32 %v495, %v1748
    %v1796 = vadd.f32 %v496, %v1750
    %v1797 = vadd.f32 %v497, %v1789
    %v1798 = vadd.f32 %v498, %v1791
    %v1799 = vxor.u32 %v1795, 2147483648
    %v1800 = vmul.f32 %v1799, 1.442695
    %v1801 = vpow.pop %v1800
    %v1802 = vadd.f32 %v1801, 1.0
    %v1803 = vrcp.pop %v1802
    %v1804 = vmul.f32 1.0, %v1803
    %v1805 = vxor.u32 %v1796, 2147483648
    %v1806 = vmul.f32 %v1805, 1.442695
    %v1807 = vpow.pop %v1806
    %v1808 = vadd.f32 %v1807, 1.0
    %v1809 = vrcp.pop %v1808
    %v1810 = vmul.f32 1.0, %v1809
    %v1811 = vtanh.pop %v1797
    %v1812 = vxor.u32 %v1798, 2147483648
    %v1813 = vmul.f32 %v1812, 1.442695
    %v1814 = vpow.pop %v1813
    %v1815 = vadd.f32 %v1814, 1.0
    %v1816 = vrcp.pop %v1815
    %v1817 = vmul.f32 1.0, %v1816
    %v1818 = vmul.f32 %v1810, %v1514
    %v1819 = vmul.f32 %v1804, %v1811
    %v1820 = vadd.f32 %v1818, %v1819
    %v1821 = vtanh.pop %v1820
    %v1822 = vmul.f32 %v1817, %v1821
    %v1823 = vpack.c.bf16 %v1822, %v1822
    %v1824 = vpack.c.bf16 %v1710, %v1710
    %1825 = vmatprep.subr.bf16.mxu0 %v991
    %1826 = vmatpush1.bf16.msra.mxu0 %v990
    %1827 = vmatprep.subr.bf16.mxu0 %v995
    %1828 = vmatpush1.bf16.msra.mxu0 %v994
    %1829 = vmatprep.subr.bf16.mxu0 %v999
    %1830 = vmatpush1.bf16.msra.mxu0 %v998
    %1831 = vmatprep.subr.bf16.mxu0 %v1003
    %1832 = vmatpush1.bf16.msra.mxu0 %v1002
    %1833 = vmatprep.subr.bf16.mxu0 %v1007
    %1834 = vmatpush1.bf16.msra.mxu0 %v1006
    %1835 = vmatprep.subr.bf16.mxu0 %v1011
    %1836 = vmatpush1.bf16.msra.mxu0 %v1010
    %1837 = vmatprep.subr.bf16.mxu0 %v1015
    %1838 = vmatpush1.bf16.msra.mxu0 %v1014
    %1839 = vmatprep.subr.bf16.mxu0 %v1019
    %1840 = vmatpush1.bf16.msra.mxu0 %v1018
    %1841 = vmatprep.subr.bf16.mxu0 0
    %1842 = vmatpush1.bf16.msra.mxu0 0
    %1843 = vmatprep.subr.bf16.mxu0 0
    %1844 = vmatpush1.bf16.msra.mxu0 0
    %1845 = vmatprep.subr.bf16.mxu0 0
    %1846 = vmatpush1.bf16.msra.mxu0 0
    %1847 = vmatprep.subr.bf16.mxu0 0
    %1848 = vmatpush1.bf16.msra.mxu0 0
    %1849 = vmatprep.subr.bf16.mxu0 0
    %1850 = vmatpush1.bf16.msra.mxu0 0
    %1851 = vmatprep.subr.bf16.mxu0 0
    %1852 = vmatpush1.bf16.msra.mxu0 0
    %1853 = vmatprep.subr.bf16.mxu0 0
    %1854 = vmatpush1.bf16.msra.mxu0 0
    %1855 = vmatprep.subr.bf16.mxu0 0
    %1856 = vmatpush1.bf16.msra.mxu0 0
    %1857 = vmatprep.mubr.bf16.mxu0 0
    %1858 = vmatmul.mubr.bf16.gmra.mrb[0].mxu0 %v1824
    %v1859 = vpop.f32.mrb[0].mxu0
    %v1860 = vadd.f32 0.0, %v1859
    %v1861 = vpop.f32.mrb[0].mxu0
    %v1862 = vadd.f32 0.0, %v1861
    %v1863 = vpop.f32.mrb[0].mxu0
    %v1864 = vpop.f32.mrb[0].mxu0
    %1865 = vdwg.mxu0
    %1866 = vmatprep.subr.bf16.mxu0 %v993
    %1867 = vmatpush1.bf16.msra.mxu0 %v992
    %1868 = vmatprep.subr.bf16.mxu0 %v997
    %1869 = vmatpush1.bf16.msra.mxu0 %v996
    %1870 = vmatprep.subr.bf16.mxu0 %v1001
    %1871 = vmatpush1.bf16.msra.mxu0 %v1000
    %1872 = vmatprep.subr.bf16.mxu0 %v1005
    %1873 = vmatpush1.bf16.msra.mxu0 %v1004
    %1874 = vmatprep.subr.bf16.mxu0 %v1009
    %1875 = vmatpush1.bf16.msra.mxu0 %v1008
    %1876 = vmatprep.subr.bf16.mxu0 %v1013
    %1877 = vmatpush1.bf16.msra.mxu0 %v1012
    %1878 = vmatprep.subr.bf16.mxu0 %v1017
    %1879 = vmatpush1.bf16.msra.mxu0 %v1016
    %1880 = vmatprep.subr.bf16.mxu0 %v1021
    %1881 = vmatpush1.bf16.msra.mxu0 %v1020
    %1882 = vmatprep.subr.bf16.mxu0 0
    %1883 = vmatpush1.bf16.msra.mxu0 0
    %1884 = vmatprep.subr.bf16.mxu0 0
    %1885 = vmatpush1.bf16.msra.mxu0 0
    %1886 = vmatprep.subr.bf16.mxu0 0
    %1887 = vmatpush1.bf16.msra.mxu0 0
    %1888 = vmatprep.subr.bf16.mxu0 0
    %1889 = vmatpush1.bf16.msra.mxu0 0
    %1890 = vmatprep.subr.bf16.mxu0 0
    %1891 = vmatpush1.bf16.msra.mxu0 0
    %1892 = vmatprep.subr.bf16.mxu0 0
    %1893 = vmatpush1.bf16.msra.mxu0 0
    %1894 = vmatprep.subr.bf16.mxu0 0
    %1895 = vmatpush1.bf16.msra.mxu0 0
    %1896 = vmatprep.subr.bf16.mxu0 0
    %1897 = vmatpush1.bf16.msra.mxu0 0
    %1898 = vmatprep.mubr.bf16.mxu0 0
    %1899 = vmatmul.mubr.bf16.gmra.mrb[0].mxu0 %v1824
    %v1900 = vpop.f32.mrb[0].mxu0
    %v1901 = vadd.f32 0.0, %v1900
    %v1902 = vpop.f32.mrb[0].mxu0
    %v1903 = vadd.f32 0.0, %v1902
    %v1904 = vpop.f32.mrb[0].mxu0
    %v1905 = vpop.f32.mrb[0].mxu0
    %1906 = vdwg.mxu0
    %1907 = vmatprep.subr.bf16.mxu0 %v1233
    %1908 = vmatpush1.bf16.msra.mxu0 %v1232
    %1909 = vmatprep.subr.bf16.mxu0 %v1237
    %1910 = vmatpush1.bf16.msra.mxu0 %v1236
    %1911 = vmatprep.subr.bf16.mxu0 %v1241
    %1912 = vmatpush1.bf16.msra.mxu0 %v1240
    %1913 = vmatprep.subr.bf16.mxu0 %v1245
    %1914 = vmatpush1.bf16.msra.mxu0 %v1244
    %1915 = vmatprep.subr.bf16.mxu0 %v1249
    %1916 = vmatpush1.bf16.msra.mxu0 %v1248
    %1917 = vmatprep.subr.bf16.mxu0 %v1253
    %1918 = vmatpush1.bf16.msra.mxu0 %v1252
    %1919 = vmatprep.subr.bf16.mxu0 %v1257
    %1920 = vmatpush1.bf16.msra.mxu0 %v1256
    %1921 = vmatprep.subr.bf16.mxu0 %v1261
    %1922 = vmatpush1.bf16.msra.mxu0 %v1260
    %1923 = vmatprep.subr.bf16.mxu0 0
    %1924 = vmatpush1.bf16.msra.mxu0 0
    %1925 = vmatprep.subr.bf16.mxu0 0
    %1926 = vmatpush1.bf16.msra.mxu0 0
    %1927 = vmatprep.subr.bf16.mxu0 0
    %1928 = vmatpush1.bf16.msra.mxu0 0
    %1929 = vmatprep.subr.bf16.mxu0 0
    %1930 = vmatpush1.bf16.msra.mxu0 0
    %1931 = vmatprep.subr.bf16.mxu0 0
    %1932 = vmatpush1.bf16.msra.mxu0 0
    %1933 = vmatprep.subr.bf16.mxu0 0
    %1934 = vmatpush1.bf16.msra.mxu0 0
    %1935 = vmatprep.subr.bf16.mxu0 0
    %1936 = vmatpush1.bf16.msra.mxu0 0
    %1937 = vmatprep.subr.bf16.mxu0 0
    %1938 = vmatpush1.bf16.msra.mxu0 0
    %1939 = vmatprep.mubr.bf16.mxu0 0
    %1940 = vmatmul.mubr.bf16.gmra.mrb[0].mxu0 %v1823
    %v1941 = vpop.f32.mrb[0].mxu0
    %v1942 = vadd.f32 %v1860, %v1941
    %v1943 = vpop.f32.mrb[0].mxu0
    %v1944 = vadd.f32 %v1862, %v1943
    %v1945 = vpop.f32.mrb[0].mxu0
    %v1946 = vpop.f32.mrb[0].mxu0
    %1947 = vdwg.mxu0
    %1948 = vmatprep.subr.bf16.mxu0 %v1235
    %1949 = vmatpush1.bf16.msra.mxu0 %v1234
    %1950 = vmatprep.subr.bf16.mxu0 %v1239
    %1951 = vmatpush1.bf16.msra.mxu0 %v1238
    %1952 = vmatprep.subr.bf16.mxu0 %v1243
    %1953 = vmatpush1.bf16.msra.mxu0 %v1242
    %1954 = vmatprep.subr.bf16.mxu0 %v1247
    %1955 = vmatpush1.bf16.msra.mxu0 %v1246
    %1956 = vmatprep.subr.bf16.mxu0 %v1251
    %1957 = vmatpush1.bf16.msra.mxu0 %v1250
    %1958 = vmatprep.subr.bf16.mxu0 %v1255
    %1959 = vmatpush1.bf16.msra.mxu0 %v1254
    %1960 = vmatprep.subr.bf16.mxu0 %v1259
    %1961 = vmatpush1.bf16.msra.mxu0 %v1258
    %1962 = vmatprep.subr.bf16.mxu0 %v1263
    %1963 = vmatpush1.bf16.msra.mxu0 %v1262
    %1964 = vmatprep.subr.bf16.mxu0 0
    %1965 = vmatpush1.bf16.msra.mxu0 0
    %1966 = vmatprep.subr.bf16.mxu0 0
    %1967 = vmatpush1.bf16.msra.mxu0 0
    %1968 = vmatprep.subr.bf16.mxu0 0
    %1969 = vmatpush1.bf16.msra.mxu0 0
    %1970 = vmatprep.subr.bf16.mxu0 0
    %1971 = vmatpush1.bf16.msra.mxu0 0
    %1972 = vmatprep.subr.bf16.mxu0 0
    %1973 = vmatpush1.bf16.msra.mxu0 0
    %1974 = vmatprep.subr.bf16.mxu0 0
    %1975 = vmatpush1.bf16.msra.mxu0 0
    %1976 = vmatprep.subr.bf16.mxu0 0
    %1977 = vmatpush1.bf16.msra.mxu0 0
    %1978 = vmatprep.subr.bf16.mxu0 0
    %1979 = vmatpush1.bf16.msra.mxu0 0
    %1980 = vmatprep.mubr.bf16.mxu0 0
    %1981 = vmatmul.mubr.bf16.gmra.mrb[0].mxu0 %v1823
    %v1982 = vpop.f32.mrb[0].mxu0
    %v1983 = vadd.f32 %v1901, %v1982
    %v1984 = vpop.f32.mrb[0].mxu0
    %v1985 = vadd.f32 %v1903, %v1984
    %v1986 = vpop.f32.mrb[0].mxu0
    %v1987 = vpop.f32.mrb[0].mxu0
    %1988 = vdwg.mxu0
    %v1989 = vadd.f32 %v1942, %v600
    %v1990 = vadd.f32 %v1944, %v604
    %v1991 = vadd.f32 %v1983, %v608
    %v1992 = vadd.f32 %v1985, %v612
    %v1993 = vxor.u32 %v1989, 2147483648
    %v1994 = vmul.f32 %v1993, 1.442695
    %v1995 = vpow.pop %v1994
    %v1996 = vadd.f32 %v1995, 1.0
    %v1997 = vrcp.pop %v1996
    %v1998 = vmul.f32 1.0, %v1997
    %v1999 = vxor.u32 %v1990, 2147483648
    %v2000 = vmul.f32 %v1999, 1.442695
    %v2001 = vpow.pop %v2000
    %v2002 = vadd.f32 %v2001, 1.0
    %v2003 = vrcp.pop %v2002
    %v2004 = vmul.f32 1.0, %v2003
    %v2005 = vtanh.pop %v1991
    %v2006 = vxor.u32 %v1992, 2147483648
    %v2007 = vmul.f32 %v2006, 1.442695
    %v2008 = vpow.pop %v2007
    %v2009 = vadd.f32 %v2008, 1.0
    %v2010 = vrcp.pop %v2009
    %v2011 = vmul.f32 1.0, %v2010
    %v2012 = vmul.f32 %v2004, %v1708
    %v2013 = vmul.f32 %v1998, %v2005
    %v2014 = vadd.f32 %v2012, %v2013
    %v2015 = vtanh.pop %v2014
    %v2016 = vmul.f32 %v2011, %v2015
    %s2017 = scalar_lea.vmem [#allocation18], 16
    %2018 = vst [vmem:[%s2017] sm:$0xff] %v2016
    %2019 = vmatprep.subr.bf16.mxu0 %v719
    %2020 = vmatpush1.bf16.msra.mxu0 %v718
    %2021 = vmatprep.subr.bf16.mxu0 %v723
    %2022 = vmatpush1.bf16.msra.mxu0 %v722
    %2023 = vmatprep.subr.bf16.mxu0 %v727
    %2024 = vmatpush1.bf16.msra.mxu0 %v726
    %2025 = vmatprep.subr.bf16.mxu0 %v731
    %2026 = vmatpush1.bf16.msra.mxu0 %v730
    %2027 = vmatprep.subr.bf16.mxu0 %v735
    %2028 = vmatpush1.bf16.msra.mxu0 %v734
    %2029 = vmatprep.subr.bf16.mxu0 %v739
    %2030 = vmatpush1.bf16.msra.mxu0 %v738
    %2031 = vmatprep.subr.bf16.mxu0 %v743
    %2032 = vmatpush1.bf16.msra.mxu0 %v742
    %2033 = vmatprep.subr.bf16.mxu0 %v747
    %2034 = vmatpush1.bf16.msra.mxu0 %v746
    %2035 = vmatprep.subr.bf16.mxu0 0
    %2036 = vmatpush1.bf16.msra.mxu0 0
    %2037 = vmatprep.subr.bf16.mxu0 0
    %2038 = vmatpush1.bf16.msra.mxu0 0
    %2039 = vmatprep.subr.bf16.mxu0 0
    %2040 = vmatpush1.bf16.msra.mxu0 0
    %2041 = vmatprep.subr.bf16.mxu0 0
    %2042 = vmatpush1.bf16.msra.mxu0 0
    %2043 = vmatprep.subr.bf16.mxu0 0
    %2044 = vmatpush1.bf16.msra.mxu0 0
    %2045 = vmatprep.subr.bf16.mxu0 0
    %2046 = vmatpush1.bf16.msra.mxu0 0
    %2047 = vmatprep.subr.bf16.mxu0 0
    %2048 = vmatpush1.bf16.msra.mxu0 0
    %2049 = vmatprep.subr.bf16.mxu0 0
    %2050 = vmatpush1.bf16.msra.mxu0 0
    %2051 = vmatprep.mubr.bf16.mxu0 0
    %2052 = vmatmul.mubr.bf16.gmra.mrb[0].mxu0 %v1823
    %v2053 = vpop.f32.mrb[0].mxu0
    %v2054 = vadd.f32 0.0, %v2053
    %v2055 = vpop.f32.mrb[0].mxu0
    %v2056 = vadd.f32 0.0, %v2055
    %v2057 = vpop.f32.mrb[0].mxu0
    %v2058 = vpop.f32.mrb[0].mxu0
    %2059 = vdwg.mxu0
    %2060 = vmatprep.subr.bf16.mxu0 %v721
    %2061 = vmatpush1.bf16.msra.mxu0 %v720
    %2062 = vmatprep.subr.bf16.mxu0 %v725
    %2063 = vmatpush1.bf16.msra.mxu0 %v724
    %2064 = vmatprep.subr.bf16.mxu0 %v729
    %2065 = vmatpush1.bf16.msra.mxu0 %v728
    %2066 = vmatprep.subr.bf16.mxu0 %v733
    %2067 = vmatpush1.bf16.msra.mxu0 %v732
    %2068 = vmatprep.subr.bf16.mxu0 %v737
    %2069 = vmatpush1.bf16.msra.mxu0 %v736
    %2070 = vmatprep.subr.bf16.mxu0 %v741
    %2071 = vmatpush1.bf16.msra.mxu0 %v740
    %2072 = vmatprep.subr.bf16.mxu0 %v745
    %2073 = vmatpush1.bf16.msra.mxu0 %v744
    %2074 = vmatprep.subr.bf16.mxu0 %v749
    %2075 = vmatpush1.bf16.msra.mxu0 %v748
    %2076 = vmatprep.subr.bf16.mxu0 0
    %2077 = vmatpush1.bf16.msra.mxu0 0
    %2078 = vmatprep.subr.bf16.mxu0 0
    %2079 = vmatpush1.bf16.msra.mxu0 0
    %2080 = vmatprep.subr.bf16.mxu0 0
    %2081 = vmatpush1.bf16.msra.mxu0 0
    %2082 = vmatprep.subr.bf16.mxu0 0
    %2083 = vmatpush1.bf16.msra.mxu0 0
    %2084 = vmatprep.subr.bf16.mxu0 0
    %2085 = vmatpush1.bf16.msra.mxu0 0
    %2086 = vmatprep.subr.bf16.mxu0 0
    %2087 = vmatpush1.bf16.msra.mxu0 0
    %2088 = vmatprep.subr.bf16.mxu0 0
    %2089 = vmatpush1.bf16.msra.mxu0 0
    %2090 = vmatprep.subr.bf16.mxu0 0
    %2091 = vmatpush1.bf16.msra.mxu0 0
    %2092 = vmatprep.mubr.bf16.mxu0 0
    %2093 = vmatmul.mubr.bf16.gmra.mrb[0].mxu0 %v1823
    %v2094 = vpop.f32.mrb[0].mxu0
    %v2095 = vadd.f32 0.0, %v2094
    %v2096 = vpop.f32.mrb[0].mxu0
    %v2097 = vadd.f32 0.0, %v2096
    %v2098 = vpop.f32.mrb[0].mxu0
    %v2099 = vpop.f32.mrb[0].mxu0
    %2100 = vdwg.mxu0
    %v2101 = vadd.f32 %v495, %v2054
    %v2102 = vadd.f32 %v496, %v2056
    %v2103 = vadd.f32 %v497, %v2095
    %v2104 = vadd.f32 %v498, %v2097
    %v2105 = vxor.u32 %v2101, 2147483648
    %v2106 = vmul.f32 %v2105, 1.442695
    %v2107 = vpow.pop %v2106
    %v2108 = vadd.f32 %v2107, 1.0
    %v2109 = vrcp.pop %v2108
    %v2110 = vmul.f32 1.0, %v2109
    %v2111 = vxor.u32 %v2102, 2147483648
    %v2112 = vmul.f32 %v2111, 1.442695
    %v2113 = vpow.pop %v2112
    %v2114 = vadd.f32 %v2113, 1.0
    %v2115 = vrcp.pop %v2114
    %v2116 = vmul.f32 1.0, %v2115
    %v2117 = vtanh.pop %v2103
    %v2118 = vxor.u32 %v2104, 2147483648
    %v2119 = vmul.f32 %v2118, 1.442695
    %v2120 = vpow.pop %v2119
    %v2121 = vadd.f32 %v2120, 1.0
    %v2122 = vrcp.pop %v2121
    %v2123 = vmul.f32 1.0, %v2122
    %v2124 = vmul.f32 %v2116, %v1820
    %v2125 = vmul.f32 %v2110, %v2117
    %v2126 = vadd.f32 %v2124, %v2125
    %v2127 = vtanh.pop %v2126
    %v2128 = vmul.f32 %v2123, %v2127
    %v2129 = vpack.c.bf16 %v2128, %v2128
    %v2130 = vpack.c.bf16 %v2016, %v2016
    %2131 = vmatprep.subr.bf16.mxu0 %v991
    %2132 = vmatpush1.bf16.msra.mxu0 %v990
    %2133 = vmatprep.subr.bf16.mxu0 %v995
    %2134 = vmatpush1.bf16.msra.mxu0 %v994
    %2135 = vmatprep.subr.bf16.mxu0 %v999
    %2136 = vmatpush1.bf16.msra.mxu0 %v998
    %2137 = vmatprep.subr.bf16.mxu0 %v1003
    %2138 = vmatpush1.bf16.msra.mxu0 %v1002
    %2139 = vmatprep.subr.bf16.mxu0 %v1007
    %2140 = vmatpush1.bf16.msra.mxu0 %v1006
    %2141 = vmatprep.subr.bf16.mxu0 %v1011
    %2142 = vmatpush1.bf16.msra.mxu0 %v1010
    %2143 = vmatprep.subr.bf16.mxu0 %v1015
    %2144 = vmatpush1.bf16.msra.mxu0 %v1014
    %2145 = vmatprep.subr.bf16.mxu0 %v1019
    %2146 = vmatpush1.bf16.msra.mxu0 %v1018
    %2147 = vmatprep.subr.bf16.mxu0 0
    %2148 = vmatpush1.bf16.msra.mxu0 0
    %2149 = vmatprep.subr.bf16.mxu0 0
    %2150 = vmatpush1.bf16.msra.mxu0 0
    %2151 = vmatprep.subr.bf16.mxu0 0
    %2152 = vmatpush1.bf16.msra.mxu0 0
    %2153 = vmatprep.subr.bf16.mxu0 0
    %2154 = vmatpush1.bf16.msra.mxu0 0
    %2155 = vmatprep.subr.bf16.mxu0 0
    %2156 = vmatpush1.bf16.msra.mxu0 0
    %2157 = vmatprep.subr.bf16.mxu0 0
    %2158 = vmatpush1.bf16.msra.mxu0 0
    %2159 = vmatprep.subr.bf16.mxu0 0
    %2160 = vmatpush1.bf16.msra.mxu0 0
    %2161 = vmatprep.subr.bf16.mxu0 0
    %2162 = vmatpush1.bf16.msra.mxu0 0
    %2163 = vmatprep.mubr.bf16.mxu0 0
    %2164 = vmatmul.mubr.bf16.gmra.mrb[0].mxu0 %v2130
    %v2165 = vpop.f32.mrb[0].mxu0
    %v2166 = vadd.f32 0.0, %v2165
    %v2167 = vpop.f32.mrb[0].mxu0
    %v2168 = vadd.f32 0.0, %v2167
    %v2169 = vpop.f32.mrb[0].mxu0
    %v2170 = vpop.f32.mrb[0].mxu0
    %2171 = vdwg.mxu0
    %2172 = vmatprep.subr.bf16.mxu0 %v993
    %2173 = vmatpush1.bf16.msra.mxu0 %v992
    %2174 = vmatprep.subr.bf16.mxu0 %v997
    %2175 = vmatpush1.bf16.msra.mxu0 %v996
    %2176 = vmatprep.subr.bf16.mxu0 %v1001
    %2177 = vmatpush1.bf16.msra.mxu0 %v1000
    %2178 = vmatprep.subr.bf16.mxu0 %v1005
    %2179 = vmatpush1.bf16.msra.mxu0 %v1004
    %2180 = vmatprep.subr.bf16.mxu0 %v1009
    %2181 = vmatpush1.bf16.msra.mxu0 %v1008
    %2182 = vmatprep.subr.bf16.mxu0 %v1013
    %2183 = vmatpush1.bf16.msra.mxu0 %v1012
    %2184 = vmatprep.subr.bf16.mxu0 %v1017
    %2185 = vmatpush1.bf16.msra.mxu0 %v1016
    %2186 = vmatprep.subr.bf16.mxu0 %v1021
    %2187 = vmatpush1.bf16.msra.mxu0 %v1020
    %2188 = vmatprep.subr.bf16.mxu0 0
    %2189 = vmatpush1.bf16.msra.mxu0 0
    %2190 = vmatprep.subr.bf16.mxu0 0
    %2191 = vmatpush1.bf16.msra.mxu0 0
    %2192 = vmatprep.subr.bf16.mxu0 0
    %2193 = vmatpush1.bf16.msra.mxu0 0
    %2194 = vmatprep.subr.bf16.mxu0 0
    %2195 = vmatpush1.bf16.msra.mxu0 0
    %2196 = vmatprep.subr.bf16.mxu0 0
    %2197 = vmatpush1.bf16.msra.mxu0 0
    %2198 = vmatprep.subr.bf16.mxu0 0
    %2199 = vmatpush1.bf16.msra.mxu0 0
    %2200 = vmatprep.subr.bf16.mxu0 0
    %2201 = vmatpush1.bf16.msra.mxu0 0
    %2202 = vmatprep.subr.bf16.mxu0 0
    %2203 = vmatpush1.bf16.msra.mxu0 0
    %2204 = vmatprep.mubr.bf16.mxu0 0
    %2205 = vmatmul.mubr.bf16.gmra.mrb[0].mxu0 %v2130
    %v2206 = vpop.f32.mrb[0].mxu0
    %v2207 = vadd.f32 0.0, %v2206
    %v2208 = vpop.f32.mrb[0].mxu0
    %v2209 = vadd.f32 0.0, %v2208
    %v2210 = vpop.f32.mrb[0].mxu0
    %v2211 = vpop.f32.mrb[0].mxu0
    %2212 = vdwg.mxu0
    %2213 = vmatprep.subr.bf16.mxu0 %v1233
    %2214 = vmatpush1.bf16.msra.mxu0 %v1232
    %2215 = vmatprep.subr.bf16.mxu0 %v1237
    %2216 = vmatpush1.bf16.msra.mxu0 %v1236
    %2217 = vmatprep.subr.bf16.mxu0 %v1241
    %2218 = vmatpush1.bf16.msra.mxu0 %v1240
    %2219 = vmatprep.subr.bf16.mxu0 %v1245
    %2220 = vmatpush1.bf16.msra.mxu0 %v1244
    %2221 = vmatprep.subr.bf16.mxu0 %v1249
    %2222 = vmatpush1.bf16.msra.mxu0 %v1248
    %2223 = vmatprep.subr.bf16.mxu0 %v1253
    %2224 = vmatpush1.bf16.msra.mxu0 %v1252
    %2225 = vmatprep.subr.bf16.mxu0 %v1257
    %2226 = vmatpush1.bf16.msra.mxu0 %v1256
    %2227 = vmatprep.subr.bf16.mxu0 %v1261
    %2228 = vmatpush1.bf16.msra.mxu0 %v1260
    %2229 = vmatprep.subr.bf16.mxu0 0
    %2230 = vmatpush1.bf16.msra.mxu0 0
    %2231 = vmatprep.subr.bf16.mxu0 0
    %2232 = vmatpush1.bf16.msra.mxu0 0
    %2233 = vmatprep.subr.bf16.mxu0 0
    %2234 = vmatpush1.bf16.msra.mxu0 0
    %2235 = vmatprep.subr.bf16.mxu0 0
    %2236 = vmatpush1.bf16.msra.mxu0 0
    %2237 = vmatprep.subr.bf16.mxu0 0
    %2238 = vmatpush1.bf16.msra.mxu0 0
    %2239 = vmatprep.subr.bf16.mxu0 0
    %2240 = vmatpush1.bf16.msra.mxu0 0
    %2241 = vmatprep.subr.bf16.mxu0 0
    %2242 = vmatpush1.bf16.msra.mxu0 0
    %2243 = vmatprep.subr.bf16.mxu0 0
    %2244 = vmatpush1.bf16.msra.mxu0 0
    %2245 = vmatprep.mubr.bf16.mxu0 0
    %2246 = vmatmul.mubr.bf16.gmra.mrb[0].mxu0 %v2129
    %v2247 = vpop.f32.mrb[0].mxu0
    %v2248 = vadd.f32 %v2166, %v2247
    %v2249 = vpop.f32.mrb[0].mxu0
    %v2250 = vadd.f32 %v2168, %v2249
    %v2251 = vpop.f32.mrb[0].mxu0
    %v2252 = vpop.f32.mrb[0].mxu0
    %2253 = vdwg.mxu0
    %2254 = vmatprep.subr.bf16.mxu0 %v1235
    %2255 = vmatpush1.bf16.msra.mxu0 %v1234
    %2256 = vmatprep.subr.bf16.mxu0 %v1239
    %2257 = vmatpush1.bf16.msra.mxu0 %v1238
    %2258 = vmatprep.subr.bf16.mxu0 %v1243
    %2259 = vmatpush1.bf16.msra.mxu0 %v1242
    %2260 = vmatprep.subr.bf16.mxu0 %v1247
    %2261 = vmatpush1.bf16.msra.mxu0 %v1246
    %2262 = vmatprep.subr.bf16.mxu0 %v1251
    %2263 = vmatpush1.bf16.msra.mxu0 %v1250
    %2264 = vmatprep.subr.bf16.mxu0 %v1255
    %2265 = vmatpush1.bf16.msra.mxu0 %v1254
    %2266 = vmatprep.subr.bf16.mxu0 %v1259
    %2267 = vmatpush1.bf16.msra.mxu0 %v1258
    %2268 = vmatprep.subr.bf16.mxu0 %v1263
    %2269 = vmatpush1.bf16.msra.mxu0 %v1262
    %2270 = vmatprep.subr.bf16.mxu0 0
    %2271 = vmatpush1.bf16.msra.mxu0 0
    %2272 = vmatprep.subr.bf16.mxu0 0
    %2273 = vmatpush1.bf16.msra.mxu0 0
    %2274 = vmatprep.subr.bf16.mxu0 0
    %2275 = vmatpush1.bf16.msra.mxu0 0
    %2276 = vmatprep.subr.bf16.mxu0 0
    %2277 = vmatpush1.bf16.msra.mxu0 0
    %2278 = vmatprep.subr.bf16.mxu0 0
    %2279 = vmatpush1.bf16.msra.mxu0 0
    %2280 = vmatprep.subr.bf16.mxu0 0
    %2281 = vmatpush1.bf16.msra.mxu0 0
    %2282 = vmatprep.subr.bf16.mxu0 0
    %2283 = vmatpush1.bf16.msra.mxu0 0
    %2284 = vmatprep.subr.bf16.mxu0 0
    %2285 = vmatpush1.bf16.msra.mxu0 0
    %2286 = vmatprep.mubr.bf16.mxu0 0
    %2287 = vmatmul.mubr.bf16.gmra.mrb[0].mxu0 %v2129
    %v2288 = vpop.f32.mrb[0].mxu0
    %v2289 = vadd.f32 %v2207, %v2288
    %v2290 = vpop.f32.mrb[0].mxu0
    %v2291 = vadd.f32 %v2209, %v2290
    %v2292 = vpop.f32.mrb[0].mxu0
    %v2293 = vpop.f32.mrb[0].mxu0
    %2294 = vdwg.mxu0
    %v2295 = vadd.f32 %v2248, %v600
    %v2296 = vadd.f32 %v2250, %v604
    %v2297 = vadd.f32 %v2289, %v608
    %v2298 = vadd.f32 %v2291, %v612
    %v2299 = vxor.u32 %v2295, 2147483648
    %v2300 = vmul.f32 %v2299, 1.442695
    %v2301 = vpow.pop %v2300
    %v2302 = vadd.f32 %v2301, 1.0
    %v2303 = vrcp.pop %v2302
    %v2304 = vmul.f32 1.0, %v2303
    %v2305 = vxor.u32 %v2296, 2147483648
    %v2306 = vmul.f32 %v2305, 1.442695
    %v2307 = vpow.pop %v2306
    %v2308 = vadd.f32 %v2307, 1.0
    %v2309 = vrcp.pop %v2308
    %v2310 = vmul.f32 1.0, %v2309
    %v2311 = vtanh.pop %v2297
    %v2312 = vxor.u32 %v2298, 2147483648
    %v2313 = vmul.f32 %v2312, 1.442695
    %v2314 = vpow.pop %v2313
    %v2315 = vadd.f32 %v2314, 1.0
    %v2316 = vrcp.pop %v2315
    %v2317 = vmul.f32 1.0, %v2316
    %v2318 = vmul.f32 %v2310, %v2014
    %v2319 = vmul.f32 %v2304, %v2311
    %v2320 = vadd.f32 %v2318, %v2319
    %v2321 = vtanh.pop %v2320
    %v2322 = vmul.f32 %v2317, %v2321
    %s2323 = scalar_lea.vmem [#allocation18], 24
    %2324 = vst [vmem:[%s2323] sm:$0xff] %v2322
    %2325 = vmatprep.subr.bf16.mxu0 %v719
    %2326 = vmatpush1.bf16.msra.mxu0 %v718
    %2327 = vmatprep.subr.bf16.mxu0 %v723
    %2328 = vmatpush1.bf16.msra.mxu0 %v722
    %2329 = vmatprep.subr.bf16.mxu0 %v727
    %2330 = vmatpush1.bf16.msra.mxu0 %v726
    %2331 = vmatprep.subr.bf16.mxu0 %v731
    %2332 = vmatpush1.bf16.msra.mxu0 %v730
    %2333 = vmatprep.subr.bf16.mxu0 %v735
    %2334 = vmatpush1.bf16.msra.mxu0 %v734
    %2335 = vmatprep.subr.bf16.mxu0 %v739
    %2336 = vmatpush1.bf16.msra.mxu0 %v738
    %2337 = vmatprep.subr.bf16.mxu0 %v743
    %2338 = vmatpush1.bf16.msra.mxu0 %v742
    %2339 = vmatprep.subr.bf16.mxu0 %v747
    %2340 = vmatpush1.bf16.msra.mxu0 %v746
    %2341 = vmatprep.subr.bf16.mxu0 0
    %2342 = vmatpush1.bf16.msra.mxu0 0
    %2343 = vmatprep.subr.bf16.mxu0 0
    %2344 = vmatpush1.bf16.msra.mxu0 0
    %2345 = vmatprep.subr.bf16.mxu0 0
    %2346 = vmatpush1.bf16.msra.mxu0 0
    %2347 = vmatprep.subr.bf16.mxu0 0
    %2348 = vmatpush1.bf16.msra.mxu0 0
    %2349 = vmatprep.subr.bf16.mxu0 0
    %2350 = vmatpush1.bf16.msra.mxu0 0
    %2351 = vmatprep.subr.bf16.mxu0 0
    %2352 = vmatpush1.bf16.msra.mxu0 0
    %2353 = vmatprep.subr.bf16.mxu0 0
    %2354 = vmatpush1.bf16.msra.mxu0 0
    %2355 = vmatprep.subr.bf16.mxu0 0
    %2356 = vmatpush1.bf16.msra.mxu0 0
    %2357 = vmatprep.mubr.bf16.mxu0 0
    %2358 = vmatmul.mubr.bf16.gmra.mrb[0].mxu0 %v2129
    %v2359 = vpop.f32.mrb[0].mxu0
    %v2360 = vadd.f32 0.0, %v2359
    %v2361 = vpop.f32.mrb[0].mxu0
    %v2362 = vadd.f32 0.0, %v2361
    %v2363 = vpop.f32.mrb[0].mxu0
    %v2364 = vpop.f32.mrb[0].mxu0
    %2365 = vdwg.mxu0
    %2366 = vmatprep.subr.bf16.mxu0 %v721
    %2367 = vmatpush1.bf16.msra.mxu0 %v720
    %2368 = vmatprep.subr.bf16.mxu0 %v725
    %2369 = vmatpush1.bf16.msra.mxu0 %v724
    %2370 = vmatprep.subr.bf16.mxu0 %v729
    %2371 = vmatpush1.bf16.msra.mxu0 %v728
    %2372 = vmatprep.subr.bf16.mxu0 %v733
    %2373 = vmatpush1.bf16.msra.mxu0 %v732
    %2374 = vmatprep.subr.bf16.mxu0 %v737
    %2375 = vmatpush1.bf16.msra.mxu0 %v736
    %2376 = vmatprep.subr.bf16.mxu0 %v741
    %2377 = vmatpush1.bf16.msra.mxu0 %v740
    %2378 = vmatprep.subr.bf16.mxu0 %v745
    %2379 = vmatpush1.bf16.msra.mxu0 %v744
    %2380 = vmatprep.subr.bf16.mxu0 %v749
    %2381 = vmatpush1.bf16.msra.mxu0 %v748
    %2382 = vmatprep.subr.bf16.mxu0 0
    %2383 = vmatpush1.bf16.msra.mxu0 0
    %2384 = vmatprep.subr.bf16.mxu0 0
    %2385 = vmatpush1.bf16.msra.mxu0 0
    %2386 = vmatprep.subr.bf16.mxu0 0
    %2387 = vmatpush1.bf16.msra.mxu0 0
    %2388 = vmatprep.subr.bf16.mxu0 0
    %2389 = vmatpush1.bf16.msra.mxu0 0
    %2390 = vmatprep.subr.bf16.mxu0 0
    %2391 = vmatpush1.bf16.msra.mxu0 0
    %2392 = vmatprep.subr.bf16.mxu0 0
    %2393 = vmatpush1.bf16.msra.mxu0 0
    %2394 = vmatprep.subr.bf16.mxu0 0
    %2395 = vmatpush1.bf16.msra.mxu0 0
    %2396 = vmatprep.subr.bf16.mxu0 0
    %2397 = vmatpush1.bf16.msra.mxu0 0
    %2398 = vmatprep.mubr.bf16.mxu0 0
    %2399 = vmatmul.mubr.bf16.gmra.mrb[0].mxu0 %v2129
    %v2400 = vpop.f32.mrb[0].mxu0
    %v2401 = vadd.f32 0.0, %v2400
    %v2402 = vpop.f32.mrb[0].mxu0
    %v2403 = vadd.f32 0.0, %v2402
    %v2404 = vpop.f32.mrb[0].mxu0
    %v2405 = vpop.f32.mrb[0].mxu0
    %2406 = vdwg.mxu0
    %v2407 = vadd.f32 %v495, %v2360
    %v2408 = vadd.f32 %v496, %v2362
    %v2409 = vadd.f32 %v497, %v2401
    %v2410 = vadd.f32 %v498, %v2403
    %v2411 = vxor.u32 %v2407, 2147483648
    %v2412 = vmul.f32 %v2411, 1.442695
    %v2413 = vpow.pop %v2412
    %v2414 = vadd.f32 %v2413, 1.0
    %v2415 = vrcp.pop %v2414
    %v2416 = vmul.f32 1.0, %v2415
    %v2417 = vxor.u32 %v2408, 2147483648
    %v2418 = vmul.f32 %v2417, 1.442695
    %v2419 = vpow.pop %v2418
    %v2420 = vadd.f32 %v2419, 1.0
    %v2421 = vrcp.pop %v2420
    %v2422 = vmul.f32 1.0, %v2421
    %v2423 = vtanh.pop %v2409
    %v2424 = vxor.u32 %v2410, 2147483648
    %v2425 = vmul.f32 %v2424, 1.442695
    %v2426 = vpow.pop %v2425
    %v2427 = vadd.f32 %v2426, 1.0
    %v2428 = vrcp.pop %v2427
    %v2429 = vmul.f32 1.0, %v2428
    %v2430 = vmul.f32 %v2422, %v2126
    %v2431 = vmul.f32 %v2416, %v2423
    %v2432 = vadd.f32 %v2430, %v2431
    %v2433 = vtanh.pop %v2432
    %v2434 = vmul.f32 %v2429, %v2433
    %v2435 = vpack.c.bf16 %v2434, %v2434
    %v2436 = vpack.c.bf16 %v2322, %v2322
    %2437 = vmatprep.subr.bf16.mxu0 %v991
    %2438 = vmatpush1.bf16.msra.mxu0 %v990
    %2439 = vmatprep.subr.bf16.mxu0 %v995
    %2440 = vmatpush1.bf16.msra.mxu0 %v994
    %2441 = vmatprep.subr.bf16.mxu0 %v999
    %2442 = vmatpush1.bf16.msra.mxu0 %v998
    %2443 = vmatprep.subr.bf16.mxu0 %v1003
    %2444 = vmatpush1.bf16.msra.mxu0 %v1002
    %2445 = vmatprep.subr.bf16.mxu0 %v1007
    %2446 = vmatpush1.bf16.msra.mxu0 %v1006
    %2447 = vmatprep.subr.bf16.mxu0 %v1011
    %2448 = vmatpush1.bf16.msra.mxu0 %v1010
    %2449 = vmatprep.subr.bf16.mxu0 %v1015
    %2450 = vmatpush1.bf16.msra.mxu0 %v1014
    %2451 = vmatprep.subr.bf16.mxu0 %v1019
    %2452 = vmatpush1.bf16.msra.mxu0 %v1018
    %2453 = vmatprep.subr.bf16.mxu0 0
    %2454 = vmatpush1.bf16.msra.mxu0 0
    %2455 = vmatprep.subr.bf16.mxu0 0
    %2456 = vmatpush1.bf16.msra.mxu0 0
    %2457 = vmatprep.subr.bf16.mxu0 0
    %2458 = vmatpush1.bf16.msra.mxu0 0
    %2459 = vmatprep.subr.bf16.mxu0 0
    %2460 = vmatpush1.bf16.msra.mxu0 0
    %2461 = vmatprep.subr.bf16.mxu0 0
    %2462 = vmatpush1.bf16.msra.mxu0 0
    %2463 = vmatprep.subr.bf16.mxu0 0
    %2464 = vmatpush1.bf16.msra.mxu0 0
    %2465 = vmatprep.subr.bf16.mxu0 0
    %2466 = vmatpush1.bf16.msra.mxu0 0
    %2467 = vmatprep.subr.bf16.mxu0 0
    %2468 = vmatpush1.bf16.msra.mxu0 0
    %2469 = vmatprep.mubr.bf16.mxu0 0
    %2470 = vmatmul.mubr.bf16.gmra.mrb[0].mxu0 %v2436
    %v2471 = vpop.f32.mrb[0].mxu0
    %v2472 = vadd.f32 0.0, %v2471
    %v2473 = vpop.f32.mrb[0].mxu0
    %v2474 = vadd.f32 0.0, %v2473
    %v2475 = vpop.f32.mrb[0].mxu0
    %v2476 = vpop.f32.mrb[0].mxu0
    %2477 = vdwg.mxu0
    %2478 = vmatprep.subr.bf16.mxu0 %v993
    %2479 = vmatpush1.bf16.msra.mxu0 %v992
    %2480 = vmatprep.subr.bf16.mxu0 %v997
    %2481 = vmatpush1.bf16.msra.mxu0 %v996
    %2482 = vmatprep.subr.bf16.mxu0 %v1001
    %2483 = vmatpush1.bf16.msra.mxu0 %v1000
    %2484 = vmatprep.subr.bf16.mxu0 %v1005
    %2485 = vmatpush1.bf16.msra.mxu0 %v1004
    %2486 = vmatprep.subr.bf16.mxu0 %v1009
    %2487 = vmatpush1.bf16.msra.mxu0 %v1008
    %2488 = vmatprep.subr.bf16.mxu0 %v1013
    %2489 = vmatpush1.bf16.msra.mxu0 %v1012
    %2490 = vmatprep.subr.bf16.mxu0 %v1017
    %2491 = vmatpush1.bf16.msra.mxu0 %v1016
    %2492 = vmatprep.subr.bf16.mxu0 %v1021
    %2493 = vmatpush1.bf16.msra.mxu0 %v1020
    %2494 = vmatprep.subr.bf16.mxu0 0
    %2495 = vmatpush1.bf16.msra.mxu0 0
    %2496 = vmatprep.subr.bf16.mxu0 0
    %2497 = vmatpush1.bf16.msra.mxu0 0
    %2498 = vmatprep.subr.bf16.mxu0 0
    %2499 = vmatpush1.bf16.msra.mxu0 0
    %2500 = vmatprep.subr.bf16.mxu0 0
    %2501 = vmatpush1.bf16.msra.mxu0 0
    %2502 = vmatprep.subr.bf16.mxu0 0
    %2503 = vmatpush1.bf16.msra.mxu0 0
    %2504 = vmatprep.subr.bf16.mxu0 0
    %2505 = vmatpush1.bf16.msra.mxu0 0
    %2506 = vmatprep.subr.bf16.mxu0 0
    %2507 = vmatpush1.bf16.msra.mxu0 0
    %2508 = vmatprep.subr.bf16.mxu0 0
    %2509 = vmatpush1.bf16.msra.mxu0 0
    %2510 = vmatprep.mubr.bf16.mxu0 0
    %2511 = vmatmul.mubr.bf16.gmra.mrb[0].mxu0 %v2436
    %v2512 = vpop.f32.mrb[0].mxu0
    %v2513 = vadd.f32 0.0, %v2512
    %v2514 = vpop.f32.mrb[0].mxu0
    %v2515 = vadd.f32 0.0, %v2514
    %v2516 = vpop.f32.mrb[0].mxu0
    %v2517 = vpop.f32.mrb[0].mxu0
    %2518 = vdwg.mxu0
    %2519 = vmatprep.subr.bf16.mxu0 %v1233
    %2520 = vmatpush1.bf16.msra.mxu0 %v1232
    %2521 = vmatprep.subr.bf16.mxu0 %v1237
    %2522 = vmatpush1.bf16.msra.mxu0 %v1236
    %2523 = vmatprep.subr.bf16.mxu0 %v1241
    %2524 = vmatpush1.bf16.msra.mxu0 %v1240
    %2525 = vmatprep.subr.bf16.mxu0 %v1245
    %2526 = vmatpush1.bf16.msra.mxu0 %v1244
    %2527 = vmatprep.subr.bf16.mxu0 %v1249
    %2528 = vmatpush1.bf16.msra.mxu0 %v1248
    %2529 = vmatprep.subr.bf16.mxu0 %v1253
    %2530 = vmatpush1.bf16.msra.mxu0 %v1252
    %2531 = vmatprep.subr.bf16.mxu0 %v1257
    %2532 = vmatpush1.bf16.msra.mxu0 %v1256
    %2533 = vmatprep.subr.bf16.mxu0 %v1261
    %2534 = vmatpush1.bf16.msra.mxu0 %v1260
    %2535 = vmatprep.subr.bf16.mxu0 0
    %2536 = vmatpush1.bf16.msra.mxu0 0
    %2537 = vmatprep.subr.bf16.mxu0 0
    %2538 = vmatpush1.bf16.msra.mxu0 0
    %2539 = vmatprep.subr.bf16.mxu0 0
    %2540 = vmatpush1.bf16.msra.mxu0 0
    %2541 = vmatprep.subr.bf16.mxu0 0
    %2542 = vmatpush1.bf16.msra.mxu0 0
    %2543 = vmatprep.subr.bf16.mxu0 0
    %2544 = vmatpush1.bf16.msra.mxu0 0
    %2545 = vmatprep.subr.bf16.mxu0 0
    %2546 = vmatpush1.bf16.msra.mxu0 0
    %2547 = vmatprep.subr.bf16.mxu0 0
    %2548 = vmatpush1.bf16.msra.mxu0 0
    %2549 = vmatprep.subr.bf16.mxu0 0
    %2550 = vmatpush1.bf16.msra.mxu0 0
    %2551 = vmatprep.mubr.bf16.mxu0 0
    %2552 = vmatmul.mubr.bf16.gmra.mrb[0].mxu0 %v2435
    %v2553 = vpop.f32.mrb[0].mxu0
    %v2554 = vadd.f32 %v2472, %v2553
    %v2555 = vpop.f32.mrb[0].mxu0
    %v2556 = vadd.f32 %v2474, %v2555
    %v2557 = vpop.f32.mrb[0].mxu0
    %v2558 = vpop.f32.mrb[0].mxu0
    %2559 = vdwg.mxu0
    %2560 = vmatprep.subr.bf16.mxu0 %v1235
    %2561 = vmatpush1.bf16.msra.mxu0 %v1234
    %2562 = vmatprep.subr.bf16.mxu0 %v1239
    %2563 = vmatpush1.bf16.msra.mxu0 %v1238
    %2564 = vmatprep.subr.bf16.mxu0 %v1243
    %2565 = vmatpush1.bf16.msra.mxu0 %v1242
    %2566 = vmatprep.subr.bf16.mxu0 %v1247
    %2567 = vmatpush1.bf16.msra.mxu0 %v1246
    %2568 = vmatprep.subr.bf16.mxu0 %v1251
    %2569 = vmatpush1.bf16.msra.mxu0 %v1250
    %2570 = vmatprep.subr.bf16.mxu0 %v1255
    %2571 = vmatpush1.bf16.msra.mxu0 %v1254
    %2572 = vmatprep.subr.bf16.mxu0 %v1259
    %2573 = vmatpush1.bf16.msra.mxu0 %v1258
    %2574 = vmatprep.subr.bf16.mxu0 %v1263
    %2575 = vmatpush1.bf16.msra.mxu0 %v1262
    %2576 = vmatprep.subr.bf16.mxu0 0
    %2577 = vmatpush1.bf16.msra.mxu0 0
    %2578 = vmatprep.subr.bf16.mxu0 0
    %2579 = vmatpush1.bf16.msra.mxu0 0
    %2580 = vmatprep.subr.bf16.mxu0 0
    %2581 = vmatpush1.bf16.msra.mxu0 0
    %2582 = vmatprep.subr.bf16.mxu0 0
    %2583 = vmatpush1.bf16.msra.mxu0 0
    %2584 = vmatprep.subr.bf16.mxu0 0
    %2585 = vmatpush1.bf16.msra.mxu0 0
    %2586 = vmatprep.subr.bf16.mxu0 0
    %2587 = vmatpush1.bf16.msra.mxu0 0
    %2588 = vmatprep.subr.bf16.mxu0 0
    %2589 = vmatpush1.bf16.msra.mxu0 0
    %2590 = vmatprep.subr.bf16.mxu0 0
    %2591 = vmatpush1.bf16.msra.mxu0 0
    %2592 = vmatprep.mubr.bf16.mxu0 0
    %2593 = vmatmul.mubr.bf16.gmra.mrb[0].mxu0 %v2435
    %v2594 = vpop.f32.mrb[0].mxu0
    %v2595 = vadd.f32 %v2513, %v2594
    %v2596 = vpop.f32.mrb[0].mxu0
    %v2597 = vadd.f32 %v2515, %v2596
    %v2598 = vpop.f32.mrb[0].mxu0
    %v2599 = vpop.f32.mrb[0].mxu0
    %2600 = vdwg.mxu0
    %v2601 = vadd.f32 %v2554, %v600
    %v2602 = vadd.f32 %v2556, %v604
    %v2603 = vadd.f32 %v2595, %v608
    %v2604 = vadd.f32 %v2597, %v612
    %v2605 = vxor.u32 %v2601, 2147483648
    %v2606 = vmul.f32 %v2605, 1.442695
    %v2607 = vpow.pop %v2606
    %v2608 = vadd.f32 %v2607, 1.0
    %v2609 = vrcp.pop %v2608
    %v2610 = vmul.f32 1.0, %v2609
    %v2611 = vxor.u32 %v2602, 2147483648
    %v2612 = vmul.f32 %v2611, 1.442695
    %v2613 = vpow.pop %v2612
    %v2614 = vadd.f32 %v2613, 1.0
    %v2615 = vrcp.pop %v2614
    %v2616 = vmul.f32 1.0, %v2615
    %v2617 = vtanh.pop %v2603
    %v2618 = vxor.u32 %v2604, 2147483648
    %v2619 = vmul.f32 %v2618, 1.442695
    %v2620 = vpow.pop %v2619
    %v2621 = vadd.f32 %v2620, 1.0
    %v2622 = vrcp.pop %v2621
    %v2623 = vmul.f32 1.0, %v2622
    %v2624 = vmul.f32 %v2616, %v2320
    %v2625 = vmul.f32 %v2610, %v2617
    %v2626 = vadd.f32 %v2624, %v2625
    %v2627 = vtanh.pop %v2626
    %v2628 = vmul.f32 %v2623, %v2627
    %s2629 = scalar_lea.vmem [#allocation18], 32
    %2630 = vst [vmem:[%s2629] sm:$0xff] %v2628
    %2631 = vmatprep.subr.bf16.mxu0 %v719
    %2632 = vmatpush1.bf16.msra.mxu0 %v718
    %2633 = vmatprep.subr.bf16.mxu0 %v723
    %2634 = vmatpush1.bf16.msra.mxu0 %v722
    %2635 = vmatprep.subr.bf16.mxu0 %v727
    %2636 = vmatpush1.bf16.msra.mxu0 %v726
    %2637 = vmatprep.subr.bf16.mxu0 %v731
    %2638 = vmatpush1.bf16.msra.mxu0 %v730
    %2639 = vmatprep.subr.bf16.mxu0 %v735
    %2640 = vmatpush1.bf16.msra.mxu0 %v734
    %2641 = vmatprep.subr.bf16.mxu0 %v739
    %2642 = vmatpush1.bf16.msra.mxu0 %v738
    %2643 = vmatprep.subr.bf16.mxu0 %v743
    %2644 = vmatpush1.bf16.msra.mxu0 %v742
    %2645 = vmatprep.subr.bf16.mxu0 %v747
    %2646 = vmatpush1.bf16.msra.mxu0 %v746
    %2647 = vmatprep.subr.bf16.mxu0 0
    %2648 = vmatpush1.bf16.msra.mxu0 0
    %2649 = vmatprep.subr.bf16.mxu0 0
    %2650 = vmatpush1.bf16.msra.mxu0 0
    %2651 = vmatprep.subr.bf16.mxu0 0
    %2652 = vmatpush1.bf16.msra.mxu0 0
    %2653 = vmatprep.subr.bf16.mxu0 0
    %2654 = vmatpush1.bf16.msra.mxu0 0
    %2655 = vmatprep.subr.bf16.mxu0 0
    %2656 = vmatpush1.bf16.msra.mxu0 0
    %2657 = vmatprep.subr.bf16.mxu0 0
    %2658 = vmatpush1.bf16.msra.mxu0 0
    %2659 = vmatprep.subr.bf16.mxu0 0
    %2660 = vmatpush1.bf16.msra.mxu0 0
    %2661 = vmatprep.subr.bf16.mxu0 0
    %2662 = vmatpush1.bf16.msra.mxu0 0
    %2663 = vmatprep.mubr.bf16.mxu0 0
    %2664 = vmatmul.mubr.bf16.gmra.mrb[0].mxu0 %v2435
    %v2665 = vpop.f32.mrb[0].mxu0
    %v2666 = vadd.f32 0.0, %v2665
    %v2667 = vpop.f32.mrb[0].mxu0
    %v2668 = vadd.f32 0.0, %v2667
    %v2669 = vpop.f32.mrb[0].mxu0
    %v2670 = vpop.f32.mrb[0].mxu0
    %2671 = vdwg.mxu0
    %2672 = vmatprep.subr.bf16.mxu0 %v721
    %2673 = vmatpush1.bf16.msra.mxu0 %v720
    %2674 = vmatprep.subr.bf16.mxu0 %v725
    %2675 = vmatpush1.bf16.msra.mxu0 %v724
    %2676 = vmatprep.subr.bf16.mxu0 %v729
    %2677 = vmatpush1.bf16.msra.mxu0 %v728
    %2678 = vmatprep.subr.bf16.mxu0 %v733
    %2679 = vmatpush1.bf16.msra.mxu0 %v732
    %2680 = vmatprep.subr.bf16.mxu0 %v737
    %2681 = vmatpush1.bf16.msra.mxu0 %v736
    %2682 = vmatprep.subr.bf16.mxu0 %v741
    %2683 = vmatpush1.bf16.msra.mxu0 %v740
    %2684 = vmatprep.subr.bf16.mxu0 %v745
    %2685 = vmatpush1.bf16.msra.mxu0 %v744
    %2686 = vmatprep.subr.bf16.mxu0 %v749
    %2687 = vmatpush1.bf16.msra.mxu0 %v748
    %2688 = vmatprep.subr.bf16.mxu0 0
    %2689 = vmatpush1.bf16.msra.mxu0 0
    %2690 = vmatprep.subr.bf16.mxu0 0
    %2691 = vmatpush1.bf16.msra.mxu0 0
    %2692 = vmatprep.subr.bf16.mxu0 0
    %2693 = vmatpush1.bf16.msra.mxu0 0
    %2694 = vmatprep.subr.bf16.mxu0 0
    %2695 = vmatpush1.bf16.msra.mxu0 0
    %2696 = vmatprep.subr.bf16.mxu0 0
    %2697 = vmatpush1.bf16.msra.mxu0 0
    %2698 = vmatprep.subr.bf16.mxu0 0
    %2699 = vmatpush1.bf16.msra.mxu0 0
    %2700 = vmatprep.subr.bf16.mxu0 0
    %2701 = vmatpush1.bf16.msra.mxu0 0
    %2702 = vmatprep.subr.bf16.mxu0 0
    %2703 = vmatpush1.bf16.msra.mxu0 0
    %2704 = vmatprep.mubr.bf16.mxu0 0
    %2705 = vmatmul.mubr.bf16.gmra.mrb[0].mxu0 %v2435
    %v2706 = vpop.f32.mrb[0].mxu0
    %v2707 = vadd.f32 0.0, %v2706
    %v2708 = vpop.f32.mrb[0].mxu0
    %v2709 = vadd.f32 0.0, %v2708
    %v2710 = vpop.f32.mrb[0].mxu0
    %v2711 = vpop.f32.mrb[0].mxu0
    %2712 = vdwg.mxu0
    %v2713 = vadd.f32 %v495, %v2666
    %v2714 = vadd.f32 %v496, %v2668
    %v2715 = vadd.f32 %v497, %v2707
    %v2716 = vadd.f32 %v498, %v2709
    %v2717 = vxor.u32 %v2713, 2147483648
    %v2718 = vmul.f32 %v2717, 1.442695
    %v2719 = vpow.pop %v2718
    %v2720 = vadd.f32 %v2719, 1.0
    %v2721 = vrcp.pop %v2720
    %v2722 = vmul.f32 1.0, %v2721
    %v2723 = vxor.u32 %v2714, 2147483648
    %v2724 = vmul.f32 %v2723, 1.442695
    %v2725 = vpow.pop %v2724
    %v2726 = vadd.f32 %v2725, 1.0
    %v2727 = vrcp.pop %v2726
    %v2728 = vmul.f32 1.0, %v2727
    %v2729 = vtanh.pop %v2715
    %v2730 = vxor.u32 %v2716, 2147483648
    %v2731 = vmul.f32 %v2730, 1.442695
    %v2732 = vpow.pop %v2731
    %v2733 = vadd.f32 %v2732, 1.0
    %v2734 = vrcp.pop %v2733
    %v2735 = vmul.f32 1.0, %v2734
    %v2736 = vmul.f32 %v2728, %v2432
    %v2737 = vmul.f32 %v2722, %v2729
    %v2738 = vadd.f32 %v2736, %v2737
    %v2739 = vtanh.pop %v2738
    %v2740 = vmul.f32 %v2735, %v2739
    %v2741 = vpack.c.bf16 %v2740, %v2740
    %v2742 = vpack.c.bf16 %v2628, %v2628
    %2743 = vmatprep.subr.bf16.mxu0 %v991
    %2744 = vmatpush1.bf16.msra.mxu0 %v990
    %2745 = vmatprep.subr.bf16.mxu0 %v995
    %2746 = vmatpush1.bf16.msra.mxu0 %v994
    %2747 = vmatprep.subr.bf16.mxu0 %v999
    %2748 = vmatpush1.bf16.msra.mxu0 %v998
    %2749 = vmatprep.subr.bf16.mxu0 %v1003
    %2750 = vmatpush1.bf16.msra.mxu0 %v1002
    %2751 = vmatprep.subr.bf16.mxu0 %v1007
    %2752 = vmatpush1.bf16.msra.mxu0 %v1006
    %2753 = vmatprep.subr.bf16.mxu0 %v1011
    %2754 = vmatpush1.bf16.msra.mxu0 %v1010
    %2755 = vmatprep.subr.bf16.mxu0 %v1015
    %2756 = vmatpush1.bf16.msra.mxu0 %v1014
    %2757 = vmatprep.subr.bf16.mxu0 %v1019
    %2758 = vmatpush1.bf16.msra.mxu0 %v1018
    %2759 = vmatprep.subr.bf16.mxu0 0
    %2760 = vmatpush1.bf16.msra.mxu0 0
    %2761 = vmatprep.subr.bf16.mxu0 0
    %2762 = vmatpush1.bf16.msra.mxu0 0
    %2763 = vmatprep.subr.bf16.mxu0 0
    %2764 = vmatpush1.bf16.msra.mxu0 0
    %2765 = vmatprep.subr.bf16.mxu0 0
    %2766 = vmatpush1.bf16.msra.mxu0 0
    %2767 = vmatprep.subr.bf16.mxu0 0
    %2768 = vmatpush1.bf16.msra.mxu0 0
    %2769 = vmatprep.subr.bf16.mxu0 0
    %2770 = vmatpush1.bf16.msra.mxu0 0
    %2771 = vmatprep.subr.bf16.mxu0 0
    %2772 = vmatpush1.bf16.msra.mxu0 0
    %2773 = vmatprep.subr.bf16.mxu0 0
    %2774 = vmatpush1.bf16.msra.mxu0 0
    %2775 = vmatprep.mubr.bf16.mxu0 0
    %2776 = vmatmul.mubr.bf16.gmra.mrb[0].mxu0 %v2742
    %v2777 = vpop.f32.mrb[0].mxu0
    %v2778 = vadd.f32 0.0, %v2777
    %v2779 = vpop.f32.mrb[0].mxu0
    %v2780 = vadd.f32 0.0, %v2779
    %v2781 = vpop.f32.mrb[0].mxu0
    %v2782 = vpop.f32.mrb[0].mxu0
    %2783 = vdwg.mxu0
    %2784 = vmatprep.subr.bf16.mxu0 %v993
    %2785 = vmatpush1.bf16.msra.mxu0 %v992
    %2786 = vmatprep.subr.bf16.mxu0 %v997
    %2787 = vmatpush1.bf16.msra.mxu0 %v996
    %2788 = vmatprep.subr.bf16.mxu0 %v1001
    %2789 = vmatpush1.bf16.msra.mxu0 %v1000
    %2790 = vmatprep.subr.bf16.mxu0 %v1005
    %2791 = vmatpush1.bf16.msra.mxu0 %v1004
    %2792 = vmatprep.subr.bf16.mxu0 %v1009
    %2793 = vmatpush1.bf16.msra.mxu0 %v1008
    %2794 = vmatprep.subr.bf16.mxu0 %v1013
    %2795 = vmatpush1.bf16.msra.mxu0 %v1012
    %2796 = vmatprep.subr.bf16.mxu0 %v1017
    %2797 = vmatpush1.bf16.msra.mxu0 %v1016
    %2798 = vmatprep.subr.bf16.mxu0 %v1021
    %2799 = vmatpush1.bf16.msra.mxu0 %v1020
    %2800 = vmatprep.subr.bf16.mxu0 0
    %2801 = vmatpush1.bf16.msra.mxu0 0
    %2802 = vmatprep.subr.bf16.mxu0 0
    %2803 = vmatpush1.bf16.msra.mxu0 0
    %2804 = vmatprep.subr.bf16.mxu0 0
    %2805 = vmatpush1.bf16.msra.mxu0 0
    %2806 = vmatprep.subr.bf16.mxu0 0
    %2807 = vmatpush1.bf16.msra.mxu0 0
    %2808 = vmatprep.subr.bf16.mxu0 0
    %2809 = vmatpush1.bf16.msra.mxu0 0
    %2810 = vmatprep.subr.bf16.mxu0 0
    %2811 = vmatpush1.bf16.msra.mxu0 0
    %2812 = vmatprep.subr.bf16.mxu0 0
    %2813 = vmatpush1.bf16.msra.mxu0 0
    %2814 = vmatprep.subr.bf16.mxu0 0
    %2815 = vmatpush1.bf16.msra.mxu0 0
    %2816 = vmatprep.mubr.bf16.mxu0 0
    %2817 = vmatmul.mubr.bf16.gmra.mrb[0].mxu0 %v2742
    %v2818 = vpop.f32.mrb[0].mxu0
    %v2819 = vadd.f32 0.0, %v2818
    %v2820 = vpop.f32.mrb[0].mxu0
    %v2821 = vadd.f32 0.0, %v2820
    %v2822 = vpop.f32.mrb[0].mxu0
    %v2823 = vpop.f32.mrb[0].mxu0
    %2824 = vdwg.mxu0
    %2825 = vmatprep.subr.bf16.mxu0 %v1233
    %2826 = vmatpush1.bf16.msra.mxu0 %v1232
    %2827 = vmatprep.subr.bf16.mxu0 %v1237
    %2828 = vmatpush1.bf16.msra.mxu0 %v1236
    %2829 = vmatprep.subr.bf16.mxu0 %v1241
    %2830 = vmatpush1.bf16.msra.mxu0 %v1240
    %2831 = vmatprep.subr.bf16.mxu0 %v1245
    %2832 = vmatpush1.bf16.msra.mxu0 %v1244
    %2833 = vmatprep.subr.bf16.mxu0 %v1249
    %2834 = vmatpush1.bf16.msra.mxu0 %v1248
    %2835 = vmatprep.subr.bf16.mxu0 %v1253
    %2836 = vmatpush1.bf16.msra.mxu0 %v1252
    %2837 = vmatprep.subr.bf16.mxu0 %v1257
    %2838 = vmatpush1.bf16.msra.mxu0 %v1256
    %2839 = vmatprep.subr.bf16.mxu0 %v1261
    %2840 = vmatpush1.bf16.msra.mxu0 %v1260
    %2841 = vmatprep.subr.bf16.mxu0 0
    %2842 = vmatpush1.bf16.msra.mxu0 0
    %2843 = vmatprep.subr.bf16.mxu0 0
    %2844 = vmatpush1.bf16.msra.mxu0 0
    %2845 = vmatprep.subr.bf16.mxu0 0
    %2846 = vmatpush1.bf16.msra.mxu0 0
    %2847 = vmatprep.subr.bf16.mxu0 0
    %2848 = vmatpush1.bf16.msra.mxu0 0
    %2849 = vmatprep.subr.bf16.mxu0 0
    %2850 = vmatpush1.bf16.msra.mxu0 0
    %2851 = vmatprep.subr.bf16.mxu0 0
    %2852 = vmatpush1.bf16.msra.mxu0 0
    %2853 = vmatprep.subr.bf16.mxu0 0
    %2854 = vmatpush1.bf16.msra.mxu0 0
    %2855 = vmatprep.subr.bf16.mxu0 0
    %2856 = vmatpush1.bf16.msra.mxu0 0
    %2857 = vmatprep.mubr.bf16.mxu0 0
    %2858 = vmatmul.mubr.bf16.gmra.mrb[0].mxu0 %v2741
    %v2859 = vpop.f32.mrb[0].mxu0
    %v2860 = vadd.f32 %v2778, %v2859
    %v2861 = vpop.f32.mrb[0].mxu0
    %v2862 = vadd.f32 %v2780, %v2861
    %v2863 = vpop.f32.mrb[0].mxu0
    %v2864 = vpop.f32.mrb[0].mxu0
    %2865 = vdwg.mxu0
    %2866 = vmatprep.subr.bf16.mxu0 %v1235
    %2867 = vmatpush1.bf16.msra.mxu0 %v1234
    %2868 = vmatprep.subr.bf16.mxu0 %v1239
    %2869 = vmatpush1.bf16.msra.mxu0 %v1238
    %2870 = vmatprep.subr.bf16.mxu0 %v1243
    %2871 = vmatpush1.bf16.msra.mxu0 %v1242
    %2872 = vmatprep.subr.bf16.mxu0 %v1247
    %2873 = vmatpush1.bf16.msra.mxu0 %v1246
    %2874 = vmatprep.subr.bf16.mxu0 %v1251
    %2875 = vmatpush1.bf16.msra.mxu0 %v1250
    %2876 = vmatprep.subr.bf16.mxu0 %v1255
    %2877 = vmatpush1.bf16.msra.mxu0 %v1254
    %2878 = vmatprep.subr.bf16.mxu0 %v1259
    %2879 = vmatpush1.bf16.msra.mxu0 %v1258
    %2880 = vmatprep.subr.bf16.mxu0 %v1263
    %2881 = vmatpush1.bf16.msra.mxu0 %v1262
    %2882 = vmatprep.subr.bf16.mxu0 0
    %2883 = vmatpush1.bf16.msra.mxu0 0
    %2884 = vmatprep.subr.bf16.mxu0 0
    %2885 = vmatpush1.bf16.msra.mxu0 0
    %2886 = vmatprep.subr.bf16.mxu0 0
    %2887 = vmatpush1.bf16.msra.mxu0 0
    %2888 = vmatprep.subr.bf16.mxu0 0
    %2889 = vmatpush1.bf16.msra.mxu0 0
    %2890 = vmatprep.subr.bf16.mxu0 0
    %2891 = vmatpush1.bf16.msra.mxu0 0
    %2892 = vmatprep.subr.bf16.mxu0 0
    %2893 = vmatpush1.bf16.msra.mxu0 0
    %2894 = vmatprep.subr.bf16.mxu0 0
    %2895 = vmatpush1.bf16.msra.mxu0 0
    %2896 = vmatprep.subr.bf16.mxu0 0
    %2897 = vmatpush1.bf16.msra.mxu0 0
    %2898 = vmatprep.mubr.bf16.mxu0 0
    %2899 = vmatmul.mubr.bf16.gmra.mrb[0].mxu0 %v2741
    %v2900 = vpop.f32.mrb[0].mxu0
    %v2901 = vadd.f32 %v2819, %v2900
    %v2902 = vpop.f32.mrb[0].mxu0
    %v2903 = vadd.f32 %v2821, %v2902
    %v2904 = vpop.f32.mrb[0].mxu0
    %v2905 = vpop.f32.mrb[0].mxu0
    %2906 = vdwg.mxu0
    %v2907 = vadd.f32 %v2860, %v600
    %v2908 = vadd.f32 %v2862, %v604
    %v2909 = vadd.f32 %v2901, %v608
    %v2910 = vadd.f32 %v2903, %v612
    %v2911 = vxor.u32 %v2907, 2147483648
    %v2912 = vmul.f32 %v2911, 1.442695
    %v2913 = vpow.pop %v2912
    %v2914 = vadd.f32 %v2913, 1.0
    %v2915 = vrcp.pop %v2914
    %v2916 = vmul.f32 1.0, %v2915
    %v2917 = vxor.u32 %v2908, 2147483648
    %v2918 = vmul.f32 %v2917, 1.442695
    %v2919 = vpow.pop %v2918
    %v2920 = vadd.f32 %v2919, 1.0
    %v2921 = vrcp.pop %v2920
    %v2922 = vmul.f32 1.0, %v2921
    %v2923 = vtanh.pop %v2909
    %v2924 = vxor.u32 %v2910, 2147483648
    %v2925 = vmul.f32 %v2924, 1.442695
    %v2926 = vpow.pop %v2925
    %v2927 = vadd.f32 %v2926, 1.0
    %v2928 = vrcp.pop %v2927
    %v2929 = vmul.f32 1.0, %v2928
    %v2930 = vmul.f32 %v2922, %v2626
    %v2931 = vmul.f32 %v2916, %v2923
    %v2932 = vadd.f32 %v2930, %v2931
    %v2933 = vtanh.pop %v2932
    %v2934 = vmul.f32 %v2929, %v2933
    %s2935 = scalar_lea.vmem [#allocation18], 40
    %2936 = vst [vmem:[%s2935] sm:$0xff] %v2934
    %2937 = vmatprep.subr.bf16.mxu0 %v719
    %2938 = vmatpush1.bf16.msra.mxu0 %v718
    %2939 = vmatprep.subr.bf16.mxu0 %v723
    %2940 = vmatpush1.bf16.msra.mxu0 %v722
    %2941 = vmatprep.subr.bf16.mxu0 %v727
    %2942 = vmatpush1.bf16.msra.mxu0 %v726
    %2943 = vmatprep.subr.bf16.mxu0 %v731
    %2944 = vmatpush1.bf16.msra.mxu0 %v730
    %2945 = vmatprep.subr.bf16.mxu0 %v735
    %2946 = vmatpush1.bf16.msra.mxu0 %v734
    %2947 = vmatprep.subr.bf16.mxu0 %v739
    %2948 = vmatpush1.bf16.msra.mxu0 %v738
    %2949 = vmatprep.subr.bf16.mxu0 %v743
    %2950 = vmatpush1.bf16.msra.mxu0 %v742
    %2951 = vmatprep.subr.bf16.mxu0 %v747
    %2952 = vmatpush1.bf16.msra.mxu0 %v746
    %2953 = vmatprep.subr.bf16.mxu0 0
    %2954 = vmatpush1.bf16.msra.mxu0 0
    %2955 = vmatprep.subr.bf16.mxu0 0
    %2956 = vmatpush1.bf16.msra.mxu0 0
    %2957 = vmatprep.subr.bf16.mxu0 0
    %2958 = vmatpush1.bf16.msra.mxu0 0
    %2959 = vmatprep.subr.bf16.mxu0 0
    %2960 = vmatpush1.bf16.msra.mxu0 0
    %2961 = vmatprep.subr.bf16.mxu0 0
    %2962 = vmatpush1.bf16.msra.mxu0 0
    %2963 = vmatprep.subr.bf16.mxu0 0
    %2964 = vmatpush1.bf16.msra.mxu0 0
    %2965 = vmatprep.subr.bf16.mxu0 0
    %2966 = vmatpush1.bf16.msra.mxu0 0
    %2967 = vmatprep.subr.bf16.mxu0 0
    %2968 = vmatpush1.bf16.msra.mxu0 0
    %2969 = vmatprep.mubr.bf16.mxu0 0
    %2970 = vmatmul.mubr.bf16.gmra.mrb[0].mxu0 %v2741
    %v2971 = vpop.f32.mrb[0].mxu0
    %v2972 = vadd.f32 0.0, %v2971
    %v2973 = vpop.f32.mrb[0].mxu0
    %v2974 = vadd.f32 0.0, %v2973
    %v2975 = vpop.f32.mrb[0].mxu0
    %v2976 = vpop.f32.mrb[0].mxu0
    %2977 = vdwg.mxu0
    %2978 = vmatprep.subr.bf16.mxu0 %v721
    %2979 = vmatpush1.bf16.msra.mxu0 %v720
    %2980 = vmatprep.subr.bf16.mxu0 %v725
    %2981 = vmatpush1.bf16.msra.mxu0 %v724
    %2982 = vmatprep.subr.bf16.mxu0 %v729
    %2983 = vmatpush1.bf16.msra.mxu0 %v728
    %2984 = vmatprep.subr.bf16.mxu0 %v733
    %2985 = vmatpush1.bf16.msra.mxu0 %v732
    %2986 = vmatprep.subr.bf16.mxu0 %v737
    %2987 = vmatpush1.bf16.msra.mxu0 %v736
    %2988 = vmatprep.subr.bf16.mxu0 %v741
    %2989 = vmatpush1.bf16.msra.mxu0 %v740
    %2990 = vmatprep.subr.bf16.mxu0 %v745
    %2991 = vmatpush1.bf16.msra.mxu0 %v744
    %2992 = vmatprep.subr.bf16.mxu0 %v749
    %2993 = vmatpush1.bf16.msra.mxu0 %v748
    %2994 = vmatprep.subr.bf16.mxu0 0
    %2995 = vmatpush1.bf16.msra.mxu0 0
    %2996 = vmatprep.subr.bf16.mxu0 0
    %2997 = vmatpush1.bf16.msra.mxu0 0
    %2998 = vmatprep.subr.bf16.mxu0 0
    %2999 = vmatpush1.bf16.msra.mxu0 0
    %3000 = vmatprep.subr.bf16.mxu0 0
    %3001 = vmatpush1.bf16.msra.mxu0 0
    %3002 = vmatprep.subr.bf16.mxu0 0
    %3003 = vmatpush1.bf16.msra.mxu0 0
    %3004 = vmatprep.subr.bf16.mxu0 0
    %3005 = vmatpush1.bf16.msra.mxu0 0
    %3006 = vmatprep.subr.bf16.mxu0 0
    %3007 = vmatpush1.bf16.msra.mxu0 0
    %3008 = vmatprep.subr.bf16.mxu0 0
    %3009 = vmatpush1.bf16.msra.mxu0 0
    %3010 = vmatprep.mubr.bf16.mxu0 0
    %3011 = vmatmul.mubr.bf16.gmra.mrb[0].mxu0 %v2741
    %v3012 = vpop.f32.mrb[0].mxu0
    %v3013 = vadd.f32 0.0, %v3012
    %v3014 = vpop.f32.mrb[0].mxu0
    %v3015 = vadd.f32 0.0, %v3014
    %v3016 = vpop.f32.mrb[0].mxu0
    %v3017 = vpop.f32.mrb[0].mxu0
    %3018 = vdwg.mxu0
    %v3019 = vadd.f32 %v495, %v2972
    %v3020 = vadd.f32 %v496, %v2974
    %v3021 = vadd.f32 %v497, %v3013
    %v3022 = vadd.f32 %v498, %v3015
    %v3023 = vxor.u32 %v3019, 2147483648
    %v3024 = vmul.f32 %v3023, 1.442695
    %v3025 = vpow.pop %v3024
    %v3026 = vadd.f32 %v3025, 1.0
    %v3027 = vrcp.pop %v3026
    %v3028 = vmul.f32 1.0, %v3027
    %v3029 = vxor.u32 %v3020, 2147483648
    %v3030 = vmul.f32 %v3029, 1.442695
    %v3031 = vpow.pop %v3030
    %v3032 = vadd.f32 %v3031, 1.0
    %v3033 = vrcp.pop %v3032
    %v3034 = vmul.f32 1.0, %v3033
    %v3035 = vtanh.pop %v3021
    %v3036 = vxor.u32 %v3022, 2147483648
    %v3037 = vmul.f32 %v3036, 1.442695
    %v3038 = vpow.pop %v3037
    %v3039 = vadd.f32 %v3038, 1.0
    %v3040 = vrcp.pop %v3039
    %v3041 = vmul.f32 1.0, %v3040
    %v3042 = vmul.f32 %v3034, %v2738
    %v3043 = vmul.f32 %v3028, %v3035
    %v3044 = vadd.f32 %v3042, %v3043
    %v3045 = vtanh.pop %v3044
    %v3046 = vmul.f32 %v3041, %v3045
    %v3047 = vpack.c.bf16 %v3046, %v3046
    %v3048 = vpack.c.bf16 %v2934, %v2934
    %3049 = vmatprep.subr.bf16.mxu0 %v991
    %3050 = vmatpush1.bf16.msra.mxu0 %v990
    %3051 = vmatprep.subr.bf16.mxu0 %v995
    %3052 = vmatpush1.bf16.msra.mxu0 %v994
    %3053 = vmatprep.subr.bf16.mxu0 %v999
    %3054 = vmatpush1.bf16.msra.mxu0 %v998
    %3055 = vmatprep.subr.bf16.mxu0 %v1003
    %3056 = vmatpush1.bf16.msra.mxu0 %v1002
    %3057 = vmatprep.subr.bf16.mxu0 %v1007
    %3058 = vmatpush1.bf16.msra.mxu0 %v1006
    %3059 = vmatprep.subr.bf16.mxu0 %v1011
    %3060 = vmatpush1.bf16.msra.mxu0 %v1010
    %3061 = vmatprep.subr.bf16.mxu0 %v1015
    %3062 = vmatpush1.bf16.msra.mxu0 %v1014
    %3063 = vmatprep.subr.bf16.mxu0 %v1019
    %3064 = vmatpush1.bf16.msra.mxu0 %v1018
    %3065 = vmatprep.subr.bf16.mxu0 0
    %3066 = vmatpush1.bf16.msra.mxu0 0
    %3067 = vmatprep.subr.bf16.mxu0 0
    %3068 = vmatpush1.bf16.msra.mxu0 0
    %3069 = vmatprep.subr.bf16.mxu0 0
    %3070 = vmatpush1.bf16.msra.mxu0 0
    %3071 = vmatprep.subr.bf16.mxu0 0
    %3072 = vmatpush1.bf16.msra.mxu0 0
    %3073 = vmatprep.subr.bf16.mxu0 0
    %3074 = vmatpush1.bf16.msra.mxu0 0
    %3075 = vmatprep.subr.bf16.mxu0 0
    %3076 = vmatpush1.bf16.msra.mxu0 0
    %3077 = vmatprep.subr.bf16.mxu0 0
    %3078 = vmatpush1.bf16.msra.mxu0 0
    %3079 = vmatprep.subr.bf16.mxu0 0
    %3080 = vmatpush1.bf16.msra.mxu0 0
    %3081 = vmatprep.mubr.bf16.mxu0 0
    %3082 = vmatmul.mubr.bf16.gmra.mrb[0].mxu0 %v3048
    %v3083 = vpop.f32.mrb[0].mxu0
    %v3084 = vadd.f32 0.0, %v3083
    %v3085 = vpop.f32.mrb[0].mxu0
    %v3086 = vadd.f32 0.0, %v3085
    %v3087 = vpop.f32.mrb[0].mxu0
    %v3088 = vpop.f32.mrb[0].mxu0
    %3089 = vdwg.mxu0
    %3090 = vmatprep.subr.bf16.mxu0 %v993
    %3091 = vmatpush1.bf16.msra.mxu0 %v992
    %3092 = vmatprep.subr.bf16.mxu0 %v997
    %3093 = vmatpush1.bf16.msra.mxu0 %v996
    %3094 = vmatprep.subr.bf16.mxu0 %v1001
    %3095 = vmatpush1.bf16.msra.mxu0 %v1000
    %3096 = vmatprep.subr.bf16.mxu0 %v1005
    %3097 = vmatpush1.bf16.msra.mxu0 %v1004
    %3098 = vmatprep.subr.bf16.mxu0 %v1009
    %3099 = vmatpush1.bf16.msra.mxu0 %v1008
    %3100 = vmatprep.subr.bf16.mxu0 %v1013
    %3101 = vmatpush1.bf16.msra.mxu0 %v1012
    %3102 = vmatprep.subr.bf16.mxu0 %v1017
    %3103 = vmatpush1.bf16.msra.mxu0 %v1016
    %3104 = vmatprep.subr.bf16.mxu0 %v1021
    %3105 = vmatpush1.bf16.msra.mxu0 %v1020
    %3106 = vmatprep.subr.bf16.mxu0 0
    %3107 = vmatpush1.bf16.msra.mxu0 0
    %3108 = vmatprep.subr.bf16.mxu0 0
    %3109 = vmatpush1.bf16.msra.mxu0 0
    %3110 = vmatprep.subr.bf16.mxu0 0
    %3111 = vmatpush1.bf16.msra.mxu0 0
    %3112 = vmatprep.subr.bf16.mxu0 0
    %3113 = vmatpush1.bf16.msra.mxu0 0
    %3114 = vmatprep.subr.bf16.mxu0 0
    %3115 = vmatpush1.bf16.msra.mxu0 0
    %3116 = vmatprep.subr.bf16.mxu0 0
    %3117 = vmatpush1.bf16.msra.mxu0 0
    %3118 = vmatprep.subr.bf16.mxu0 0
    %3119 = vmatpush1.bf16.msra.mxu0 0
    %3120 = vmatprep.subr.bf16.mxu0 0
    %3121 = vmatpush1.bf16.msra.mxu0 0
    %3122 = vmatprep.mubr.bf16.mxu0 0
    %3123 = vmatmul.mubr.bf16.gmra.mrb[0].mxu0 %v3048
    %v3124 = vpop.f32.mrb[0].mxu0
    %v3125 = vadd.f32 0.0, %v3124
    %v3126 = vpop.f32.mrb[0].mxu0
    %v3127 = vadd.f32 0.0, %v3126
    %v3128 = vpop.f32.mrb[0].mxu0
    %v3129 = vpop.f32.mrb[0].mxu0
    %3130 = vdwg.mxu0
    %3131 = vmatprep.subr.bf16.mxu0 %v1233
    %3132 = vmatpush1.bf16.msra.mxu0 %v1232
    %3133 = vmatprep.subr.bf16.mxu0 %v1237
    %3134 = vmatpush1.bf16.msra.mxu0 %v1236
    %3135 = vmatprep.subr.bf16.mxu0 %v1241
    %3136 = vmatpush1.bf16.msra.mxu0 %v1240
    %3137 = vmatprep.subr.bf16.mxu0 %v1245
    %3138 = vmatpush1.bf16.msra.mxu0 %v1244
    %3139 = vmatprep.subr.bf16.mxu0 %v1249
    %3140 = vmatpush1.bf16.msra.mxu0 %v1248
    %3141 = vmatprep.subr.bf16.mxu0 %v1253
    %3142 = vmatpush1.bf16.msra.mxu0 %v1252
    %3143 = vmatprep.subr.bf16.mxu0 %v1257
    %3144 = vmatpush1.bf16.msra.mxu0 %v1256
    %3145 = vmatprep.subr.bf16.mxu0 %v1261
    %3146 = vmatpush1.bf16.msra.mxu0 %v1260
    %3147 = vmatprep.subr.bf16.mxu0 0
    %3148 = vmatpush1.bf16.msra.mxu0 0
    %3149 = vmatprep.subr.bf16.mxu0 0
    %3150 = vmatpush1.bf16.msra.mxu0 0
    %3151 = vmatprep.subr.bf16.mxu0 0
    %3152 = vmatpush1.bf16.msra.mxu0 0
    %3153 = vmatprep.subr.bf16.mxu0 0
    %3154 = vmatpush1.bf16.msra.mxu0 0
    %3155 = vmatprep.subr.bf16.mxu0 0
    %3156 = vmatpush1.bf16.msra.mxu0 0
    %3157 = vmatprep.subr.bf16.mxu0 0
    %3158 = vmatpush1.bf16.msra.mxu0 0
    %3159 = vmatprep.subr.bf16.mxu0 0
    %3160 = vmatpush1.bf16.msra.mxu0 0
    %3161 = vmatprep.subr.bf16.mxu0 0
    %3162 = vmatpush1.bf16.msra.mxu0 0
    %3163 = vmatprep.mubr.bf16.mxu0 0
    %3164 = vmatmul.mubr.bf16.gmra.mrb[0].mxu0 %v3047
    %v3165 = vpop.f32.mrb[0].mxu0
    %v3166 = vadd.f32 %v3084, %v3165
    %v3167 = vpop.f32.mrb[0].mxu0
    %v3168 = vadd.f32 %v3086, %v3167
    %v3169 = vpop.f32.mrb[0].mxu0
    %v3170 = vpop.f32.mrb[0].mxu0
    %3171 = vdwg.mxu0
    %3172 = vmatprep.subr.bf16.mxu0 %v1235
    %3173 = vmatpush1.bf16.msra.mxu0 %v1234
    %3174 = vmatprep.subr.bf16.mxu0 %v1239
    %3175 = vmatpush1.bf16.msra.mxu0 %v1238
    %3176 = vmatprep.subr.bf16.mxu0 %v1243
    %3177 = vmatpush1.bf16.msra.mxu0 %v1242
    %3178 = vmatprep.subr.bf16.mxu0 %v1247
    %3179 = vmatpush1.bf16.msra.mxu0 %v1246
    %3180 = vmatprep.subr.bf16.mxu0 %v1251
    %3181 = vmatpush1.bf16.msra.mxu0 %v1250
    %3182 = vmatprep.subr.bf16.mxu0 %v1255
    %3183 = vmatpush1.bf16.msra.mxu0 %v1254
    %3184 = vmatprep.subr.bf16.mxu0 %v1259
    %3185 = vmatpush1.bf16.msra.mxu0 %v1258
    %3186 = vmatprep.subr.bf16.mxu0 %v1263
    %3187 = vmatpush1.bf16.msra.mxu0 %v1262
    %3188 = vmatprep.subr.bf16.mxu0 0
    %3189 = vmatpush1.bf16.msra.mxu0 0
    %3190 = vmatprep.subr.bf16.mxu0 0
    %3191 = vmatpush1.bf16.msra.mxu0 0
    %3192 = vmatprep.subr.bf16.mxu0 0
    %3193 = vmatpush1.bf16.msra.mxu0 0
    %3194 = vmatprep.subr.bf16.mxu0 0
    %3195 = vmatpush1.bf16.msra.mxu0 0
    %3196 = vmatprep.subr.bf16.mxu0 0
    %3197 = vmatpush1.bf16.msra.mxu0 0
    %3198 = vmatprep.subr.bf16.mxu0 0
    %3199 = vmatpush1.bf16.msra.mxu0 0
    %3200 = vmatprep.subr.bf16.mxu0 0
    %3201 = vmatpush1.bf16.msra.mxu0 0
    %3202 = vmatprep.subr.bf16.mxu0 0
    %3203 = vmatpush1.bf16.msra.mxu0 0
    %3204 = vmatprep.mubr.bf16.mxu0 0
    %3205 = vmatmul.mubr.bf16.gmra.mrb[0].mxu0 %v3047
    %v3206 = vpop.f32.mrb[0].mxu0
    %v3207 = vadd.f32 %v3125, %v3206
    %v3208 = vpop.f32.mrb[0].mxu0
    %v3209 = vadd.f32 %v3127, %v3208
    %v3210 = vpop.f32.mrb[0].mxu0
    %v3211 = vpop.f32.mrb[0].mxu0
    %3212 = vdwg.mxu0
    %v3213 = vadd.f32 %v3166, %v600
    %v3214 = vadd.f32 %v3168, %v604
    %v3215 = vadd.f32 %v3207, %v608
    %v3216 = vadd.f32 %v3209, %v612
    %v3217 = vxor.u32 %v3213, 2147483648
    %v3218 = vmul.f32 %v3217, 1.442695
    %v3219 = vpow.pop %v3218
    %v3220 = vadd.f32 %v3219, 1.0
    %v3221 = vrcp.pop %v3220
    %v3222 = vmul.f32 1.0, %v3221
    %v3223 = vxor.u32 %v3214, 2147483648
    %v3224 = vmul.f32 %v3223, 1.442695
    %v3225 = vpow.pop %v3224
    %v3226 = vadd.f32 %v3225, 1.0
    %v3227 = vrcp.pop %v3226
    %v3228 = vmul.f32 1.0, %v3227
    %v3229 = vtanh.pop %v3215
    %v3230 = vxor.u32 %v3216, 2147483648
    %v3231 = vmul.f32 %v3230, 1.442695
    %v3232 = vpow.pop %v3231
    %v3233 = vadd.f32 %v3232, 1.0
    %v3234 = vrcp.pop %v3233
    %v3235 = vmul.f32 1.0, %v3234
    %v3236 = vmul.f32 %v3228, %v2932
    %v3237 = vmul.f32 %v3222, %v3229
    %v3238 = vadd.f32 %v3236, %v3237
    %v3239 = vtanh.pop %v3238
    %v3240 = vmul.f32 %v3235, %v3239
    %s3241 = scalar_lea.vmem [#allocation18], 48
    %3242 = vst [vmem:[%s3241] sm:$0xff] %v3240
    %3243 = vmatprep.subr.bf16.mxu0 %v719
    %3244 = vmatpush1.bf16.msra.mxu0 %v718
    %3245 = vmatprep.subr.bf16.mxu0 %v723
    %3246 = vmatpush1.bf16.msra.mxu0 %v722
    %3247 = vmatprep.subr.bf16.mxu0 %v727
    %3248 = vmatpush1.bf16.msra.mxu0 %v726
    %3249 = vmatprep.subr.bf16.mxu0 %v731
    %3250 = vmatpush1.bf16.msra.mxu0 %v730
    %3251 = vmatprep.subr.bf16.mxu0 %v735
    %3252 = vmatpush1.bf16.msra.mxu0 %v734
    %3253 = vmatprep.subr.bf16.mxu0 %v739
    %3254 = vmatpush1.bf16.msra.mxu0 %v738
    %3255 = vmatprep.subr.bf16.mxu0 %v743
    %3256 = vmatpush1.bf16.msra.mxu0 %v742
    %3257 = vmatprep.subr.bf16.mxu0 %v747
    %3258 = vmatpush1.bf16.msra.mxu0 %v746
    %3259 = vmatprep.subr.bf16.mxu0 0
    %3260 = vmatpush1.bf16.msra.mxu0 0
    %3261 = vmatprep.subr.bf16.mxu0 0
    %3262 = vmatpush1.bf16.msra.mxu0 0
    %3263 = vmatprep.subr.bf16.mxu0 0
    %3264 = vmatpush1.bf16.msra.mxu0 0
    %3265 = vmatprep.subr.bf16.mxu0 0
    %3266 = vmatpush1.bf16.msra.mxu0 0
    %3267 = vmatprep.subr.bf16.mxu0 0
    %3268 = vmatpush1.bf16.msra.mxu0 0
    %3269 = vmatprep.subr.bf16.mxu0 0
    %3270 = vmatpush1.bf16.msra.mxu0 0
    %3271 = vmatprep.subr.bf16.mxu0 0
    %3272 = vmatpush1.bf16.msra.mxu0 0
    %3273 = vmatprep.subr.bf16.mxu0 0
    %3274 = vmatpush1.bf16.msra.mxu0 0
    %3275 = vmatprep.mubr.bf16.mxu0 0
    %3276 = vmatmul.mubr.bf16.gmra.mrb[0].mxu0 %v3047
    %v3277 = vpop.f32.mrb[0].mxu0
    %v3278 = vadd.f32 0.0, %v3277
    %v3279 = vpop.f32.mrb[0].mxu0
    %v3280 = vadd.f32 0.0, %v3279
    %v3281 = vpop.f32.mrb[0].mxu0
    %v3282 = vpop.f32.mrb[0].mxu0
    %3283 = vdwg.mxu0
    %3284 = vmatprep.subr.bf16.mxu0 %v721
    %3285 = vmatpush1.bf16.msra.mxu0 %v720
    %3286 = vmatprep.subr.bf16.mxu0 %v725
    %3287 = vmatpush1.bf16.msra.mxu0 %v724
    %3288 = vmatprep.subr.bf16.mxu0 %v729
    %3289 = vmatpush1.bf16.msra.mxu0 %v728
    %3290 = vmatprep.subr.bf16.mxu0 %v733
    %3291 = vmatpush1.bf16.msra.mxu0 %v732
    %3292 = vmatprep.subr.bf16.mxu0 %v737
    %3293 = vmatpush1.bf16.msra.mxu0 %v736
    %3294 = vmatprep.subr.bf16.mxu0 %v741
    %3295 = vmatpush1.bf16.msra.mxu0 %v740
    %3296 = vmatprep.subr.bf16.mxu0 %v745
    %3297 = vmatpush1.bf16.msra.mxu0 %v744
    %3298 = vmatprep.subr.bf16.mxu0 %v749
    %3299 = vmatpush1.bf16.msra.mxu0 %v748
    %3300 = vmatprep.subr.bf16.mxu0 0
    %3301 = vmatpush1.bf16.msra.mxu0 0
    %3302 = vmatprep.subr.bf16.mxu0 0
    %3303 = vmatpush1.bf16.msra.mxu0 0
    %3304 = vmatprep.subr.bf16.mxu0 0
    %3305 = vmatpush1.bf16.msra.mxu0 0
    %3306 = vmatprep.subr.bf16.mxu0 0
    %3307 = vmatpush1.bf16.msra.mxu0 0
    %3308 = vmatprep.subr.bf16.mxu0 0
    %3309 = vmatpush1.bf16.msra.mxu0 0
    %3310 = vmatprep.subr.bf16.mxu0 0
    %3311 = vmatpush1.bf16.msra.mxu0 0
    %3312 = vmatprep.subr.bf16.mxu0 0
    %3313 = vmatpush1.bf16.msra.mxu0 0
    %3314 = vmatprep.subr.bf16.mxu0 0
    %3315 = vmatpush1.bf16.msra.mxu0 0
    %3316 = vmatprep.mubr.bf16.mxu0 0
    %3317 = vmatmul.mubr.bf16.gmra.mrb[0].mxu0 %v3047
    %v3318 = vpop.f32.mrb[0].mxu0
    %v3319 = vadd.f32 0.0, %v3318
    %v3320 = vpop.f32.mrb[0].mxu0
    %v3321 = vadd.f32 0.0, %v3320
    %v3322 = vpop.f32.mrb[0].mxu0
    %v3323 = vpop.f32.mrb[0].mxu0
    %3324 = vdwg.mxu0
    %v3325 = vadd.f32 %v495, %v3278
    %v3326 = vadd.f32 %v496, %v3280
    %v3327 = vadd.f32 %v497, %v3319
    %v3328 = vadd.f32 %v498, %v3321
    %v3329 = vxor.u32 %v3325, 2147483648
    %v3330 = vmul.f32 %v3329, 1.442695
    %v3331 = vpow.pop %v3330
    %v3332 = vadd.f32 %v3331, 1.0
    %v3333 = vrcp.pop %v3332
    %v3334 = vmul.f32 1.0, %v3333
    %v3335 = vxor.u32 %v3326, 2147483648
    %v3336 = vmul.f32 %v3335, 1.442695
    %v3337 = vpow.pop %v3336
    %v3338 = vadd.f32 %v3337, 1.0
    %v3339 = vrcp.pop %v3338
    %v3340 = vmul.f32 1.0, %v3339
    %v3341 = vtanh.pop %v3327
    %v3342 = vxor.u32 %v3328, 2147483648
    %v3343 = vmul.f32 %v3342, 1.442695
    %v3344 = vpow.pop %v3343
    %v3345 = vadd.f32 %v3344, 1.0
    %v3346 = vrcp.pop %v3345
    %v3347 = vmul.f32 1.0, %v3346
    %v3348 = vmul.f32 %v3340, %v3044
    %v3349 = vmul.f32 %v3334, %v3341
    %v3350 = vadd.f32 %v3348, %v3349
    %v3351 = vtanh.pop %v3350
    %v3352 = vmul.f32 %v3347, %v3351
    %v3353 = vpack.c.bf16 %v3352, %v3352
    %v3354 = vpack.c.bf16 %v3240, %v3240
    %3355 = vmatprep.subr.bf16.mxu0 %v991
    %3356 = vmatpush1.bf16.msra.mxu0 %v990
    %3357 = vmatprep.subr.bf16.mxu0 %v995
    %3358 = vmatpush1.bf16.msra.mxu0 %v994
    %3359 = vmatprep.subr.bf16.mxu0 %v999
    %3360 = vmatpush1.bf16.msra.mxu0 %v998
    %3361 = vmatprep.subr.bf16.mxu0 %v1003
    %3362 = vmatpush1.bf16.msra.mxu0 %v1002
    %3363 = vmatprep.subr.bf16.mxu0 %v1007
    %3364 = vmatpush1.bf16.msra.mxu0 %v1006
    %3365 = vmatprep.subr.bf16.mxu0 %v1011
    %3366 = vmatpush1.bf16.msra.mxu0 %v1010
    %3367 = vmatprep.subr.bf16.mxu0 %v1015
    %3368 = vmatpush1.bf16.msra.mxu0 %v1014
    %3369 = vmatprep.subr.bf16.mxu0 %v1019
    %3370 = vmatpush1.bf16.msra.mxu0 %v1018
    %3371 = vmatprep.subr.bf16.mxu0 0
    %3372 = vmatpush1.bf16.msra.mxu0 0
    %3373 = vmatprep.subr.bf16.mxu0 0
    %3374 = vmatpush1.bf16.msra.mxu0 0
    %3375 = vmatprep.subr.bf16.mxu0 0
    %3376 = vmatpush1.bf16.msra.mxu0 0
    %3377 = vmatprep.subr.bf16.mxu0 0
    %3378 = vmatpush1.bf16.msra.mxu0 0
    %3379 = vmatprep.subr.bf16.mxu0 0
    %3380 = vmatpush1.bf16.msra.mxu0 0
    %3381 = vmatprep.subr.bf16.mxu0 0
    %3382 = vmatpush1.bf16.msra.mxu0 0
    %3383 = vmatprep.subr.bf16.mxu0 0
    %3384 = vmatpush1.bf16.msra.mxu0 0
    %3385 = vmatprep.subr.bf16.mxu0 0
    %3386 = vmatpush1.bf16.msra.mxu0 0
    %3387 = vmatprep.mubr.bf16.mxu0 0
    %3388 = vmatmul.mubr.bf16.gmra.mrb[0].mxu0 %v3354
    %v3389 = vpop.f32.mrb[0].mxu0
    %v3390 = vadd.f32 0.0, %v3389
    %v3391 = vpop.f32.mrb[0].mxu0
    %v3392 = vadd.f32 0.0, %v3391
    %v3393 = vpop.f32.mrb[0].mxu0
    %v3394 = vpop.f32.mrb[0].mxu0
    %3395 = vdwg.mxu0
    %3396 = vmatprep.subr.bf16.mxu0 %v993
    %3397 = vmatpush1.bf16.msra.mxu0 %v992
    %3398 = vmatprep.subr.bf16.mxu0 %v997
    %3399 = vmatpush1.bf16.msra.mxu0 %v996
    %3400 = vmatprep.subr.bf16.mxu0 %v1001
    %3401 = vmatpush1.bf16.msra.mxu0 %v1000
    %3402 = vmatprep.subr.bf16.mxu0 %v1005
    %3403 = vmatpush1.bf16.msra.mxu0 %v1004
    %3404 = vmatprep.subr.bf16.mxu0 %v1009
    %3405 = vmatpush1.bf16.msra.mxu0 %v1008
    %3406 = vmatprep.subr.bf16.mxu0 %v1013
    %3407 = vmatpush1.bf16.msra.mxu0 %v1012
    %3408 = vmatprep.subr.bf16.mxu0 %v1017
    %3409 = vmatpush1.bf16.msra.mxu0 %v1016
    %3410 = vmatprep.subr.bf16.mxu0 %v1021
    %3411 = vmatpush1.bf16.msra.mxu0 %v1020
    %3412 = vmatprep.subr.bf16.mxu0 0
    %3413 = vmatpush1.bf16.msra.mxu0 0
    %3414 = vmatprep.subr.bf16.mxu0 0
    %3415 = vmatpush1.bf16.msra.mxu0 0
    %3416 = vmatprep.subr.bf16.mxu0 0
    %3417 = vmatpush1.bf16.msra.mxu0 0
    %3418 = vmatprep.subr.bf16.mxu0 0
    %3419 = vmatpush1.bf16.msra.mxu0 0
    %3420 = vmatprep.subr.bf16.mxu0 0
    %3421 = vmatpush1.bf16.msra.mxu0 0
    %3422 = vmatprep.subr.bf16.mxu0 0
    %3423 = vmatpush1.bf16.msra.mxu0 0
    %3424 = vmatprep.subr.bf16.mxu0 0
    %3425 = vmatpush1.bf16.msra.mxu0 0
    %3426 = vmatprep.subr.bf16.mxu0 0
    %3427 = vmatpush1.bf16.msra.mxu0 0
    %3428 = vmatprep.mubr.bf16.mxu0 0
    %3429 = vmatmul.mubr.bf16.gmra.mrb[0].mxu0 %v3354
    %v3430 = vpop.f32.mrb[0].mxu0
    %v3431 = vadd.f32 0.0, %v3430
    %v3432 = vpop.f32.mrb[0].mxu0
    %v3433 = vadd.f32 0.0, %v3432
    %v3434 = vpop.f32.mrb[0].mxu0
    %v3435 = vpop.f32.mrb[0].mxu0
    %3436 = vdwg.mxu0
    %3437 = vmatprep.subr.bf16.mxu0 %v1233
    %3438 = vmatpush1.bf16.msra.mxu0 %v1232
    %3439 = vmatprep.subr.bf16.mxu0 %v1237
    %3440 = vmatpush1.bf16.msra.mxu0 %v1236
    %3441 = vmatprep.subr.bf16.mxu0 %v1241
    %3442 = vmatpush1.bf16.msra.mxu0 %v1240
    %3443 = vmatprep.subr.bf16.mxu0 %v1245
    %3444 = vmatpush1.bf16.msra.mxu0 %v1244
    %3445 = vmatprep.subr.bf16.mxu0 %v1249
    %3446 = vmatpush1.bf16.msra.mxu0 %v1248
    %3447 = vmatprep.subr.bf16.mxu0 %v1253
    %3448 = vmatpush1.bf16.msra.mxu0 %v1252
    %3449 = vmatprep.subr.bf16.mxu0 %v1257
    %3450 = vmatpush1.bf16.msra.mxu0 %v1256
    %3451 = vmatprep.subr.bf16.mxu0 %v1261
    %3452 = vmatpush1.bf16.msra.mxu0 %v1260
    %3453 = vmatprep.subr.bf16.mxu0 0
    %3454 = vmatpush1.bf16.msra.mxu0 0
    %3455 = vmatprep.subr.bf16.mxu0 0
    %3456 = vmatpush1.bf16.msra.mxu0 0
    %3457 = vmatprep.subr.bf16.mxu0 0
    %3458 = vmatpush1.bf16.msra.mxu0 0
    %3459 = vmatprep.subr.bf16.mxu0 0
    %3460 = vmatpush1.bf16.msra.mxu0 0
    %3461 = vmatprep.subr.bf16.mxu0 0
    %3462 = vmatpush1.bf16.msra.mxu0 0
    %3463 = vmatprep.subr.bf16.mxu0 0
    %3464 = vmatpush1.bf16.msra.mxu0 0
    %3465 = vmatprep.subr.bf16.mxu0 0
    %3466 = vmatpush1.bf16.msra.mxu0 0
    %3467 = vmatprep.subr.bf16.mxu0 0
    %3468 = vmatpush1.bf16.msra.mxu0 0
    %3469 = vmatprep.mubr.bf16.mxu0 0
    %3470 = vmatmul.mubr.bf16.gmra.mrb[0].mxu0 %v3353
    %v3471 = vpop.f32.mrb[0].mxu0
    %v3472 = vadd.f32 %v3390, %v3471
    %v3473 = vpop.f32.mrb[0].mxu0
    %v3474 = vadd.f32 %v3392, %v3473
    %v3475 = vpop.f32.mrb[0].mxu0
    %v3476 = vpop.f32.mrb[0].mxu0
    %3477 = vdwg.mxu0
    %3478 = vmatprep.subr.bf16.mxu0 %v1235
    %3479 = vmatpush1.bf16.msra.mxu0 %v1234
    %3480 = vmatprep.subr.bf16.mxu0 %v1239
    %3481 = vmatpush1.bf16.msra.mxu0 %v1238
    %3482 = vmatprep.subr.bf16.mxu0 %v1243
    %3483 = vmatpush1.bf16.msra.mxu0 %v1242
    %3484 = vmatprep.subr.bf16.mxu0 %v1247
    %3485 = vmatpush1.bf16.msra.mxu0 %v1246
    %3486 = vmatprep.subr.bf16.mxu0 %v1251
    %3487 = vmatpush1.bf16.msra.mxu0 %v1250
    %3488 = vmatprep.subr.bf16.mxu0 %v1255
    %3489 = vmatpush1.bf16.msra.mxu0 %v1254
    %3490 = vmatprep.subr.bf16.mxu0 %v1259
    %3491 = vmatpush1.bf16.msra.mxu0 %v1258
    %3492 = vmatprep.subr.bf16.mxu0 %v1263
    %3493 = vmatpush1.bf16.msra.mxu0 %v1262
    %3494 = vmatprep.subr.bf16.mxu0 0
    %3495 = vmatpush1.bf16.msra.mxu0 0
    %3496 = vmatprep.subr.bf16.mxu0 0
    %3497 = vmatpush1.bf16.msra.mxu0 0
    %3498 = vmatprep.subr.bf16.mxu0 0
    %3499 = vmatpush1.bf16.msra.mxu0 0
    %3500 = vmatprep.subr.bf16.mxu0 0
    %3501 = vmatpush1.bf16.msra.mxu0 0
    %3502 = vmatprep.subr.bf16.mxu0 0
    %3503 = vmatpush1.bf16.msra.mxu0 0
    %3504 = vmatprep.subr.bf16.mxu0 0
    %3505 = vmatpush1.bf16.msra.mxu0 0
    %3506 = vmatprep.subr.bf16.mxu0 0
    %3507 = vmatpush1.bf16.msra.mxu0 0
    %3508 = vmatprep.subr.bf16.mxu0 0
    %3509 = vmatpush1.bf16.msra.mxu0 0
    %3510 = vmatprep.mubr.bf16.mxu0 0
    %3511 = vmatmul.mubr.bf16.gmra.mrb[0].mxu0 %v3353
    %v3512 = vpop.f32.mrb[0].mxu0
    %v3513 = vadd.f32 %v3431, %v3512
    %v3514 = vpop.f32.mrb[0].mxu0
    %v3515 = vadd.f32 %v3433, %v3514
    %v3516 = vpop.f32.mrb[0].mxu0
    %v3517 = vpop.f32.mrb[0].mxu0
    %3518 = vdwg.mxu0
    %v3519 = vadd.f32 %v3472, %v600
    %v3520 = vadd.f32 %v3474, %v604
    %v3521 = vadd.f32 %v3513, %v608
    %v3522 = vadd.f32 %v3515, %v612
    %v3523 = vxor.u32 %v3519, 2147483648
    %v3524 = vmul.f32 %v3523, 1.442695
    %v3525 = vpow.pop %v3524
    %v3526 = vadd.f32 %v3525, 1.0
    %v3527 = vrcp.pop %v3526
    %v3528 = vmul.f32 1.0, %v3527
    %v3529 = vxor.u32 %v3520, 2147483648
    %v3530 = vmul.f32 %v3529, 1.442695
    %v3531 = vpow.pop %v3530
    %v3532 = vadd.f32 %v3531, 1.0
    %v3533 = vrcp.pop %v3532
    %v3534 = vmul.f32 1.0, %v3533
    %v3535 = vtanh.pop %v3521
    %v3536 = vxor.u32 %v3522, 2147483648
    %v3537 = vmul.f32 %v3536, 1.442695
    %v3538 = vpow.pop %v3537
    %v3539 = vadd.f32 %v3538, 1.0
    %v3540 = vrcp.pop %v3539
    %v3541 = vmul.f32 1.0, %v3540
    %v3542 = vmul.f32 %v3534, %v3238
    %v3543 = vmul.f32 %v3528, %v3535
    %v3544 = vadd.f32 %v3542, %v3543
    %v3545 = vtanh.pop %v3544
    %v3546 = vmul.f32 %v3541, %v3545
    %s3547 = scalar_lea.vmem [#allocation18], 56
    %3548 = vst [vmem:[%s3547] sm:$0xff] %v3546
    %3549 = vst [vmem:[#allocation3] sm:$0xff] %v3352
    %3550 = vst [vmem:[#allocation4] sm:$0xff] %v3350
    %3551 = vst [vmem:[#allocation5] sm:$0xff] %v3546
    %3552 = vst [vmem:[#allocation6] sm:$0xff] %v3544
    // Predicated region
    $region66: #{tpu_custom_call.1} parent=1 // pred_check
      _
    $region67: #{tpu_custom_call.1} parent=1 // pred_check_branch
      %3554 = sbr.rel (0) target = $region69
    $region68: #{tpu_custom_call.1} parent=1 // pred_region
      %s3556 = ssub.s32 1024, 1024
      %3557 = vsyncadd [#allocation9], %s3556
      %s3558 = sshll.u32 [#allocation18], 4
      %s3559 = int_to_ptr.vmem [resolvable:$true] %s3558
      %3564 = dma.vmem_to_hbm [thread:$0]  %s3559, 1024, %s9, [#allocation9], 128, 128, 8
    $region69: #{tpu_custom_call.1} parent=1 // pred_fallthru
      _
    // Predicated region
    $region70: #{tpu_custom_call.1} parent=1 // pred_check
      _
    $region71: #{tpu_custom_call.1} parent=1 // pred_check_branch
      %3566 = sbr.rel (0) target = $region73
    $region72: #{tpu_custom_call.1} parent=1 // pred_region
      %3567 = dma.done [#allocation9], 1024
    $region73: #{tpu_custom_call.1} parent=1 // pred_fallthru
      _
    %3568 = vsyncpa [#allocation8], 1
    %3569 = vsyncpa [#allocation11], 1
    %3570 = vsyncpa [#allocation14], 1
    %3571 = vsyncpa [#allocation17], 1
    %3572 = vsyncpa [#allocation9], 1

</llo_original>
